<compile_context>
chip_gen: v5e
topology: v5e:2x2
jax: 0.10.0
libtpu: 0.0.40
codegen_flags: <defaults>
</compile_context>

<pallas_src>
import math
from functools import partial

import numpy as np
import jax
import jax.numpy as jnp
from jax.experimental import pallas as pl
from jax.experimental.pallas import tpu as pltpu

_MASK_PAD = -1e9  # additive mask for padded window tokens (pre-softmax)


# ---------------------------------------------------------------------------
# Pallas kernel: one pack of `win_pack` windows (all heads) per grid step.
# ---------------------------------------------------------------------------
def _swin_attn_kernel(x_ref, qkvw_ref, qkvb_ref, projw_ref, projb_ref,
                      bm_ref, o_ref, cat_ref, *, num_heads, head_dim, dim,
                      win_pack, win_tokens, compute_dtype):
    # x_ref:    (win_pack, N, C)            packed window tokens (compute dtype)
    # qkvw_ref: (C, 3C)                     qkv weight^T, scale folded into Q
    # qkvb_ref: (1, 3C)                     qkv bias (f32), scale folded into Q
    # projw_ref:(C, C)                      proj weight^T
    # projb_ref:(1, C)                      proj bias (f32)
    # bm_ref:   (heads, win_pack|1, N, N)   fused rel-pos bias (+ shift mask)
    # o_ref:    (win_pack, N, C)            output block
    # cat_ref:  (win_pack*N, C)             VMEM scratch (compute dtype)
    C, d, N = dim, head_dim, win_tokens
    W, H = win_pack, num_heads
    T = W * N

    # ---- QKV projection: ONE MXU matmul over all packed token rows. ----
    x = x_ref[...].reshape(T, C)
    qkv = jnp.dot(x, qkvw_ref[...], preferred_element_type=jnp.float32)
    qkv = (qkv + qkvb_ref[...]).astype(compute_dtype)                # (T, 3C)

    # ---- Gather per-head slices into a single leading batch dim. ----
    # (leading-axis concat only; head-major batch index = h*win_pack + w)
    def gather_heads(base):
        parts = [qkv[:, base + h * d: base + (h + 1) * d].reshape(W, N, d)
                 for h in range(H)]
        return jnp.concatenate(parts, axis=0)                        # (H*W, N, d)

    q = gather_heads(0)
    k = gather_heads(C)
    v = gather_heads(2 * C)

    # ---- ONE batched QK^T over all heads & packed windows. ----
    s = jax.lax.dot_general(q, k, (((2,), (2,)), ((0,), (0,))),
                            preferred_element_type=jnp.float32)      # (H*W, N, N)
    # fused rel-pos bias (+ shift mask); (H,1,N,N) broadcasts over windows.
    s = s.reshape(H, W, N, N) + bm_ref[...]

    # ---- ONE softmax over the whole score slab (f32; recip on the EUP). ----
    # (pl.reciprocal(approx=True) trades ~2^-12 relative error for a free
    #  EUP slot; set approx=False if exact parity with torch is required.)
    m = jnp.max(s, axis=-1, keepdims=True)
    e = jnp.exp(s - m)
    p = e * pl.reciprocal(jnp.sum(e, axis=-1, keepdims=True), approx=True)
    p = p.reshape(H * W, N, N).astype(compute_dtype)

    # ---- ONE batched P.V. ----
    o = jax.lax.dot_general(p, v, (((2,), (1,)), ((0,), (0,))),
                            preferred_element_type=jnp.float32)      # (H*W, N, d)
    o = o.astype(compute_dtype)

    # Scatter head outputs into their column slab of the concat scratch
    # (compute dtype; avoids a lane concat and a full-slab cast).
    for h in range(H):
        cat_ref[:, h * d:(h + 1) * d] = o[h * W:(h + 1) * W].reshape(T, d)

    # ---- ONE output projection for the whole pack. ----
    y = jnp.dot(cat_ref[...], projw_ref[...],
                preferred_element_type=jnp.float32)                  # (T, C)
    y = y + projb_ref[...]
    o_ref[...] = y.reshape(W, N, C).astype(o_ref.dtype)


def _choose_win_pack(num_windows, batch, win_tokens, row_target=512):
    """Largest divisor of num_windows with win_pack*N <= row_target rows,
    keeping >=2 grid steps and preferring an even step count (2 TCs on v7x)."""
    max_pack = max(1, row_target // max(1, win_tokens))
    divisors = [p for p in range(1, num_windows + 1) if num_windows % p == 0]
    cands = [p for p in divisors if p <= max_pack] or [1]
    total = batch * num_windows

    def steps(p):
        return total // p

    best = max(cands)
    while best > 1 and steps(best) < 2:
        smaller = [p for p in cands if p < best]
        if not smaller:
            break
        best = max(smaller)
    if steps(best) % 2 == 1:
        even = [p for p in cands
                if p <= best and steps(p) >= 2 and steps(p) % 2 == 0
                and 2 * p >= best]
        if even:
            best = max(even)
    return best


def _windowed_attention_pallas(x_win, qkv_w_t, qkv_b, proj_w_t, proj_b,
                               bias_mask, *, num_heads, win_pack,
                               compute_dtype, out_dtype):
    """x_win: (BW, N, C) packed windows; bias_mask: (heads, num_windows|1, N, N)
    fused rel-pos bias (+ shift mask). Windows are processed win_pack at a time."""
    BW, Np, C = x_win.shape
    H = num_heads
    head_dim = C // H
    T = win_pack * Np
    assert BW % win_pack == 0
    num_packs = BW // win_pack

    nb = bias_mask.shape[1]
    if nb == 1:
        bm_block = (H, 1, Np, Np)
        bm_index = lambda p: (0, 0, 0, 0)
        bm_rows = 1
    else:
        # Mask is per-window (NOT tiled over batch); packs cycle through it.
        assert nb % win_pack == 0, "win_pack must divide num_windows"
        nwb = nb // win_pack
        bm_block = (H, win_pack, Np, Np)
        bm_index = lambda p: (0, p % nwb, 0, 0)
        bm_rows = win_pack

    kernel = partial(_swin_attn_kernel, num_heads=H, head_dim=head_dim, dim=C,
                     win_pack=win_pack, win_tokens=Np,
                     compute_dtype=compute_dtype)

    in_specs = [
        pl.BlockSpec((win_pack, Np, C), lambda p: (p, 0, 0)),        # x pack
        pl.BlockSpec((C, 3 * C), lambda p: (0, 0)),                  # qkv W^T (resident)
        pl.BlockSpec((1, 3 * C), lambda p: (0, 0)),                  # qkv bias
        pl.BlockSpec((C, C), lambda p: (0, 0)),                      # proj W^T (resident)
        pl.BlockSpec((1, C), lambda p: (0, 0)),                      # proj bias
        pl.BlockSpec(bm_block, bm_index),                            # fused bias(+mask)
    ]
    args = [x_win, qkv_w_t, qkv_b, proj_w_t, proj_b, bias_mask]

    cd = np.dtype(compute_dtype).itemsize
    od = np.dtype(out_dtype).itemsize

    # VMEM footprint estimate -> scoped limit (capped at 64 MiB: v7x-safe).
    est = (2 * T * C * (cd + od)                          # x / out blocks (dbl buf)
           + 2 * H * bm_rows * Np * Np * 4                # fused bias block
           + 2 * (4 * C * C * cd + 4 * C * 4)             # resident weights / biases
           + T * C * cd                                   # concat scratch
           + 6 * H * win_pack * Np * Np * 4               # live score tensors
           + 3 * T * C * max(1, 128 // head_dim) * cd)    # head-batched q/k/v (lane pad)
    vmem_limit = int(min(64 * 1024 * 1024, max(32 * 1024 * 1024, 2 * est)))

    flops = int(8 * BW * Np * C * C + 4 * BW * Np * Np * C)
    transcendentals = int(BW * H * Np * Np)
    bytes_accessed = int(BW * Np * C * (cd + od)
                         + 4 * C * C * cd + 4 * C * 4
                         + num_packs * H * bm_rows * Np * Np * 4)

    return pl.pallas_call(
        kernel,
        out_shape=jax.ShapeDtypeStruct((BW, Np, C), out_dtype),
        grid_spec=pltpu.PrefetchScalarGridSpec(
            num_scalar_prefetch=0,
            grid=(num_packs,),
            in_specs=in_specs,
            out_specs=pl.BlockSpec((win_pack, Np, C), lambda p: (p, 0, 0)),
            scratch_shapes=[pltpu.VMEM((T, C), compute_dtype)],
        ),
        compiler_params=pltpu.CompilerParams(
            dimension_semantics=("parallel",),
            vmem_limit_bytes=vmem_limit),
        cost_estimate=pl.CostEstimate(flops=flops,
                                      transcendentals=transcendentals,
                                      bytes_accessed=bytes_accessed),
    )(*args)


# ---------------------------------------------------------------------------
# Module: parameters + forward glue (padding / shift / window partition).
# ---------------------------------------------------------------------------
class ShiftedWindowAttentionPallas:
    def __init__(self, dim, window_size, shift_size, num_heads, key):
        assert len(window_size) == 2 and len(shift_size) == 2
        assert dim % num_heads == 0
        self.dim = dim
        self.window_size = list(window_size)
        self.shift_size = list(shift_size)
        self.num_heads = num_heads

        k1, k2, k3, k4 = jax.random.split(key, 4)
        # nn.Linear(dim, 3*dim): weight (3C, C), bias (3C,)
        self.qkv_weight = (jax.random.normal(k1, (3 * dim, dim), jnp.float32)
                           * (1.0 / math.sqrt(dim)))
        self.qkv_bias = jax.random.normal(k2, (3 * dim,), jnp.float32) * 0.02
        # nn.Linear(dim, dim)
        self.proj_weight = (jax.random.normal(k3, (dim, dim), jnp.float32)
                            * (1.0 / math.sqrt(dim)))
        self.proj_bias = jax.random.normal(k4, (dim,), jnp.float32) * 0.02
        # relative position bias table: ((2*ws0-1)*(2*ws1-1), num_heads)
        # TODO(synk): torch uses trunc_normal_(std=0.02); plain normal*0.02 here.
        kt = jax.random.fold_in(key, 99)
        tbl_rows = (2 * window_size[0] - 1) * (2 * window_size[1] - 1)
        self.rel_pos_bias_table = (jax.random.normal(kt, (tbl_rows, num_heads),
                                                     jnp.float32) * 0.02)
        self.rel_pos_index = self._make_relative_position_index()

    def _make_relative_position_index(self):
        ws0, ws1 = self.window_size
        coords = np.stack(np.meshgrid(np.arange(ws0), np.arange(ws1),
                                      indexing="ij"))                 # (2, ws0, ws1)
        coords_flatten = coords.reshape(2, -1)                        # (2, N)
        rel = coords_flatten[:, :, None] - coords_flatten[:, None, :]  # (2, N, N)
        rel = rel.transpose(1, 2, 0).copy()                           # (N, N, 2)
        rel[:, :, 0] += ws0 - 1
        rel[:, :, 1] += ws1 - 1
        rel[:, :, 0] *= 2 * ws1 - 1
        return rel.sum(-1).reshape(-1)                                # (N*N,)

    def get_relative_position_bias(self):
        ws0, ws1 = self.window_size
        N = ws0 * ws1
        bias = self.rel_pos_bias_table[self.rel_pos_index]            # (N*N, heads)
        bias = bias.reshape(N, N, self.num_heads)
        return jnp.transpose(bias, (2, 0, 1))                         # (heads, N, N)

    @staticmethod
    def _make_shift_mask(pad_H, pad_W, window_size, shift_size):
        ws0, ws1 = window_size
        ss0, ss1 = shift_size
        N = ws0 * ws1
        num_windows = (pad_H // ws0) * (pad_W // ws1)
        mask = np.zeros((pad_H, pad_W), np.float32)
        h_slices = ((0, -ws0), (-ws0, -ss0), (-ss0, None))
        w_slices = ((0, -ws1), (-ws1, -ss1), (-ss1, None))
        count = 0
        for hs in h_slices:
            for ws in w_slices:
                mask[hs[0]:hs[1], ws[0]:ws[1]] = count
                count += 1
        mask = mask.reshape(pad_H // ws0, ws0, pad_W // ws1, ws1)
        mask = mask.transpose(0, 2, 1, 3).reshape(num_windows, N)
        diff = mask[:, None, :] - mask[:, :, None]                    # (nw, N, N)
        return np.where(diff != 0, -100.0, 0.0).astype(np.float32)

    def __call__(self, x, compute_dtype=None):
        # x: (B, H, W, C) channels-last (NHWC), matching the PyTorch reference.
        # compute_dtype: matmul operand dtype.  jnp.bfloat16 is recommended on
        #   ALL TPU generations (v5e/v6e/v7x MXUs are bf16-native: ~2x MXU
        #   throughput and halved weight DMA); softmax / bias adds /
        #   accumulation stay in f32.
        # TODO(synk): attention_dropout / dropout are not applied (inference,
        #             p=0.0 default in the reference).
        B, H, W, C = x.shape
        orig_dtype = x.dtype
        if compute_dtype is None:
            compute_dtype = orig_dtype
        ws0, ws1 = self.window_size
        pad_r = (ws1 - W % ws1) % ws1
        pad_b = (ws0 - H % ws0) % ws0
        xp = jnp.pad(x, ((0, 0), (0, pad_b), (0, pad_r), (0, 0)))
        _, pad_H, pad_W, _ = xp.shape

        shift = list(self.shift_size)
        if ws0 >= pad_H:
            shift[0] = 0
        if ws1 >= pad_W:
            shift[1] = 0
        shifted = sum(shift) > 0

        if shifted:
            xp = jnp.roll(xp, shift=(-shift[0], -shift[1]), axis=(1, 2))

        nwh, nww = pad_H // ws0, pad_W // ws1
        num_windows = nwh * nww
        N = ws0 * ws1
        BW = B * num_windows

        # window partition -> (BW, N, C)
        xw = xp.reshape(B, nwh, ws0, nww, ws1, C)
        xw = jnp.transpose(xw, (0, 1, 3, 2, 4, 5)).reshape(BW, N, C)

        # Pad window tokens to a sublane-friendly multiple of 8; padded keys
        # are masked inside the fused bias slab, padded query rows are dropped.
        Np = ((N + 7) // 8) * 8

        # Fuse rel-pos bias (+ shift mask) on the host -> one in-kernel add.
        rel_bias = self.get_relative_position_bias().astype(jnp.float32)
        if shifted:
            mask = jnp.asarray(self._make_shift_mask(pad_H, pad_W,
                                                     self.window_size, shift))
            bias_mask = rel_bias[:, None, :, :] + mask[None, :, :, :]  # (H, nw, N, N)
        else:
            bias_mask = rel_bias[:, None, :, :]                        # (H, 1, N, N)
        if Np != N:
            bias_mask = jnp.pad(bias_mask,
                                ((0, 0), (0, 0), (0, Np - N), (0, Np - N)),
                                constant_values=_MASK_PAD)
            xw = jnp.pad(xw, ((0, 0), (0, Np - N), (0, 0)))
        bias_mask = bias_mask.astype(jnp.float32)

        win_pack = _choose_win_pack(num_windows, B, Np)
        assert num_windows % win_pack == 0

        # Prepare weights: transpose, fold 1/sqrt(head_dim) into Q columns/bias,
        # cast operands to the compute dtype (halves weight DMA in bf16).
        head_dim = C // self.num_heads
        scale = head_dim ** (-0.5)
        scale_vec = jnp.concatenate([jnp.full((C,), scale, jnp.float32),
                                     jnp.ones((2 * C,), jnp.float32)])
        qkv_w_t = (jnp.transpose(self.qkv_weight) * scale_vec[None, :]
                   ).astype(compute_dtype)                            # (C, 3C)
        qkv_b = (self.qkv_bias * scale_vec).reshape(1, 3 * C).astype(jnp.float32)
        proj_w_t = jnp.transpose(self.proj_weight).astype(compute_dtype)
        proj_b = self.proj_bias.reshape(1, C).astype(jnp.float32)

        out_w = _windowed_attention_pallas(
            xw.astype(compute_dtype), qkv_w_t, qkv_b, proj_w_t, proj_b,
            bias_mask,
            num_heads=self.num_heads, win_pack=win_pack,
            compute_dtype=compute_dtype, out_dtype=orig_dtype)

        if Np != N:
            out_w = out_w[:, :N, :]

        # window reverse
        y = out_w.reshape(B, nwh, nww, ws0, ws1, C)
        y = jnp.transpose(y, (0, 1, 3, 2, 4, 5)).reshape(B, pad_H, pad_W, C)

        if shifted:
            y = jnp.roll(y, shift=(shift[0], shift[1]), axis=(1, 2))

        return y[:, :H, :W, :]


# ---------------------------------------------------------------------------
# Pure-JAX reference (mirrors the PyTorch code) used for a correctness check.
# ---------------------------------------------------------------------------
def _reference_forward(module, x):
    B, H, W, C = x.shape
    ws0, ws1 = module.window_size
    nh = module.num_heads
    hd = C // nh
    pad_r = (ws1 - W % ws1) % ws1
    pad_b = (ws0 - H % ws0) % ws0
    xp = jnp.pad(x, ((0, 0), (0, pad_b), (0, pad_r), (0, 0)))
    _, pad_H, pad_W, _ = xp.shape
    shift = list(module.shift_size)
    if ws0 >= pad_H:
        shift[0] = 0
    if ws1 >= pad_W:
        shift[1] = 0
    if sum(shift) > 0:
        xp = jnp.roll(xp, (-shift[0], -shift[1]), axis=(1, 2))
    nwin = (pad_H // ws0) * (pad_W // ws1)
    N = ws0 * ws1
    xw = xp.reshape(B, pad_H // ws0, ws0, pad_W // ws1, ws1, C)
    xw = jnp.transpose(xw, (0, 1, 3, 2, 4, 5)).reshape(B * nwin, N, C)
    qkv = xw @ module.qkv_weight.T + module.qkv_bias
    qkv = qkv.reshape(B * nwin, N, 3, nh, hd).transpose(2, 0, 3, 1, 4)
    q, k, v = qkv[0], qkv[1], qkv[2]
    attn = (q * hd ** -0.5) @ jnp.swapaxes(k, -2, -1)
    attn = attn + module.get_relative_position_bias()[None]
    if sum(shift) > 0:
        m = module._make_shift_mask(pad_H, pad_W, module.window_size, shift)
        attn = attn.reshape(B, nwin, nh, N, N) + jnp.asarray(m)[None, :, None]
        attn = attn.reshape(B * nwin, nh, N, N)
    attn = jax.nn.softmax(attn, axis=-1)
    o = (attn @ v).transpose(0, 2, 1, 3).reshape(B * nwin, N, C)
    o = o @ module.proj_weight.T + module.proj_bias
    y = o.reshape(B, pad_H // ws0, pad_W // ws1, ws0, ws1, C)
    y = jnp.transpose(y, (0, 1, 3, 2, 4, 5)).reshape(B, pad_H, pad_W, C)
    if sum(shift) > 0:
        y = jnp.roll(y, (shift[0], shift[1]), axis=(1, 2))
    return y[:, :H, :W, :]


if __name__ == "__main__":
    key = jax.random.PRNGKey(0)
    kx, kp = jax.random.split(key)

    # Config 1: spatial padding (10 -> 12) + cyclic shift, lane-dense C=128.
    B, H, W, C = 2, 10, 10, 128
    window_size = [4, 4]
    shift_size = [2, 2]
    num_heads = 4

    x = jax.random.normal(kx, (B, H, W, C), jnp.float32)
    module = ShiftedWindowAttentionPallas(C, window_size, shift_size,
                                          num_heads, kp)

    out = jax.block_until_ready(module(x))
    ref = jax.block_until_ready(_reference_forward(module, x))
    assert out.shape == (B, H, W, C)
    np.testing.assert_allclose(np.asarray(out), np.asarray(ref),
                               rtol=2e-2, atol=2e-2)

    # bf16 matmul-operand path (recommended on v5e/v6e/v7x) -- looser tolerance.
    out_bf16 = jax.block_until_ready(module(x, compute_dtype=jnp.bfloat16))
    np.testing.assert_allclose(np.asarray(out_bf16), np.asarray(ref),
                               rtol=1e-1, atol=1e-1)

    # Config 2: window 3x3 -> N=9 padded to 16 (exercises the token-pad path).
    module2 = ShiftedWindowAttentionPallas(C, [3, 3], [1, 1], num_heads,
                                           jax.random.fold_in(kp, 1))
    x2 = jax.random.normal(jax.random.fold_in(kx, 1), (2, 9, 9, C), jnp.float32)
    out2 = jax.block_until_ready(module2(x2))
    ref2 = jax.block_until_ready(_reference_forward(module2, x2))
    np.testing.assert_allclose(np.asarray(out2), np.asarray(ref2),
                               rtol=2e-2, atol=2e-2)

    # Config 3: no shift -> bias-only (broadcast) path.
    module3 = ShiftedWindowAttentionPallas(C, window_size, [0, 0], num_heads, kp)
    out3 = jax.block_until_ready(module3(x))
    ref3 = jax.block_until_ready(_reference_forward(module3, x))
    np.testing.assert_allclose(np.asarray(out3), np.asarray(ref3),
                               rtol=2e-2, atol=2e-2)

    print("KERNEL_OK")
</pallas_src>

<mosaic_0001>
module attributes {stable_mosaic.version = 11 : i64} {
  func.func @_swin_attn_kernel(%arg0: i32, %arg1: memref<9x16x128xf32, #tpu.memory_space<vmem>>, %arg2: memref<128x384xf32, #tpu.memory_space<vmem>>, %arg3: memref<1x384xf32, #tpu.memory_space<vmem>>, %arg4: memref<128x128xf32, #tpu.memory_space<vmem>>, %arg5: memref<1x128xf32, #tpu.memory_space<vmem>>, %arg6: memref<4x9x16x16xf32, #tpu.memory_space<vmem>>, %arg7: memref<9x16x128xf32, #tpu.memory_space<vmem>>, %arg8: memref<144x128xf32, #tpu.memory_space<vmem>>) attributes {dimension_semantics = [#tpu.dimension_semantics<parallel>], iteration_bounds = array<i64: 2>, scalar_prefetch = 0 : i64, scratch_operands = 1 : i64, tpu.core_type = #tpu.core_type<tc>, window_params = [{transform_indices = @transform_0, window_bounds = array<i64: 9, 16, 128>}, {pipeline_mode = #tpu.pipeline_mode<synchronous>, transform_indices = @transform_1, window_bounds = array<i64: 128, 384>}, {pipeline_mode = #tpu.pipeline_mode<synchronous>, transform_indices = @transform_2, window_bounds = array<i64: 1, 384>}, {pipeline_mode = #tpu.pipeline_mode<synchronous>, transform_indices = @transform_3, window_bounds = array<i64: 128, 128>}, {pipeline_mode = #tpu.pipeline_mode<synchronous>, transform_indices = @transform_4, window_bounds = array<i64: 1, 128>}, {transform_indices = @transform_5, window_bounds = array<i64: 4, 9, 16, 16>}, {transform_indices = @transform_6, window_bounds = array<i64: 9, 16, 128>}]} {
    %c0 = arith.constant 0 : index
    %c0_0 = arith.constant 0 : index
    %c0_1 = arith.constant 0 : index
    %0 = vector.load %arg1[%c0, %c0_0, %c0_1] : memref<9x16x128xf32, #tpu.memory_space<vmem>>, vector<9x16x128xf32>
    %1 = vector.shape_cast %0 : vector<9x16x128xf32> to vector<144x128xf32>
    %c0_2 = arith.constant 0 : index
    %c0_3 = arith.constant 0 : index
    %2 = vector.load %arg2[%c0_2, %c0_3] : memref<128x384xf32, #tpu.memory_space<vmem>>, vector<128x384xf32>
    %cst = arith.constant dense<0.000000e+00> : vector<144x384xf32>
    %3 = tpu.matmul %1, %2, %cst {dimension_numbers = #tpu.dot_dimension_numbers<[1], [0], [0], [1], [0, 0, 1, 1], [], []>} : vector<144x128xf32>, vector<128x384xf32>, vector<144x384xf32> -> vector<144x384xf32>
    %c0_4 = arith.constant 0 : index
    %c0_5 = arith.constant 0 : index
    %4 = vector.load %arg3[%c0_4, %c0_5] : memref<1x384xf32, #tpu.memory_space<vmem>>, vector<1x384xf32>
    %5 = vector.broadcast %4 : vector<1x384xf32> to vector<144x384xf32>
    %6 = arith.addf %3, %5 : vector<144x384xf32>
    %7 = vector.extract_strided_slice %6 {offsets = [0, 0], sizes = [144, 32], strides = [1, 1]} : vector<144x384xf32> to vector<144x32xf32>
    %8 = vector.shape_cast %7 : vector<144x32xf32> to vector<9x16x32xf32>
    %9 = vector.extract_strided_slice %6 {offsets = [0, 32], sizes = [144, 32], strides = [1, 1]} : vector<144x384xf32> to vector<144x32xf32>
    %10 = vector.shape_cast %9 : vector<144x32xf32> to vector<9x16x32xf32>
    %11 = vector.extract_strided_slice %6 {offsets = [0, 64], sizes = [144, 32], strides = [1, 1]} : vector<144x384xf32> to vector<144x32xf32>
    %12 = vector.shape_cast %11 : vector<144x32xf32> to vector<9x16x32xf32>
    %13 = vector.extract_strided_slice %6 {offsets = [0, 96], sizes = [144, 32], strides = [1, 1]} : vector<144x384xf32> to vector<144x32xf32>
    %14 = vector.shape_cast %13 : vector<144x32xf32> to vector<9x16x32xf32>
    %15 = tpu.concatenate %8, %10, %12, %14 in 0 : vector<9x16x32xf32>, vector<9x16x32xf32>, vector<9x16x32xf32>, vector<9x16x32xf32> -> vector<36x16x32xf32>
    %16 = vector.extract_strided_slice %6 {offsets = [0, 128], sizes = [144, 32], strides = [1, 1]} : vector<144x384xf32> to vector<144x32xf32>
    %17 = vector.shape_cast %16 : vector<144x32xf32> to vector<9x16x32xf32>
    %18 = vector.extract_strided_slice %6 {offsets = [0, 160], sizes = [144, 32], strides = [1, 1]} : vector<144x384xf32> to vector<144x32xf32>
    %19 = vector.shape_cast %18 : vector<144x32xf32> to vector<9x16x32xf32>
    %20 = vector.extract_strided_slice %6 {offsets = [0, 192], sizes = [144, 32], strides = [1, 1]} : vector<144x384xf32> to vector<144x32xf32>
    %21 = vector.shape_cast %20 : vector<144x32xf32> to vector<9x16x32xf32>
    %22 = vector.extract_strided_slice %6 {offsets = [0, 224], sizes = [144, 32], strides = [1, 1]} : vector<144x384xf32> to vector<144x32xf32>
    %23 = vector.shape_cast %22 : vector<144x32xf32> to vector<9x16x32xf32>
    %24 = tpu.concatenate %17, %19, %21, %23 in 0 : vector<9x16x32xf32>, vector<9x16x32xf32>, vector<9x16x32xf32>, vector<9x16x32xf32> -> vector<36x16x32xf32>
    %25 = vector.extract_strided_slice %6 {offsets = [0, 256], sizes = [144, 32], strides = [1, 1]} : vector<144x384xf32> to vector<144x32xf32>
    %26 = vector.shape_cast %25 : vector<144x32xf32> to vector<9x16x32xf32>
    %27 = vector.extract_strided_slice %6 {offsets = [0, 288], sizes = [144, 32], strides = [1, 1]} : vector<144x384xf32> to vector<144x32xf32>
    %28 = vector.shape_cast %27 : vector<144x32xf32> to vector<9x16x32xf32>
    %29 = vector.extract_strided_slice %6 {offsets = [0, 320], sizes = [144, 32], strides = [1, 1]} : vector<144x384xf32> to vector<144x32xf32>
    %30 = vector.shape_cast %29 : vector<144x32xf32> to vector<9x16x32xf32>
    %31 = vector.extract_strided_slice %6 {offsets = [0, 352], sizes = [144, 32], strides = [1, 1]} : vector<144x384xf32> to vector<144x32xf32>
    %32 = vector.shape_cast %31 : vector<144x32xf32> to vector<9x16x32xf32>
    %33 = tpu.concatenate %26, %28, %30, %32 in 0 : vector<9x16x32xf32>, vector<9x16x32xf32>, vector<9x16x32xf32>, vector<9x16x32xf32> -> vector<36x16x32xf32>
    %cst_6 = arith.constant dense<0.000000e+00> : vector<36x16x16xf32>
    %34 = tpu.matmul %15, %24, %cst_6 {dimension_numbers = #tpu.dot_dimension_numbers<[2], [2], [1], [1], [0, 0, 0, 1, 1, 1], [0], [0]>} : vector<36x16x32xf32>, vector<36x16x32xf32>, vector<36x16x16xf32> -> vector<36x16x16xf32>
    %35 = vector.shape_cast %34 : vector<36x16x16xf32> to vector<4x9x16x16xf32>
    %c0_7 = arith.constant 0 : index
    %c0_8 = arith.constant 0 : index
    %c0_9 = arith.constant 0 : index
    %c0_10 = arith.constant 0 : index
    %36 = vector.load %arg6[%c0_7, %c0_8, %c0_9, %c0_10] : memref<4x9x16x16xf32, #tpu.memory_space<vmem>>, vector<4x9x16x16xf32>
    %37 = arith.addf %35, %36 : vector<4x9x16x16xf32>
    %cst_11 = arith.constant dense<0xFF800000> : vector<4x9x16xf32>
    %38 = vector.multi_reduction <maximumf>, %37, %cst_11 [3] : vector<4x9x16x16xf32> to vector<4x9x16xf32>
    %39 = vector.shape_cast %38 : vector<4x9x16xf32> to vector<4x9x16x1xf32>
    %40 = vector.broadcast %39 : vector<4x9x16x1xf32> to vector<4x9x16x16xf32>
    %41 = arith.subf %37, %40 : vector<4x9x16x16xf32>
    %42 = math.exp %41 : vector<4x9x16x16xf32>
    %cst_12 = arith.constant dense<0.000000e+00> : vector<4x9x16xf32>
    %43 = vector.multi_reduction <add>, %42, %cst_12 [3] : vector<4x9x16x16xf32> to vector<4x9x16xf32>
    %44 = vector.shape_cast %43 : vector<4x9x16xf32> to vector<4x9x16x1xf32>
    %45 = tpu.reciprocal %44 {approx = true} : vector<4x9x16x1xf32> -> vector<4x9x16x1xf32>
    %46 = vector.broadcast %45 : vector<4x9x16x1xf32> to vector<4x9x16x16xf32>
    %47 = arith.mulf %42, %46 : vector<4x9x16x16xf32>
    %48 = vector.shape_cast %47 : vector<4x9x16x16xf32> to vector<36x16x16xf32>
    %cst_13 = arith.constant dense<0.000000e+00> : vector<36x16x32xf32>
    %49 = tpu.matmul %48, %33, %cst_13 {dimension_numbers = #tpu.dot_dimension_numbers<[2], [1], [1], [2], [0, 0, 0, 1, 1, 2], [0], [0]>} : vector<36x16x16xf32>, vector<36x16x32xf32>, vector<36x16x32xf32> -> vector<36x16x32xf32>
    %50 = vector.extract_strided_slice %49 {offsets = [0, 0, 0], sizes = [9, 16, 32], strides = [1, 1, 1]} : vector<36x16x32xf32> to vector<9x16x32xf32>
    %51 = vector.shape_cast %50 : vector<9x16x32xf32> to vector<144x32xf32>
    %c0_14 = arith.constant 0 : index
    %c0_15 = arith.constant 0 : index
    %52 = vector.load %arg8[%c0_14, %c0_15] : memref<144x128xf32, #tpu.memory_space<vmem>>, vector<144x32xf32>
    tpu.vector_store %arg8[%c0_14, %c0_15], %51 {strides = array<i32>} : memref<144x128xf32, #tpu.memory_space<vmem>>, vector<144x32xf32>,
    %53 = vector.extract_strided_slice %49 {offsets = [9, 0, 0], sizes = [9, 16, 32], strides = [1, 1, 1]} : vector<36x16x32xf32> to vector<9x16x32xf32>
    %54 = vector.shape_cast %53 : vector<9x16x32xf32> to vector<144x32xf32>
    %c0_16 = arith.constant 0 : index
    %c32 = arith.constant 32 : index
    %55 = vector.load %arg8[%c0_16, %c32] : memref<144x128xf32, #tpu.memory_space<vmem>>, vector<144x32xf32>
    tpu.vector_store %arg8[%c0_16, %c32], %54 {strides = array<i32>} : memref<144x128xf32, #tpu.memory_space<vmem>>, vector<144x32xf32>,
    %56 = vector.extract_strided_slice %49 {offsets = [18, 0, 0], sizes = [9, 16, 32], strides = [1, 1, 1]} : vector<36x16x32xf32> to vector<9x16x32xf32>
    %57 = vector.shape_cast %56 : vector<9x16x32xf32> to vector<144x32xf32>
    %c0_17 = arith.constant 0 : index
    %c64 = arith.constant 64 : index
    %58 = vector.load %arg8[%c0_17, %c64] : memref<144x128xf32, #tpu.memory_space<vmem>>, vector<144x32xf32>
    tpu.vector_store %arg8[%c0_17, %c64], %57 {strides = array<i32>} : memref<144x128xf32, #tpu.memory_space<vmem>>, vector<144x32xf32>,
    %59 = vector.extract_strided_slice %49 {offsets = [27, 0, 0], sizes = [9, 16, 32], strides = [1, 1, 1]} : vector<36x16x32xf32> to vector<9x16x32xf32>
    %60 = vector.shape_cast %59 : vector<9x16x32xf32> to vector<144x32xf32>
    %c0_18 = arith.constant 0 : index
    %c96 = arith.constant 96 : index
    %61 = vector.load %arg8[%c0_18, %c96] : memref<144x128xf32, #tpu.memory_space<vmem>>, vector<144x32xf32>
    tpu.vector_store %arg8[%c0_18, %c96], %60 {strides = array<i32>} : memref<144x128xf32, #tpu.memory_space<vmem>>, vector<144x32xf32>,
    %c0_19 = arith.constant 0 : index
    %c0_20 = arith.constant 0 : index
    %62 = vector.load %arg8[%c0_19, %c0_20] : memref<144x128xf32, #tpu.memory_space<vmem>>, vector<144x128xf32>
    %c0_21 = arith.constant 0 : index
    %c0_22 = arith.constant 0 : index
    %63 = vector.load %arg4[%c0_21, %c0_22] : memref<128x128xf32, #tpu.memory_space<vmem>>, vector<128x128xf32>
    %cst_23 = arith.constant dense<0.000000e+00> : vector<144x128xf32>
    %64 = tpu.matmul %62, %63, %cst_23 {dimension_numbers = #tpu.dot_dimension_numbers<[1], [0], [0], [1], [0, 0, 1, 1], [], []>} : vector<144x128xf32>, vector<128x128xf32>, vector<144x128xf32> -> vector<144x128xf32>
    %c0_24 = arith.constant 0 : index
    %c0_25 = arith.constant 0 : index
    %65 = vector.load %arg5[%c0_24, %c0_25] : memref<1x128xf32, #tpu.memory_space<vmem>>, vector<1x128xf32>
    %66 = vector.broadcast %65 : vector<1x128xf32> to vector<144x128xf32>
    %67 = arith.addf %64, %66 : vector<144x128xf32>
    %68 = vector.shape_cast %67 : vector<144x128xf32> to vector<9x16x128xf32>
    %c0_26 = arith.constant 0 : index
    %c0_27 = arith.constant 0 : index
    %c0_28 = arith.constant 0 : index
    %69 = vector.load %arg7[%c0_26, %c0_27, %c0_28] : memref<9x16x128xf32, #tpu.memory_space<vmem>>, vector<9x16x128xf32>
    tpu.vector_store %arg7[%c0_26, %c0_27, %c0_28], %68 {strides = array<i32>} : memref<9x16x128xf32, #tpu.memory_space<vmem>>, vector<9x16x128xf32>,
    return
  }
  func.func @transform_0(%arg0: i32) -> (i32, i32, i32) {
    %c0_i32 = arith.constant 0 : i32
    %c0_i32_0 = arith.constant 0 : i32
    %c0_i32_1 = arith.constant 0 : i32
    return %arg0, %c0_i32, %c0_i32_0 : i32, i32, i32
  }
  func.func @transform_1(%arg0: i32) -> (i32, i32) {
    %c0_i32 = arith.constant 0 : i32
    %c0_i32_0 = arith.constant 0 : i32
    %c0_i32_1 = arith.constant 0 : i32
    return %c0_i32, %c0_i32_0 : i32, i32
  }
  func.func @transform_2(%arg0: i32) -> (i32, i32) {
    %c0_i32 = arith.constant 0 : i32
    %c0_i32_0 = arith.constant 0 : i32
    %c0_i32_1 = arith.constant 0 : i32
    return %c0_i32, %c0_i32_0 : i32, i32
  }
  func.func @transform_3(%arg0: i32) -> (i32, i32) {
    %c0_i32 = arith.constant 0 : i32
    %c0_i32_0 = arith.constant 0 : i32
    %c0_i32_1 = arith.constant 0 : i32
    return %c0_i32, %c0_i32_0 : i32, i32
  }
  func.func @transform_4(%arg0: i32) -> (i32, i32) {
    %c0_i32 = arith.constant 0 : i32
    %c0_i32_0 = arith.constant 0 : i32
    %c0_i32_1 = arith.constant 0 : i32
    return %c0_i32, %c0_i32_0 : i32, i32
  }
  func.func @transform_5(%arg0: i32) -> (i32, i32, i32, i32) {
    %c1_i32 = arith.constant 1 : i32
    %c0_i32 = arith.constant 0 : i32
    %0 = arith.cmpi eq, %c1_i32, %c0_i32 : i32
    %c1_i32_0 = arith.constant 1 : i32
    %1 = arith.select %0, %c1_i32_0, %c1_i32 : i32
    %2 = arith.remsi %arg0, %1 : i32
    %c0_i32_1 = arith.constant 0 : i32
    %3 = arith.cmpi ne, %2, %c0_i32_1 : i32
    %c0_i32_2 = arith.constant 0 : i32
    %4 = arith.cmpi slt, %2, %c0_i32_2 : i32
    %c0_i32_3 = arith.constant 0 : i32
    %5 = arith.cmpi slt, %1, %c0_i32_3 : i32
    %6 = arith.xori %4, %5 : i1
    %7 = arith.andi %6, %3 : i1
    %8 = arith.addi %2, %1 : i32
    %9 = arith.select %7, %8, %2 : i32
    %c0_i32_4 = arith.constant 0 : i32
    %c0_i32_5 = arith.constant 0 : i32
    %c0_i32_6 = arith.constant 0 : i32
    %c0_i32_7 = arith.constant 0 : i32
    return %c0_i32_4, %9, %c0_i32_5, %c0_i32_6 : i32, i32, i32, i32
  }
  func.func @transform_6(%arg0: i32) -> (i32, i32, i32) {
    %c0_i32 = arith.constant 0 : i32
    %c0_i32_0 = arith.constant 0 : i32
    %c0_i32_1 = arith.constant 0 : i32
    return %arg0, %c0_i32, %c0_i32_0 : i32, i32, i32
  }
}

</mosaic_0001>

<llo_original>
// kernel: tpu_custom_call.1
$region0: #{tpu_custom_call.1}
  #allocation0 [shape = 'u32[]', space=smem, size = 0x4, offset = 0x4, fixed_abs, tag = 'smem constant byte address 0x4 - core index']
  #allocation1 [shape = 'u32[72,128]{1,0:T(1,128)}', space=vmem, size = 0x9000, scoped, tag = 'internal scratch']
  #allocation2 [shape = 'f32[144,128]{1,0:T(8,128)}', space=vmem, size = 0x12000, scoped, tag = 'scratch operand']
  %s0 = inlined_call_operand.hbm [shape: f32[18,16,128], index: 0, kind: input, shape index: {}]
  %s1 = inlined_call_operand.hbm [shape: f32[128,384], index: 1, kind: input, shape index: {}]
  %s2 = inlined_call_operand.hbm [shape: f32[1,384], index: 2, kind: input, shape index: {}]
  %s3 = inlined_call_operand.hbm [shape: f32[128,128], index: 3, kind: input, shape index: {}]
  %s4 = inlined_call_operand.vmem [shape: f32[1,128], index: 4, kind: input, shape index: {}]
  %s5 = inlined_call_operand.hbm [shape: f32[4,9,16,16], index: 5, kind: input, shape index: {}]
  %s6 = inlined_call_operand.hbm [shape: f32[18,16,128], index: 6, kind: output, shape index: {}]
  %s7 = sld [smem:[#allocation0]]
  $region77: #{tpu_custom_call.1} parent=0
    _
  %s9 = ssub.s32 1, %s7
  %s10 = scalar_select 0, %s9, %s7
  $region1: #{tpu_custom_call.1} parent=0
    #allocation3 [shape = 'u8[147456]{0}', space=vmem, size = 0x24000, scoped, tag = 'input window, operand 0']
    #allocation4 [shape = 's32[2]{0}', space=sflag, size = 0x8, scoped, tag = 'scoped memory for tpu_custom_call.1']
    #allocation5 [shape = 's32[2]{0}', space=sflag, size = 0x8, scoped, tag = 'scoped memory for tpu_custom_call.1']
    #allocation6 [shape = 'u8[196608]{0}', space=vmem, size = 0x30000, scoped, tag = 'input window, operand 1, single buffered']
    #allocation7 [shape = 's32[1]{0}', space=sflag, size = 0x4, scoped, tag = 'scoped memory for tpu_custom_call.1']
    #allocation8 [shape = 'u8[1536]{0}', space=vmem, size = 0x800, scoped, tag = 'input window, operand 2, single buffered']
    #allocation9 [shape = 'u8[65536]{0}', space=vmem, size = 0x10000, scoped, tag = 'input window, operand 3, single buffered']
    #allocation10 [shape = 's32[1]{0}', space=sflag, size = 0x4, scoped, tag = 'scoped memory for tpu_custom_call.1']
    #allocation11 [shape = 'u8[294912]{0}', space=vmem, size = 0x48000, scoped, tag = 'input window, operand 5, single buffered']
    #allocation12 [shape = 'u8[147456]{0}', space=vmem, size = 0x24000, scoped, tag = 'output window, operand 0']
    %11 = vsyncpa [#allocation4], 0
    %s12 = scalar_lea.sflag [#allocation4], 1
    %13 = vsyncpa %s12, 0
    %14 = vsyncpa [#allocation7], 0
    %15 = vsyncpa [#allocation10], 0
    %16 = vsyncpa [#allocation5], 0
    %s17 = scalar_lea.sflag [#allocation5], 1
    %18 = vsyncpa %s17, 0
    loop: start=0, step=1, limit=4
    $region2: #{tpu_custom_call.1} parent=1 // loop_pre_header
      _
    $region3: #{tpu_custom_call.1} parent=1 // loop_header
      %s20 = sphi 0, %s24
      %p21 = scmp.ge.s32.totalorder %s20, 4
      %s30 = sphi 0, %s32
      %s33 = sphi 0, %s30
      %s34 = sphi 0, %s33
      %s50 = sphi 0, %s34
      %s54 = sphi 0, %s54
      %s56 = sphi 0, %s54
      %s57 = sphi 0, %s56
      %s71 = sphi 0, %s57
      %s75 = sphi 0, %s75
      %s77 = sphi 0, %s75
      %s78 = sphi 0, %s77
      %s92 = sphi 0, %s78
      %s96 = sphi 0, %s96
      %s98 = sphi 0, %s96
      %s99 = sphi 0, %s98
      %s113 = sphi 0, %s99
      %s117 = sphi 0, %s117
      %s119 = sphi 0, %s117
      %s120 = sphi 0, %s119
      %s134 = sphi 0, %s120
      %s138 = sphi 0, %s138
      %s140 = sphi 0, %s138
      %s141 = sphi 0, %s140
      %s155 = sphi 0, %s141
      %s161 = sphi 0, %s163
      %s164 = sphi 0, %s161
      %s165 = sphi 0, %s164
      %s181 = sphi 0, %s165
    $region4: #{tpu_custom_call.1} parent=1 // loop_header_branch
      %23 = sbr.rel (%p21) target = $region8
    $region5: #{tpu_custom_call.1} parent=1 // loop_body
      %s25 = ssub.s32 %s20, 1
      %s26 = ssub.s32 %s20, 2
      %s27 = sadd.s32 %s20, 1
      %s28 = ssub.s32 %s20, %s27
      %p29 = scmp.eq.s32.totalorder %s28, 0
      %s31 = sadd.s32 %s30, 1
      %s32 = scalar_select %p29, %s30, %s31
      %p35 = pneg %p29
      %p36 = scmp.eq.s32.totalorder %s20, 1
      %p37 = por %p35, %p36
      %p38 = scmp.ne.s32.totalorder %s30, %s33
      %p39 = scmp.eq.s32.totalorder %s20, 0
      %p40 = por %p38, %p39
      %p41 = scmp.ne.s32.totalorder %s30, %s33
      %p42 = scmp.eq.s32.totalorder %s25, 1
      %p43 = por %p41, %p42
      %p44 = scmp.ne.s32.totalorder %s33, %s34
      %p45 = scmp.eq.s32.totalorder %s25, 0
      %p46 = por %p44, %p45
      %p47 = scmp.ne.s32.totalorder %s33, %s34
      %p48 = scmp.eq.s32.totalorder %s26, 1
      %p49 = por %p47, %p48
      %p51 = scmp.ne.s32.totalorder %s34, %s50
      %p52 = scmp.eq.s32.totalorder %s26, 0
      %p53 = por %p51, %p52
      %s55 = sadd.s32 %s54, 1
      %p58 = scmp.eq.s32.totalorder %s20, 1
      %p59 = scmp.ne.s32.totalorder %s54, %s56
      %p60 = scmp.eq.s32.totalorder %s20, 0
      %p61 = por %p59, %p60
      %p62 = scmp.ne.s32.totalorder %s54, %s56
      %p63 = scmp.eq.s32.totalorder %s25, 1
      %p64 = por %p62, %p63
      %p65 = scmp.ne.s32.totalorder %s56, %s57
      %p66 = scmp.eq.s32.totalorder %s25, 0
      %p67 = por %p65, %p66
      %p68 = scmp.ne.s32.totalorder %s56, %s57
      %p69 = scmp.eq.s32.totalorder %s26, 1
      %p70 = por %p68, %p69
      %p72 = scmp.ne.s32.totalorder %s57, %s71
      %p73 = scmp.eq.s32.totalorder %s26, 0
      %p74 = por %p72, %p73
      %s76 = sadd.s32 %s75, 1
      %p79 = scmp.eq.s32.totalorder %s20, 1
      %p80 = scmp.ne.s32.totalorder %s75, %s77
      %p81 = scmp.eq.s32.totalorder %s20, 0
      %p82 = por %p80, %p81
      %p83 = scmp.ne.s32.totalorder %s75, %s77
      %p84 = scmp.eq.s32.totalorder %s25, 1
      %p85 = por %p83, %p84
      %p86 = scmp.ne.s32.totalorder %s77, %s78
      %p87 = scmp.eq.s32.totalorder %s25, 0
      %p88 = por %p86, %p87
      %p89 = scmp.ne.s32.totalorder %s77, %s78
      %p90 = scmp.eq.s32.totalorder %s26, 1
      %p91 = por %p89, %p90
      %p93 = scmp.ne.s32.totalorder %s78, %s92
      %p94 = scmp.eq.s32.totalorder %s26, 0
      %p95 = por %p93, %p94
      %s97 = sadd.s32 %s96, 1
      %p100 = scmp.eq.s32.totalorder %s20, 1
      %p101 = scmp.ne.s32.totalorder %s96, %s98
      %p102 = scmp.eq.s32.totalorder %s20, 0
      %p103 = por %p101, %p102
      %p104 = scmp.ne.s32.totalorder %s96, %s98
      %p105 = scmp.eq.s32.totalorder %s25, 1
      %p106 = por %p104, %p105
      %p107 = scmp.ne.s32.totalorder %s98, %s99
      %p108 = scmp.eq.s32.totalorder %s25, 0
      %p109 = por %p107, %p108
      %p110 = scmp.ne.s32.totalorder %s98, %s99
      %p111 = scmp.eq.s32.totalorder %s26, 1
      %p112 = por %p110, %p111
      %p114 = scmp.ne.s32.totalorder %s99, %s113
      %p115 = scmp.eq.s32.totalorder %s26, 0
      %p116 = por %p114, %p115
      %s118 = sadd.s32 %s117, 1
      %p121 = scmp.eq.s32.totalorder %s20, 1
      %p122 = scmp.ne.s32.totalorder %s117, %s119
      %p123 = scmp.eq.s32.totalorder %s20, 0
      %p124 = por %p122, %p123
      %p125 = scmp.ne.s32.totalorder %s117, %s119
      %p126 = scmp.eq.s32.totalorder %s25, 1
      %p127 = por %p125, %p126
      %p128 = scmp.ne.s32.totalorder %s119, %s120
      %p129 = scmp.eq.s32.totalorder %s25, 0
      %p130 = por %p128, %p129
      %p131 = scmp.ne.s32.totalorder %s119, %s120
      %p132 = scmp.eq.s32.totalorder %s26, 1
      %p133 = por %p131, %p132
      %p135 = scmp.ne.s32.totalorder %s120, %s134
      %p136 = scmp.eq.s32.totalorder %s26, 0
      %p137 = por %p135, %p136
      %s139 = sadd.s32 %s138, 1
      %p142 = scmp.eq.s32.totalorder %s20, 1
      %p143 = scmp.ne.s32.totalorder %s138, %s140
      %p144 = scmp.eq.s32.totalorder %s20, 0
      %p145 = por %p143, %p144
      %p146 = scmp.ne.s32.totalorder %s138, %s140
      %p147 = scmp.eq.s32.totalorder %s25, 1
      %p148 = por %p146, %p147
      %p149 = scmp.ne.s32.totalorder %s140, %s141
      %p150 = scmp.eq.s32.totalorder %s25, 0
      %p151 = por %p149, %p150
      %p152 = scmp.ne.s32.totalorder %s140, %s141
      %p153 = scmp.eq.s32.totalorder %s26, 1
      %p154 = por %p152, %p153
      %p156 = scmp.ne.s32.totalorder %s141, %s155
      %p157 = scmp.eq.s32.totalorder %s26, 0
      %p158 = por %p156, %p157
      %s159 = ssub.s32 %s20, %s27
      %p160 = scmp.eq.s32.totalorder %s159, 0
      %s162 = sadd.s32 %s161, 1
      %s163 = scalar_select %p160, %s161, %s162
      %p166 = pneg %p160
      %p167 = scmp.eq.s32.totalorder %s20, 1
      %p168 = por %p166, %p167
      %p169 = scmp.ne.s32.totalorder %s161, %s164
      %p170 = scmp.eq.s32.totalorder %s20, 0
      %p171 = por %p169, %p170
      %p172 = scmp.ne.s32.totalorder %s161, %s164
      %p173 = scmp.eq.s32.totalorder %s25, 1
      %p174 = por %p172, %p173
      %p175 = scmp.ne.s32.totalorder %s164, %s165
      %p176 = scmp.eq.s32.totalorder %s25, 0
      %p177 = por %p175, %p176
      %p178 = scmp.ne.s32.totalorder %s164, %s165
      %p179 = scmp.eq.s32.totalorder %s26, 1
      %p180 = por %p178, %p179
      %p182 = scmp.ne.s32.totalorder %s165, %s181
      %p183 = scmp.eq.s32.totalorder %s26, 0
      %p184 = por %p182, %p183
      %p185 = scmp.le.s32.totalorder 1, %s20
      %p186 = scmp.lt.s32.totalorder %s20, 3
      %p187 = pnand %p185, %p186
      %p188 = pneg %p187
      // Predicated region
      $region9: #{tpu_custom_call.1} parent=5 // pred_check
        _
      $region10: #{tpu_custom_call.1} parent=5 // pred_check_branch
        %190 = sbr.rel (%p187) target = $region12
      $region11: #{tpu_custom_call.1} parent=5 // pred_region
        %s191 = ssub.s32 %s20, 1
        // Predicated region
        $region13: #{tpu_custom_call.1} parent=11 // pred_check
          %p192 = pneg %p67
        $region14: #{tpu_custom_call.1} parent=11 // pred_check_branch
          %194 = sbr.rel (%p192) target = $region16
        $region15: #{tpu_custom_call.1} parent=11 // pred_region
          %196 = vsyncadd [#allocation7], 0
          %s197 = sshll.u32 %s1, 4
          %s198 = int_to_ptr.hbm [resolvable:$true] %s197
          %s199 = sshll.u32 [#allocation6], 4
          %s200 = int_to_ptr.vmem [resolvable:$true] %s199
          %205 = dma.hbm_to_vmem [thread:$0]  %s198, 6144, %s200, [#allocation7], 384, 384, 24
        $region16: #{tpu_custom_call.1} parent=11 // pred_fallthru
          _
        // Predicated region
        $region17: #{tpu_custom_call.1} parent=11 // pred_check
          %p206 = pneg %p88
        $region18: #{tpu_custom_call.1} parent=11 // pred_check_branch
          %208 = sbr.rel (%p206) target = $region20
        $region19: #{tpu_custom_call.1} parent=11 // pred_region
          %210 = vsyncadd [#allocation7], 0
          %s212 = sshll.u32 %s2, 4
          %s213 = int_to_ptr.hbm [resolvable:$true] %s212
          %s214 = sshll.u32 [#allocation8], 4
          %s215 = int_to_ptr.vmem [resolvable:$true] %s214
          %217 = dma.hbm_to_vmem [thread:$0]  %s213, 48, %s215, [#allocation7]
        $region20: #{tpu_custom_call.1} parent=11 // pred_fallthru
          _
        // Predicated region
        $region21: #{tpu_custom_call.1} parent=11 // pred_check
          %p218 = pneg %p109
        $region22: #{tpu_custom_call.1} parent=11 // pred_check_branch
          %220 = sbr.rel (%p218) target = $region24
        $region23: #{tpu_custom_call.1} parent=11 // pred_region
          %222 = vsyncadd [#allocation10], 0
          %s223 = sshll.u32 %s3, 4
          %s224 = int_to_ptr.hbm [resolvable:$true] %s223
          %s225 = sshll.u32 [#allocation9], 4
          %s226 = int_to_ptr.vmem [resolvable:$true] %s225
          %231 = dma.hbm_to_vmem [thread:$0]  %s224, 2048, %s226, [#allocation10], 128, 128, 8
        $region24: #{tpu_custom_call.1} parent=11 // pred_fallthru
          _
        // Predicated region
        $region25: #{tpu_custom_call.1} parent=11 // pred_check
          %p232 = pneg %p130
        $region26: #{tpu_custom_call.1} parent=11 // pred_check_branch
          %234 = sbr.rel (%p232) target = $region28
        $region27: #{tpu_custom_call.1} parent=11 // pred_region
          _
        $region28: #{tpu_custom_call.1} parent=11 // pred_fallthru
          _
        // Predicated region
        $region29: #{tpu_custom_call.1} parent=11 // pred_check
          %p235 = pneg %p151
        $region30: #{tpu_custom_call.1} parent=11 // pred_check_branch
          %237 = sbr.rel (%p235) target = $region32
        $region31: #{tpu_custom_call.1} parent=11 // pred_region
          %239 = vsyncadd [#allocation10], 0
          %s240 = sshll.u32 %s5, 4
          %s241 = int_to_ptr.hbm [resolvable:$true] %s240
          %s242 = sshll.u32 [#allocation11], 4
          %s243 = int_to_ptr.vmem [resolvable:$true] %s242
          %248 = dma.hbm_to_vmem [thread:$0]  %s241, 9216, %s243, [#allocation10], 128, 128, 8
        $region32: #{tpu_custom_call.1} parent=11 // pred_fallthru
          _
      $region12: #{tpu_custom_call.1} parent=5 // pred_fallthru
        _
      %p249 = scmp.lt.s32.totalorder %s20, 2
      // Predicated region
      $region33: #{tpu_custom_call.1} parent=5 // pred_check
        %p250 = pneg %p249
      $region34: #{tpu_custom_call.1} parent=5 // pred_check_branch
        %252 = sbr.rel (%p250) target = $region36
      $region35: #{tpu_custom_call.1} parent=5 // pred_region
        // Predicated region
        $region37: #{tpu_custom_call.1} parent=35 // pred_check
          %p253 = pneg %p40
        $region38: #{tpu_custom_call.1} parent=35 // pred_check_branch
          %255 = sbr.rel (%p253) target = $region40
        $region39: #{tpu_custom_call.1} parent=35 // pred_region
          %s256 = sand.u32 %s30, 1
          %s257 = scalar_lea.sflag [#allocation4], %s256
          %s258 = sand.u32 %s30, 1
          %s259 = smul.addr %s258, 144
          %s260 = scalar_lea.vmem [#allocation3], %s259
          %s261 = smul.u32 9, %s20
          %263 = vsyncadd %s257, 0
          %s264 = smul.addr %s261, 2
          %s265 = smul.addr %s264, 8
          %s266 = scalar_lea.hbm %s0, %s265
          %s267 = sshll.u32 %s266, 4
          %s268 = int_to_ptr.hbm [resolvable:$true] %s267
          %s269 = sshll.u32 %s260, 4
          %s270 = int_to_ptr.vmem [resolvable:$true] %s269
          %275 = dma.hbm_to_vmem [thread:$0]  %s268, 2304, %s270, %s257, 128, 128, 8
        $region40: #{tpu_custom_call.1} parent=35 // pred_fallthru
          _
      $region36: #{tpu_custom_call.1} parent=5 // pred_fallthru
        _
      %p276 = scmp.le.s32.totalorder 1, %s20
      %p277 = scmp.lt.s32.totalorder %s20, 3
      %p278 = pnand %p276, %p277
      %p279 = pneg %p278
      // Predicated region
      $region41: #{tpu_custom_call.1} parent=5 // pred_check
        _
      $region42: #{tpu_custom_call.1} parent=5 // pred_check_branch
        %281 = sbr.rel (%p278) target = $region44
      $region43: #{tpu_custom_call.1} parent=5 // pred_region
        %s282 = ssub.s32 %s20, 1
        %s283 = sand.u32 %s33, 1
        %s284 = scalar_lea.sflag [#allocation4], %s283
        %s285 = sand.u32 %s33, 1
        %s286 = smul.addr %s285, 144
        %s287 = scalar_lea.vmem [#allocation3], %s286
        // Predicated region
        $region45: #{tpu_custom_call.1} parent=43 // pred_check
          %p288 = pneg %p46
        $region46: #{tpu_custom_call.1} parent=43 // pred_check_branch
          %290 = sbr.rel (%p288) target = $region48
        $region47: #{tpu_custom_call.1} parent=43 // pred_region
          %292 = dma.done %s284, 2304
        $region48: #{tpu_custom_call.1} parent=43 // pred_fallthru
          _
        // Predicated region
        $region49: #{tpu_custom_call.1} parent=43 // pred_check
          %p293 = pneg %p67
        $region50: #{tpu_custom_call.1} parent=43 // pred_check_branch
          %295 = sbr.rel (%p293) target = $region52
        $region51: #{tpu_custom_call.1} parent=43 // pred_region
          %297 = dma.done [#allocation7], 6144
        $region52: #{tpu_custom_call.1} parent=43 // pred_fallthru
          _
        // Predicated region
        $region53: #{tpu_custom_call.1} parent=43 // pred_check
          %p298 = pneg %p88
        $region54: #{tpu_custom_call.1} parent=43 // pred_check_branch
          %300 = sbr.rel (%p298) target = $region56
        $region55: #{tpu_custom_call.1} parent=43 // pred_region
          %302 = dma.done [#allocation7], 48
        $region56: #{tpu_custom_call.1} parent=43 // pred_fallthru
          _
        // Predicated region
        $region57: #{tpu_custom_call.1} parent=43 // pred_check
          %p303 = pneg %p109
        $region58: #{tpu_custom_call.1} parent=43 // pred_check_branch
          %305 = sbr.rel (%p303) target = $region60
        $region59: #{tpu_custom_call.1} parent=43 // pred_region
          %307 = dma.done [#allocation10], 2048
        $region60: #{tpu_custom_call.1} parent=43 // pred_fallthru
          _
        // Predicated region
        $region61: #{tpu_custom_call.1} parent=43 // pred_check
          %p308 = pneg %p151
        $region62: #{tpu_custom_call.1} parent=43 // pred_check_branch
          %310 = sbr.rel (%p308) target = $region64
        $region63: #{tpu_custom_call.1} parent=43 // pred_region
          %312 = dma.done [#allocation10], 9216
        $region64: #{tpu_custom_call.1} parent=43 // pred_fallthru
          _
        %s313 = sand.u32 %s33, 1
        %s314 = scalar_lea.sflag [#allocation4], %s313
        %s315 = sand.u32 %s33, 1
        %s316 = smul.addr %s315, 144
        %s317 = scalar_lea.vmem [#allocation3], %s316
        %p318 = pneg %p46
        %p319 = pneg %p43
        %p320 = pneg %p67
        %p321 = pneg %p64
        %p322 = pneg %p88
        %p323 = pneg %p85
        %p324 = pneg %p109
        %p325 = pneg %p106
        %p326 = pneg %p130
        %p327 = pneg %p127
        %p328 = pneg %p151
        %p329 = pneg %p148
        %p330 = pneg %p177
        %p331 = pneg %p174
        %s332 = sand.u32 %s164, 1
        %s333 = scalar_lea.sflag [#allocation5], %s332
        %s334 = sand.u32 %s164, 1
        %s335 = smul.addr %s334, 144
        %s336 = scalar_lea.vmem [#allocation12], %s335
        %s337 = smul.u32 9, %s25
        %s338 = smul.u32 9, %s25
        %v339 = vld [vmem:[%s287] sm:$0xff]
        %v340 = vld [vmem:[%s287 + $0x8] sm:$0xff]
        %v341 = vld [vmem:[%s287 + $0x10] sm:$0xff]
        %v342 = vld [vmem:[%s287 + $0x18] sm:$0xff]
        %v343 = vld [vmem:[%s287 + $0x20] sm:$0xff]
        %v344 = vld [vmem:[%s287 + $0x28] sm:$0xff]
        %v345 = vld [vmem:[%s287 + $0x30] sm:$0xff]
        %v346 = vld [vmem:[%s287 + $0x38] sm:$0xff]
        %v347 = vld [vmem:[%s287 + $0x40] sm:$0xff]
        %v348 = vld [vmem:[%s287 + $0x48] sm:$0xff]
        %v349 = vld [vmem:[%s287 + $0x50] sm:$0xff]
        %v350 = vld [vmem:[%s287 + $0x58] sm:$0xff]
        %v351 = vld [vmem:[%s287 + $0x60] sm:$0xff]
        %v352 = vld [vmem:[%s287 + $0x68] sm:$0xff]
        %v353 = vld [vmem:[%s287 + $0x70] sm:$0xff]
        %v354 = vld [vmem:[%s287 + $0x78] sm:$0xff]
        %v355 = vld [vmem:[%s287 + $0x80] sm:$0xff]
        %v356 = vld [vmem:[%s287 + $0x88] sm:$0xff]
        %v357 = vld [vmem:[#allocation6] sm:$0xff]
        %v358 = vld [vmem:[#allocation6 + $0x8] sm:$0xff]
        %v359 = vld [vmem:[#allocation6 + $0x10] sm:$0xff]
        %v360 = vld [vmem:[#allocation6 + $0x18] sm:$0xff]
        %v361 = vld [vmem:[#allocation6 + $0x20] sm:$0xff]
        %v362 = vld [vmem:[#allocation6 + $0x28] sm:$0xff]
        %v363 = vld [vmem:[#allocation6 + $0x30] sm:$0xff]
        %v364 = vld [vmem:[#allocation6 + $0x38] sm:$0xff]
        %v365 = vld [vmem:[#allocation6 + $0x40] sm:$0xff]
        %v366 = vld [vmem:[#allocation6 + $0x48] sm:$0xff]
        %v367 = vld [vmem:[#allocation6 + $0x50] sm:$0xff]
        %v368 = vld [vmem:[#allocation6 + $0x58] sm:$0xff]
        %v369 = vld [vmem:[#allocation6 + $0x60] sm:$0xff]
        %v370 = vld [vmem:[#allocation6 + $0x68] sm:$0xff]
        %v371 = vld [vmem:[#allocation6 + $0x70] sm:$0xff]
        %v372 = vld [vmem:[#allocation6 + $0x78] sm:$0xff]
        %v373 = vld [vmem:[#allocation6 + $0x80] sm:$0xff]
        %v374 = vld [vmem:[#allocation6 + $0x88] sm:$0xff]
        %v375 = vld [vmem:[#allocation6 + $0x90] sm:$0xff]
        %v376 = vld [vmem:[#allocation6 + $0x98] sm:$0xff]
        %v377 = vld [vmem:[#allocation6 + $0xa0] sm:$0xff]
        %v378 = vld [vmem:[#allocation6 + $0xa8] sm:$0xff]
        %v379 = vld [vmem:[#allocation6 + $0xb0] sm:$0xff]
        %v380 = vld [vmem:[#allocation6 + $0xb8] sm:$0xff]
        %v381 = vld [vmem:[#allocation6 + $0xc0] sm:$0xff]
        %v382 = vld [vmem:[#allocation6 + $0xc8] sm:$0xff]
        %v383 = vld [vmem:[#allocation6 + $0xd0] sm:$0xff]
        %v384 = vld [vmem:[#allocation6 + $0xd8] sm:$0xff]
        %v385 = vld [vmem:[#allocation6 + $0xe0] sm:$0xff]
        %v386 = vld [vmem:[#allocation6 + $0xe8] sm:$0xff]
        %v387 = vld [vmem:[#allocation6 + $0xf0] sm:$0xff]
        %v388 = vld [vmem:[#allocation6 + $0xf8] sm:$0xff]
        %v389 = vld [vmem:[#allocation6 + $0x100] sm:$0xff]
        %v390 = vld [vmem:[#allocation6 + $0x108] sm:$0xff]
        %v391 = vld [vmem:[#allocation6 + $0x110] sm:$0xff]
        %v392 = vld [vmem:[#allocation6 + $0x118] sm:$0xff]
        %v393 = vld [vmem:[#allocation6 + $0x120] sm:$0xff]
        %v394 = vld [vmem:[#allocation6 + $0x128] sm:$0xff]
        %v395 = vld [vmem:[#allocation6 + $0x130] sm:$0xff]
        %v396 = vld [vmem:[#allocation6 + $0x138] sm:$0xff]
        %v397 = vld [vmem:[#allocation6 + $0x140] sm:$0xff]
        %v398 = vld [vmem:[#allocation6 + $0x148] sm:$0xff]
        %v399 = vld [vmem:[#allocation6 + $0x150] sm:$0xff]
        %v400 = vld [vmem:[#allocation6 + $0x158] sm:$0xff]
        %v401 = vld [vmem:[#allocation6 + $0x160] sm:$0xff]
        %v402 = vld [vmem:[#allocation6 + $0x168] sm:$0xff]
        %v403 = vld [vmem:[#allocation6 + $0x170] sm:$0xff]
        %v404 = vld [vmem:[#allocation6 + $0x178] sm:$0xff]
        %v405 = vld [vmem:[#allocation8] sm:$0x7]
        %v407 = vperm.slane %v405, 0
        %v408 = vperm.slane %v405, 1
        %v409 = vperm.slane %v405, 2
        %413 = vmatpush.msra.mxu0 %v402
        %414 = vmatpush.msra.mxu0 %v399
        %415 = vmatpush.msra.mxu0 %v396
        %416 = vmatpush.msra.mxu0 %v393
        %417 = vmatpush.msra.mxu0 %v390
        %418 = vmatpush.msra.mxu0 %v387
        %419 = vmatpush.msra.mxu0 %v384
        %420 = vmatpush.msra.mxu0 %v381
        %421 = vmatpush.msra.mxu0 %v378
        %422 = vmatpush.msra.mxu0 %v375
        %423 = vmatpush.msra.mxu0 %v372
        %424 = vmatpush.msra.mxu0 %v369
        %425 = vmatpush.msra.mxu0 %v366
        %426 = vmatpush.msra.mxu0 %v363
        %427 = vmatpush.msra.mxu0 %v360
        %428 = vmatpush.msra.mxu0 %v357
        %429 = vmatmul.f32.gmra.mxu0 %v339
        %v430 = vpop.f32.mrf.mxu0
        %v431 = vadd.f32 %v407, %v430
        %432 = vmatmul.f32.gmra.mxu0 %v340
        %v433 = vpop.f32.mrf.mxu0
        %v434 = vadd.f32 %v407, %v433
        %435 = vmatmul.f32.gmra.mxu0 %v341
        %v436 = vpop.f32.mrf.mxu0
        %v437 = vadd.f32 %v407, %v436
        %438 = vmatmul.f32.gmra.mxu0 %v342
        %v439 = vpop.f32.mrf.mxu0
        %v440 = vadd.f32 %v407, %v439
        %441 = vmatmul.f32.gmra.mxu0 %v343
        %v442 = vpop.f32.mrf.mxu0
        %v443 = vadd.f32 %v407, %v442
        %444 = vmatmul.f32.gmra.mxu0 %v344
        %v445 = vpop.f32.mrf.mxu0
        %v446 = vadd.f32 %v407, %v445
        %447 = vmatmul.f32.gmra.mxu0 %v345
        %v448 = vpop.f32.mrf.mxu0
        %v449 = vadd.f32 %v407, %v448
        %450 = vmatmul.f32.gmra.mxu0 %v346
        %v451 = vpop.f32.mrf.mxu0
        %v452 = vadd.f32 %v407, %v451
        %453 = vmatmul.f32.gmra.mxu0 %v347
        %v454 = vpop.f32.mrf.mxu0
        %v455 = vadd.f32 %v407, %v454
        %456 = vmatmul.f32.gmra.mxu0 %v348
        %v457 = vpop.f32.mrf.mxu0
        %v458 = vadd.f32 %v407, %v457
        %459 = vmatmul.f32.gmra.mxu0 %v349
        %v460 = vpop.f32.mrf.mxu0
        %v461 = vadd.f32 %v407, %v460
        %462 = vmatmul.f32.gmra.mxu0 %v350
        %v463 = vpop.f32.mrf.mxu0
        %v464 = vadd.f32 %v407, %v463
        %465 = vmatmul.f32.gmra.mxu0 %v351
        %v466 = vpop.f32.mrf.mxu0
        %v467 = vadd.f32 %v407, %v466
        %468 = vmatmul.f32.gmra.mxu0 %v352
        %v469 = vpop.f32.mrf.mxu0
        %v470 = vadd.f32 %v407, %v469
        %471 = vmatmul.f32.gmra.mxu0 %v353
        %v472 = vpop.f32.mrf.mxu0
        %v473 = vadd.f32 %v407, %v472
        %474 = vmatmul.f32.gmra.mxu0 %v354
        %v475 = vpop.f32.mrf.mxu0
        %v476 = vadd.f32 %v407, %v475
        %477 = vmatmul.f32.gmra.mxu0 %v355
        %v478 = vpop.f32.mrf.mxu0
        %v479 = vadd.f32 %v407, %v478
        %480 = vmatmul.f32.gmra.mxu0 %v356
        %v481 = vpop.f32.mrf.mxu0
        %v482 = vadd.f32 %v407, %v481
        %483 = vdwg.mxu0
        %484 = vmatpush.msra.mxu0 %v403
        %485 = vmatpush.msra.mxu0 %v400
        %486 = vmatpush.msra.mxu0 %v397
        %487 = vmatpush.msra.mxu0 %v394
        %488 = vmatpush.msra.mxu0 %v391
        %489 = vmatpush.msra.mxu0 %v388
        %490 = vmatpush.msra.mxu0 %v385
        %491 = vmatpush.msra.mxu0 %v382
        %492 = vmatpush.msra.mxu0 %v379
        %493 = vmatpush.msra.mxu0 %v376
        %494 = vmatpush.msra.mxu0 %v373
        %495 = vmatpush.msra.mxu0 %v370
        %496 = vmatpush.msra.mxu0 %v367
        %497 = vmatpush.msra.mxu0 %v364
        %498 = vmatpush.msra.mxu0 %v361
        %499 = vmatpush.msra.mxu0 %v358
        %500 = vmatmul.f32.gmra.mxu0 %v339
        %v501 = vpop.f32.mrf.mxu0
        %v502 = vadd.f32 %v408, %v501
        %503 = vmatmul.f32.gmra.mxu0 %v340
        %v504 = vpop.f32.mrf.mxu0
        %v505 = vadd.f32 %v408, %v504
        %506 = vmatmul.f32.gmra.mxu0 %v341
        %v507 = vpop.f32.mrf.mxu0
        %v508 = vadd.f32 %v408, %v507
        %509 = vmatmul.f32.gmra.mxu0 %v342
        %v510 = vpop.f32.mrf.mxu0
        %v511 = vadd.f32 %v408, %v510
        %512 = vmatmul.f32.gmra.mxu0 %v343
        %v513 = vpop.f32.mrf.mxu0
        %v514 = vadd.f32 %v408, %v513
        %515 = vmatmul.f32.gmra.mxu0 %v344
        %v516 = vpop.f32.mrf.mxu0
        %v517 = vadd.f32 %v408, %v516
        %518 = vmatmul.f32.gmra.mxu0 %v345
        %v519 = vpop.f32.mrf.mxu0
        %v520 = vadd.f32 %v408, %v519
        %521 = vmatmul.f32.gmra.mxu0 %v346
        %v522 = vpop.f32.mrf.mxu0
        %v523 = vadd.f32 %v408, %v522
        %524 = vmatmul.f32.gmra.mxu0 %v347
        %v525 = vpop.f32.mrf.mxu0
        %v526 = vadd.f32 %v408, %v525
        %527 = vmatmul.f32.gmra.mxu0 %v348
        %v528 = vpop.f32.mrf.mxu0
        %v529 = vadd.f32 %v408, %v528
        %530 = vmatmul.f32.gmra.mxu0 %v349
        %v531 = vpop.f32.mrf.mxu0
        %v532 = vadd.f32 %v408, %v531
        %533 = vmatmul.f32.gmra.mxu0 %v350
        %v534 = vpop.f32.mrf.mxu0
        %v535 = vadd.f32 %v408, %v534
        %536 = vmatmul.f32.gmra.mxu0 %v351
        %v537 = vpop.f32.mrf.mxu0
        %v538 = vadd.f32 %v408, %v537
        %539 = vmatmul.f32.gmra.mxu0 %v352
        %v540 = vpop.f32.mrf.mxu0
        %v541 = vadd.f32 %v408, %v540
        %542 = vmatmul.f32.gmra.mxu0 %v353
        %v543 = vpop.f32.mrf.mxu0
        %v544 = vadd.f32 %v408, %v543
        %545 = vmatmul.f32.gmra.mxu0 %v354
        %v546 = vpop.f32.mrf.mxu0
        %v547 = vadd.f32 %v408, %v546
        %548 = vmatmul.f32.gmra.mxu0 %v355
        %v549 = vpop.f32.mrf.mxu0
        %v550 = vadd.f32 %v408, %v549
        %551 = vmatmul.f32.gmra.mxu0 %v356
        %v552 = vpop.f32.mrf.mxu0
        %v553 = vadd.f32 %v408, %v552
        %554 = vdwg.mxu0
        %555 = vmatpush.msra.mxu0 %v404
        %556 = vmatpush.msra.mxu0 %v401
        %557 = vmatpush.msra.mxu0 %v398
        %558 = vmatpush.msra.mxu0 %v395
        %559 = vmatpush.msra.mxu0 %v392
        %560 = vmatpush.msra.mxu0 %v389
        %561 = vmatpush.msra.mxu0 %v386
        %562 = vmatpush.msra.mxu0 %v383
        %563 = vmatpush.msra.mxu0 %v380
        %564 = vmatpush.msra.mxu0 %v377
        %565 = vmatpush.msra.mxu0 %v374
        %566 = vmatpush.msra.mxu0 %v371
        %567 = vmatpush.msra.mxu0 %v368
        %568 = vmatpush.msra.mxu0 %v365
        %569 = vmatpush.msra.mxu0 %v362
        %570 = vmatpush.msra.mxu0 %v359
        %571 = vmatmul.f32.gmra.mxu0 %v339
        %v572 = vpop.f32.mrf.mxu0
        %v573 = vadd.f32 %v409, %v572
        %574 = vmatmul.f32.gmra.mxu0 %v340
        %v575 = vpop.f32.mrf.mxu0
        %v576 = vadd.f32 %v409, %v575
        %577 = vmatmul.f32.gmra.mxu0 %v341
        %v578 = vpop.f32.mrf.mxu0
        %v579 = vadd.f32 %v409, %v578
        %580 = vmatmul.f32.gmra.mxu0 %v342
        %v581 = vpop.f32.mrf.mxu0
        %v582 = vadd.f32 %v409, %v581
        %583 = vmatmul.f32.gmra.mxu0 %v343
        %v584 = vpop.f32.mrf.mxu0
        %v585 = vadd.f32 %v409, %v584
        %586 = vmatmul.f32.gmra.mxu0 %v344
        %v587 = vpop.f32.mrf.mxu0
        %v588 = vadd.f32 %v409, %v587
        %589 = vmatmul.f32.gmra.mxu0 %v345
        %v590 = vpop.f32.mrf.mxu0
        %v591 = vadd.f32 %v409, %v590
        %592 = vmatmul.f32.gmra.mxu0 %v346
        %v593 = vpop.f32.mrf.mxu0
        %v594 = vadd.f32 %v409, %v593
        %595 = vmatmul.f32.gmra.mxu0 %v347
        %v596 = vpop.f32.mrf.mxu0
        %v597 = vadd.f32 %v409, %v596
        %598 = vmatmul.f32.gmra.mxu0 %v348
        %v599 = vpop.f32.mrf.mxu0
        %v600 = vadd.f32 %v409, %v599
        %601 = vmatmul.f32.gmra.mxu0 %v349
        %v602 = vpop.f32.mrf.mxu0
        %v603 = vadd.f32 %v409, %v602
        %604 = vmatmul.f32.gmra.mxu0 %v350
        %v605 = vpop.f32.mrf.mxu0
        %v606 = vadd.f32 %v409, %v605
        %607 = vmatmul.f32.gmra.mxu0 %v351
        %v608 = vpop.f32.mrf.mxu0
        %v609 = vadd.f32 %v409, %v608
        %610 = vmatmul.f32.gmra.mxu0 %v352
        %v611 = vpop.f32.mrf.mxu0
        %v612 = vadd.f32 %v409, %v611
        %613 = vmatmul.f32.gmra.mxu0 %v353
        %v614 = vpop.f32.mrf.mxu0
        %v615 = vadd.f32 %v409, %v614
        %616 = vmatmul.f32.gmra.mxu0 %v354
        %v617 = vpop.f32.mrf.mxu0
        %v618 = vadd.f32 %v409, %v617
        %619 = vmatmul.f32.gmra.mxu0 %v355
        %v620 = vpop.f32.mrf.mxu0
        %v621 = vadd.f32 %v409, %v620
        %622 = vmatmul.f32.gmra.mxu0 %v356
        %v623 = vpop.f32.mrf.mxu0
        %v624 = vadd.f32 %v409, %v623
        %625 = vdwg.mxu0
        %644 = vrot.lane.b32.xlu0 %v431, 96
        %v645 = vpop.permute.xlu0 %644
        %646 = vrot.lane.b32.xlu0 %v434, 96
        %v647 = vpop.permute.xlu0 %646
        %648 = vrot.lane.b32.xlu0 %v437, 96
        %v649 = vpop.permute.xlu0 %648
        %650 = vrot.lane.b32.xlu0 %v440, 96
        %v651 = vpop.permute.xlu0 %650
        %652 = vrot.lane.b32.xlu0 %v443, 96
        %v653 = vpop.permute.xlu0 %652
        %654 = vrot.lane.b32.xlu0 %v446, 96
        %v655 = vpop.permute.xlu0 %654
        %656 = vrot.lane.b32.xlu0 %v449, 96
        %v657 = vpop.permute.xlu0 %656
        %658 = vrot.lane.b32.xlu0 %v452, 96
        %v659 = vpop.permute.xlu0 %658
        %660 = vrot.lane.b32.xlu0 %v455, 96
        %v661 = vpop.permute.xlu0 %660
        %662 = vrot.lane.b32.xlu0 %v458, 96
        %v663 = vpop.permute.xlu0 %662
        %664 = vrot.lane.b32.xlu0 %v461, 96
        %v665 = vpop.permute.xlu0 %664
        %666 = vrot.lane.b32.xlu0 %v464, 96
        %v667 = vpop.permute.xlu0 %666
        %668 = vrot.lane.b32.xlu0 %v467, 96
        %v669 = vpop.permute.xlu0 %668
        %670 = vrot.lane.b32.xlu0 %v470, 96
        %v671 = vpop.permute.xlu0 %670
        %672 = vrot.lane.b32.xlu0 %v473, 96
        %v673 = vpop.permute.xlu0 %672
        %674 = vrot.lane.b32.xlu0 %v476, 96
        %v675 = vpop.permute.xlu0 %674
        %676 = vrot.lane.b32.xlu0 %v479, 96
        %v677 = vpop.permute.xlu0 %676
        %678 = vrot.lane.b32.xlu0 %v482, 96
        %v679 = vpop.permute.xlu0 %678
        %680 = vrot.lane.b32.xlu0 %v431, 64
        %v681 = vpop.permute.xlu0 %680
        %682 = vrot.lane.b32.xlu0 %v434, 64
        %v683 = vpop.permute.xlu0 %682
        %684 = vrot.lane.b32.xlu0 %v437, 64
        %v685 = vpop.permute.xlu0 %684
        %686 = vrot.lane.b32.xlu0 %v440, 64
        %v687 = vpop.permute.xlu0 %686
        %688 = vrot.lane.b32.xlu0 %v443, 64
        %v689 = vpop.permute.xlu0 %688
        %690 = vrot.lane.b32.xlu0 %v446, 64
        %v691 = vpop.permute.xlu0 %690
        %692 = vrot.lane.b32.xlu0 %v449, 64
        %v693 = vpop.permute.xlu0 %692
        %694 = vrot.lane.b32.xlu0 %v452, 64
        %v695 = vpop.permute.xlu0 %694
        %696 = vrot.lane.b32.xlu0 %v455, 64
        %v697 = vpop.permute.xlu0 %696
        %698 = vrot.lane.b32.xlu0 %v458, 64
        %v699 = vpop.permute.xlu0 %698
        %700 = vrot.lane.b32.xlu0 %v461, 64
        %v701 = vpop.permute.xlu0 %700
        %702 = vrot.lane.b32.xlu0 %v464, 64
        %v703 = vpop.permute.xlu0 %702
        %704 = vrot.lane.b32.xlu0 %v467, 64
        %v705 = vpop.permute.xlu0 %704
        %706 = vrot.lane.b32.xlu0 %v470, 64
        %v707 = vpop.permute.xlu0 %706
        %708 = vrot.lane.b32.xlu0 %v473, 64
        %v709 = vpop.permute.xlu0 %708
        %710 = vrot.lane.b32.xlu0 %v476, 64
        %v711 = vpop.permute.xlu0 %710
        %712 = vrot.lane.b32.xlu0 %v479, 64
        %v713 = vpop.permute.xlu0 %712
        %714 = vrot.lane.b32.xlu0 %v482, 64
        %v715 = vpop.permute.xlu0 %714
        %716 = vrot.lane.b32.xlu0 %v431, 32
        %v717 = vpop.permute.xlu0 %716
        %718 = vrot.lane.b32.xlu0 %v434, 32
        %v719 = vpop.permute.xlu0 %718
        %720 = vrot.lane.b32.xlu0 %v437, 32
        %v721 = vpop.permute.xlu0 %720
        %722 = vrot.lane.b32.xlu0 %v440, 32
        %v723 = vpop.permute.xlu0 %722
        %724 = vrot.lane.b32.xlu0 %v443, 32
        %v725 = vpop.permute.xlu0 %724
        %726 = vrot.lane.b32.xlu0 %v446, 32
        %v727 = vpop.permute.xlu0 %726
        %728 = vrot.lane.b32.xlu0 %v449, 32
        %v729 = vpop.permute.xlu0 %728
        %730 = vrot.lane.b32.xlu0 %v452, 32
        %v731 = vpop.permute.xlu0 %730
        %732 = vrot.lane.b32.xlu0 %v455, 32
        %v733 = vpop.permute.xlu0 %732
        %734 = vrot.lane.b32.xlu0 %v458, 32
        %v735 = vpop.permute.xlu0 %734
        %736 = vrot.lane.b32.xlu0 %v461, 32
        %v737 = vpop.permute.xlu0 %736
        %738 = vrot.lane.b32.xlu0 %v464, 32
        %v739 = vpop.permute.xlu0 %738
        %740 = vrot.lane.b32.xlu0 %v467, 32
        %v741 = vpop.permute.xlu0 %740
        %742 = vrot.lane.b32.xlu0 %v470, 32
        %v743 = vpop.permute.xlu0 %742
        %744 = vrot.lane.b32.xlu0 %v473, 32
        %v745 = vpop.permute.xlu0 %744
        %746 = vrot.lane.b32.xlu0 %v476, 32
        %v747 = vpop.permute.xlu0 %746
        %748 = vrot.lane.b32.xlu0 %v479, 32
        %v749 = vpop.permute.xlu0 %748
        %750 = vrot.lane.b32.xlu0 %v482, 32
        %v751 = vpop.permute.xlu0 %750
        %770 = vrot.lane.b32.xlu0 %v502, 96
        %v771 = vpop.permute.xlu0 %770
        %772 = vrot.lane.b32.xlu0 %v505, 96
        %v773 = vpop.permute.xlu0 %772
        %774 = vrot.lane.b32.xlu0 %v508, 96
        %v775 = vpop.permute.xlu0 %774
        %776 = vrot.lane.b32.xlu0 %v511, 96
        %v777 = vpop.permute.xlu0 %776
        %778 = vrot.lane.b32.xlu0 %v514, 96
        %v779 = vpop.permute.xlu0 %778
        %780 = vrot.lane.b32.xlu0 %v517, 96
        %v781 = vpop.permute.xlu0 %780
        %782 = vrot.lane.b32.xlu0 %v520, 96
        %v783 = vpop.permute.xlu0 %782
        %784 = vrot.lane.b32.xlu0 %v523, 96
        %v785 = vpop.permute.xlu0 %784
        %786 = vrot.lane.b32.xlu0 %v526, 96
        %v787 = vpop.permute.xlu0 %786
        %788 = vrot.lane.b32.xlu0 %v529, 96
        %v789 = vpop.permute.xlu0 %788
        %790 = vrot.lane.b32.xlu0 %v532, 96
        %v791 = vpop.permute.xlu0 %790
        %792 = vrot.lane.b32.xlu0 %v535, 96
        %v793 = vpop.permute.xlu0 %792
        %794 = vrot.lane.b32.xlu0 %v538, 96
        %v795 = vpop.permute.xlu0 %794
        %796 = vrot.lane.b32.xlu0 %v541, 96
        %v797 = vpop.permute.xlu0 %796
        %798 = vrot.lane.b32.xlu0 %v544, 96
        %v799 = vpop.permute.xlu0 %798
        %800 = vrot.lane.b32.xlu0 %v547, 96
        %v801 = vpop.permute.xlu0 %800
        %802 = vrot.lane.b32.xlu0 %v550, 96
        %v803 = vpop.permute.xlu0 %802
        %804 = vrot.lane.b32.xlu0 %v553, 96
        %v805 = vpop.permute.xlu0 %804
        %806 = vrot.lane.b32.xlu0 %v502, 64
        %v807 = vpop.permute.xlu0 %806
        %808 = vrot.lane.b32.xlu0 %v505, 64
        %v809 = vpop.permute.xlu0 %808
        %810 = vrot.lane.b32.xlu0 %v508, 64
        %v811 = vpop.permute.xlu0 %810
        %812 = vrot.lane.b32.xlu0 %v511, 64
        %v813 = vpop.permute.xlu0 %812
        %814 = vrot.lane.b32.xlu0 %v514, 64
        %v815 = vpop.permute.xlu0 %814
        %816 = vrot.lane.b32.xlu0 %v517, 64
        %v817 = vpop.permute.xlu0 %816
        %818 = vrot.lane.b32.xlu0 %v520, 64
        %v819 = vpop.permute.xlu0 %818
        %820 = vrot.lane.b32.xlu0 %v523, 64
        %v821 = vpop.permute.xlu0 %820
        %822 = vrot.lane.b32.xlu0 %v526, 64
        %v823 = vpop.permute.xlu0 %822
        %824 = vrot.lane.b32.xlu0 %v529, 64
        %v825 = vpop.permute.xlu0 %824
        %826 = vrot.lane.b32.xlu0 %v532, 64
        %v827 = vpop.permute.xlu0 %826
        %828 = vrot.lane.b32.xlu0 %v535, 64
        %v829 = vpop.permute.xlu0 %828
        %830 = vrot.lane.b32.xlu0 %v538, 64
        %v831 = vpop.permute.xlu0 %830
        %832 = vrot.lane.b32.xlu0 %v541, 64
        %v833 = vpop.permute.xlu0 %832
        %834 = vrot.lane.b32.xlu0 %v544, 64
        %v835 = vpop.permute.xlu0 %834
        %836 = vrot.lane.b32.xlu0 %v547, 64
        %v837 = vpop.permute.xlu0 %836
        %838 = vrot.lane.b32.xlu0 %v550, 64
        %v839 = vpop.permute.xlu0 %838
        %840 = vrot.lane.b32.xlu0 %v553, 64
        %v841 = vpop.permute.xlu0 %840
        %842 = vrot.lane.b32.xlu0 %v502, 32
        %v843 = vpop.permute.xlu0 %842
        %844 = vrot.lane.b32.xlu0 %v505, 32
        %v845 = vpop.permute.xlu0 %844
        %846 = vrot.lane.b32.xlu0 %v508, 32
        %v847 = vpop.permute.xlu0 %846
        %848 = vrot.lane.b32.xlu0 %v511, 32
        %v849 = vpop.permute.xlu0 %848
        %850 = vrot.lane.b32.xlu0 %v514, 32
        %v851 = vpop.permute.xlu0 %850
        %852 = vrot.lane.b32.xlu0 %v517, 32
        %v853 = vpop.permute.xlu0 %852
        %854 = vrot.lane.b32.xlu0 %v520, 32
        %v855 = vpop.permute.xlu0 %854
        %856 = vrot.lane.b32.xlu0 %v523, 32
        %v857 = vpop.permute.xlu0 %856
        %858 = vrot.lane.b32.xlu0 %v526, 32
        %v859 = vpop.permute.xlu0 %858
        %860 = vrot.lane.b32.xlu0 %v529, 32
        %v861 = vpop.permute.xlu0 %860
        %862 = vrot.lane.b32.xlu0 %v532, 32
        %v863 = vpop.permute.xlu0 %862
        %864 = vrot.lane.b32.xlu0 %v535, 32
        %v865 = vpop.permute.xlu0 %864
        %866 = vrot.lane.b32.xlu0 %v538, 32
        %v867 = vpop.permute.xlu0 %866
        %868 = vrot.lane.b32.xlu0 %v541, 32
        %v869 = vpop.permute.xlu0 %868
        %870 = vrot.lane.b32.xlu0 %v544, 32
        %v871 = vpop.permute.xlu0 %870
        %872 = vrot.lane.b32.xlu0 %v547, 32
        %v873 = vpop.permute.xlu0 %872
        %874 = vrot.lane.b32.xlu0 %v550, 32
        %v875 = vpop.permute.xlu0 %874
        %876 = vrot.lane.b32.xlu0 %v553, 32
        %v877 = vpop.permute.xlu0 %876
        %896 = vrot.lane.b32.xlu0 %v573, 96
        %v897 = vpop.permute.xlu0 %896
        %898 = vrot.lane.b32.xlu0 %v576, 96
        %v899 = vpop.permute.xlu0 %898
        %900 = vrot.lane.b32.xlu0 %v579, 96
        %v901 = vpop.permute.xlu0 %900
        %902 = vrot.lane.b32.xlu0 %v582, 96
        %v903 = vpop.permute.xlu0 %902
        %904 = vrot.lane.b32.xlu0 %v585, 96
        %v905 = vpop.permute.xlu0 %904
        %906 = vrot.lane.b32.xlu0 %v588, 96
        %v907 = vpop.permute.xlu0 %906
        %908 = vrot.lane.b32.xlu0 %v591, 96
        %v909 = vpop.permute.xlu0 %908
        %910 = vrot.lane.b32.xlu0 %v594, 96
        %v911 = vpop.permute.xlu0 %910
        %912 = vrot.lane.b32.xlu0 %v597, 96
        %v913 = vpop.permute.xlu0 %912
        %914 = vrot.lane.b32.xlu0 %v600, 96
        %v915 = vpop.permute.xlu0 %914
        %916 = vrot.lane.b32.xlu0 %v603, 96
        %v917 = vpop.permute.xlu0 %916
        %918 = vrot.lane.b32.xlu0 %v606, 96
        %v919 = vpop.permute.xlu0 %918
        %920 = vrot.lane.b32.xlu0 %v609, 96
        %v921 = vpop.permute.xlu0 %920
        %922 = vrot.lane.b32.xlu0 %v612, 96
        %v923 = vpop.permute.xlu0 %922
        %924 = vrot.lane.b32.xlu0 %v615, 96
        %v925 = vpop.permute.xlu0 %924
        %926 = vrot.lane.b32.xlu0 %v618, 96
        %v927 = vpop.permute.xlu0 %926
        %928 = vrot.lane.b32.xlu0 %v621, 96
        %v929 = vpop.permute.xlu0 %928
        %930 = vrot.lane.b32.xlu0 %v624, 96
        %v931 = vpop.permute.xlu0 %930
        %950 = vrot.lane.b32.xlu0 %v573, 64
        %v951 = vpop.permute.xlu0 %950
        %952 = vrot.lane.b32.xlu0 %v576, 64
        %v953 = vpop.permute.xlu0 %952
        %954 = vrot.lane.b32.xlu0 %v579, 64
        %v955 = vpop.permute.xlu0 %954
        %956 = vrot.lane.b32.xlu0 %v582, 64
        %v957 = vpop.permute.xlu0 %956
        %958 = vrot.lane.b32.xlu0 %v585, 64
        %v959 = vpop.permute.xlu0 %958
        %960 = vrot.lane.b32.xlu0 %v588, 64
        %v961 = vpop.permute.xlu0 %960
        %962 = vrot.lane.b32.xlu0 %v591, 64
        %v963 = vpop.permute.xlu0 %962
        %964 = vrot.lane.b32.xlu0 %v594, 64
        %v965 = vpop.permute.xlu0 %964
        %966 = vrot.lane.b32.xlu0 %v597, 64
        %v967 = vpop.permute.xlu0 %966
        %968 = vrot.lane.b32.xlu0 %v600, 64
        %v969 = vpop.permute.xlu0 %968
        %970 = vrot.lane.b32.xlu0 %v603, 64
        %v971 = vpop.permute.xlu0 %970
        %972 = vrot.lane.b32.xlu0 %v606, 64
        %v973 = vpop.permute.xlu0 %972
        %974 = vrot.lane.b32.xlu0 %v609, 64
        %v975 = vpop.permute.xlu0 %974
        %976 = vrot.lane.b32.xlu0 %v612, 64
        %v977 = vpop.permute.xlu0 %976
        %978 = vrot.lane.b32.xlu0 %v615, 64
        %v979 = vpop.permute.xlu0 %978
        %980 = vrot.lane.b32.xlu0 %v618, 64
        %v981 = vpop.permute.xlu0 %980
        %982 = vrot.lane.b32.xlu0 %v621, 64
        %v983 = vpop.permute.xlu0 %982
        %984 = vrot.lane.b32.xlu0 %v624, 64
        %v985 = vpop.permute.xlu0 %984
        %1004 = vrot.lane.b32.xlu0 %v573, 32
        %v1005 = vpop.permute.xlu0 %1004
        %1006 = vrot.lane.b32.xlu0 %v576, 32
        %v1007 = vpop.permute.xlu0 %1006
        %1008 = vrot.lane.b32.xlu0 %v579, 32
        %v1009 = vpop.permute.xlu0 %1008
        %1010 = vrot.lane.b32.xlu0 %v582, 32
        %v1011 = vpop.permute.xlu0 %1010
        %1012 = vrot.lane.b32.xlu0 %v585, 32
        %v1013 = vpop.permute.xlu0 %1012
        %1014 = vrot.lane.b32.xlu0 %v588, 32
        %v1015 = vpop.permute.xlu0 %1014
        %1016 = vrot.lane.b32.xlu0 %v591, 32
        %v1017 = vpop.permute.xlu0 %1016
        %1018 = vrot.lane.b32.xlu0 %v594, 32
        %v1019 = vpop.permute.xlu0 %1018
        %1020 = vrot.lane.b32.xlu0 %v597, 32
        %v1021 = vpop.permute.xlu0 %1020
        %1022 = vrot.lane.b32.xlu0 %v600, 32
        %v1023 = vpop.permute.xlu0 %1022
        %1024 = vrot.lane.b32.xlu0 %v603, 32
        %v1025 = vpop.permute.xlu0 %1024
        %1026 = vrot.lane.b32.xlu0 %v606, 32
        %v1027 = vpop.permute.xlu0 %1026
        %1028 = vrot.lane.b32.xlu0 %v609, 32
        %v1029 = vpop.permute.xlu0 %1028
        %1030 = vrot.lane.b32.xlu0 %v612, 32
        %v1031 = vpop.permute.xlu0 %1030
        %1032 = vrot.lane.b32.xlu0 %v615, 32
        %v1033 = vpop.permute.xlu0 %1032
        %1034 = vrot.lane.b32.xlu0 %v618, 32
        %v1035 = vpop.permute.xlu0 %1034
        %1036 = vrot.lane.b32.xlu0 %v621, 32
        %v1037 = vpop.permute.xlu0 %1036
        %1038 = vrot.lane.b32.xlu0 %v624, 32
        %v1039 = vpop.permute.xlu0 %1038
        %vm1058 = vcmask 261120
        %v1059 = vsel %vm1058, %v431, 0
        %v1061 = vsel %vm1058, %v434, 0
        %v1063 = vsel %vm1058, %v502, 0
        %v1065 = vsel %vm1058, %v505, 0
        %1067 = vmatpush.xpose.msra.mxu0 0.0
        %1068 = vmatpush.xpose.msra.mxu0 0.0
        %1069 = vmatpush.xpose.msra.mxu0 0.0
        %1070 = vmatpush.xpose.msra.mxu0 0.0
        %1071 = vmatpush.xpose.msra.mxu0 0.0
        %1072 = vmatpush.xpose.msra.mxu0 0.0
        %1073 = vmatpush.xpose.msra.mxu0 0.0
        %1074 = vmatpush.xpose.msra.mxu0 0.0
        %1075 = vmatpush.xpose.msra.mxu0 0.0
        %1076 = vmatpush.xpose.msra.mxu0 0.0
        %1077 = vmatpush.xpose.msra.mxu0 0.0
        %1078 = vmatpush.xpose.msra.mxu0 0.0
        %1079 = vmatpush.xpose.msra.mxu0 0.0
        %1080 = vmatpush.xpose.msra.mxu0 0.0
        %1081 = vmatpush.xpose.msra.mxu0 %v1065
        %1082 = vmatpush.xpose.msra.mxu0 %v1063
        %1083 = vmatmul.f32.gmra.mxu0 %v1059
        %v1084 = vpop.f32.mrf.mxu0
        %v1085 = vadd.f32 0.0, %v1084
        %1086 = vmatmul.f32.gmra.mxu0 %v1061
        %v1087 = vpop.f32.mrf.mxu0
        %v1088 = vadd.f32 0.0, %v1087
        %1089 = vdwg.mxu0
        %v1090 = vsel %vm1058, %v437, 0
        %v1092 = vsel %vm1058, %v440, 0
        %v1094 = vsel %vm1058, %v508, 0
        %v1096 = vsel %vm1058, %v511, 0
        %1098 = vmatpush.xpose.msra.mxu0 0.0
        %1099 = vmatpush.xpose.msra.mxu0 0.0
        %1100 = vmatpush.xpose.msra.mxu0 0.0
        %1101 = vmatpush.xpose.msra.mxu0 0.0
        %1102 = vmatpush.xpose.msra.mxu0 0.0
        %1103 = vmatpush.xpose.msra.mxu0 0.0
        %1104 = vmatpush.xpose.msra.mxu0 0.0
        %1105 = vmatpush.xpose.msra.mxu0 0.0
        %1106 = vmatpush.xpose.msra.mxu0 0.0
        %1107 = vmatpush.xpose.msra.mxu0 0.0
        %1108 = vmatpush.xpose.msra.mxu0 0.0
        %1109 = vmatpush.xpose.msra.mxu0 0.0
        %1110 = vmatpush.xpose.msra.mxu0 0.0
        %1111 = vmatpush.xpose.msra.mxu0 0.0
        %1112 = vmatpush.xpose.msra.mxu0 %v1096
        %1113 = vmatpush.xpose.msra.mxu0 %v1094
        %1114 = vmatmul.f32.gmra.mxu0 %v1090
        %v1115 = vpop.f32.mrf.mxu0
        %v1116 = vadd.f32 0.0, %v1115
        %1117 = vmatmul.f32.gmra.mxu0 %v1092
        %v1118 = vpop.f32.mrf.mxu0
        %v1119 = vadd.f32 0.0, %v1118
        %1120 = vdwg.mxu0
        %v1121 = vsel %vm1058, %v443, 0
        %v1123 = vsel %vm1058, %v446, 0
        %v1125 = vsel %vm1058, %v514, 0
        %v1127 = vsel %vm1058, %v517, 0
        %1129 = vmatpush.xpose.msra.mxu0 0.0
        %1130 = vmatpush.xpose.msra.mxu0 0.0
        %1131 = vmatpush.xpose.msra.mxu0 0.0
        %1132 = vmatpush.xpose.msra.mxu0 0.0
        %1133 = vmatpush.xpose.msra.mxu0 0.0
        %1134 = vmatpush.xpose.msra.mxu0 0.0
        %1135 = vmatpush.xpose.msra.mxu0 0.0
        %1136 = vmatpush.xpose.msra.mxu0 0.0
        %1137 = vmatpush.xpose.msra.mxu0 0.0
        %1138 = vmatpush.xpose.msra.mxu0 0.0
        %1139 = vmatpush.xpose.msra.mxu0 0.0
        %1140 = vmatpush.xpose.msra.mxu0 0.0
        %1141 = vmatpush.xpose.msra.mxu0 0.0
        %1142 = vmatpush.xpose.msra.mxu0 0.0
        %1143 = vmatpush.xpose.msra.mxu0 %v1127
        %1144 = vmatpush.xpose.msra.mxu0 %v1125
        %1145 = vmatmul.f32.gmra.mxu0 %v1121
        %v1146 = vpop.f32.mrf.mxu0
        %v1147 = vadd.f32 0.0, %v1146
        %1148 = vmatmul.f32.gmra.mxu0 %v1123
        %v1149 = vpop.f32.mrf.mxu0
        %v1150 = vadd.f32 0.0, %v1149
        %1151 = vdwg.mxu0
        %v1152 = vsel %vm1058, %v449, 0
        %v1154 = vsel %vm1058, %v452, 0
        %v1156 = vsel %vm1058, %v520, 0
        %v1158 = vsel %vm1058, %v523, 0
        %1160 = vmatpush.xpose.msra.mxu0 0.0
        %1161 = vmatpush.xpose.msra.mxu0 0.0
        %1162 = vmatpush.xpose.msra.mxu0 0.0
        %1163 = vmatpush.xpose.msra.mxu0 0.0
        %1164 = vmatpush.xpose.msra.mxu0 0.0
        %1165 = vmatpush.xpose.msra.mxu0 0.0
        %1166 = vmatpush.xpose.msra.mxu0 0.0
        %1167 = vmatpush.xpose.msra.mxu0 0.0
        %1168 = vmatpush.xpose.msra.mxu0 0.0
        %1169 = vmatpush.xpose.msra.mxu0 0.0
        %1170 = vmatpush.xpose.msra.mxu0 0.0
        %1171 = vmatpush.xpose.msra.mxu0 0.0
        %1172 = vmatpush.xpose.msra.mxu0 0.0
        %1173 = vmatpush.xpose.msra.mxu0 0.0
        %1174 = vmatpush.xpose.msra.mxu0 %v1158
        %1175 = vmatpush.xpose.msra.mxu0 %v1156
        %1176 = vmatmul.f32.gmra.mxu0 %v1152
        %v1177 = vpop.f32.mrf.mxu0
        %v1178 = vadd.f32 0.0, %v1177
        %1179 = vmatmul.f32.gmra.mxu0 %v1154
        %v1180 = vpop.f32.mrf.mxu0
        %v1181 = vadd.f32 0.0, %v1180
        %1182 = vdwg.mxu0
        %v1183 = vsel %vm1058, %v455, 0
        %v1185 = vsel %vm1058, %v458, 0
        %v1187 = vsel %vm1058, %v526, 0
        %v1189 = vsel %vm1058, %v529, 0
        %1191 = vmatpush.xpose.msra.mxu0 0.0
        %1192 = vmatpush.xpose.msra.mxu0 0.0
        %1193 = vmatpush.xpose.msra.mxu0 0.0
        %1194 = vmatpush.xpose.msra.mxu0 0.0
        %1195 = vmatpush.xpose.msra.mxu0 0.0
        %1196 = vmatpush.xpose.msra.mxu0 0.0
        %1197 = vmatpush.xpose.msra.mxu0 0.0
        %1198 = vmatpush.xpose.msra.mxu0 0.0
        %1199 = vmatpush.xpose.msra.mxu0 0.0
        %1200 = vmatpush.xpose.msra.mxu0 0.0
        %1201 = vmatpush.xpose.msra.mxu0 0.0
        %1202 = vmatpush.xpose.msra.mxu0 0.0
        %1203 = vmatpush.xpose.msra.mxu0 0.0
        %1204 = vmatpush.xpose.msra.mxu0 0.0
        %1205 = vmatpush.xpose.msra.mxu0 %v1189
        %1206 = vmatpush.xpose.msra.mxu0 %v1187
        %1207 = vmatmul.f32.gmra.mxu0 %v1183
        %v1208 = vpop.f32.mrf.mxu0
        %v1209 = vadd.f32 0.0, %v1208
        %1210 = vmatmul.f32.gmra.mxu0 %v1185
        %v1211 = vpop.f32.mrf.mxu0
        %v1212 = vadd.f32 0.0, %v1211
        %1213 = vdwg.mxu0
        %v1214 = vsel %vm1058, %v461, 0
        %v1216 = vsel %vm1058, %v464, 0
        %v1218 = vsel %vm1058, %v532, 0
        %v1220 = vsel %vm1058, %v535, 0
        %1222 = vmatpush.xpose.msra.mxu0 0.0
        %1223 = vmatpush.xpose.msra.mxu0 0.0
        %1224 = vmatpush.xpose.msra.mxu0 0.0
        %1225 = vmatpush.xpose.msra.mxu0 0.0
        %1226 = vmatpush.xpose.msra.mxu0 0.0
        %1227 = vmatpush.xpose.msra.mxu0 0.0
        %1228 = vmatpush.xpose.msra.mxu0 0.0
        %1229 = vmatpush.xpose.msra.mxu0 0.0
        %1230 = vmatpush.xpose.msra.mxu0 0.0
        %1231 = vmatpush.xpose.msra.mxu0 0.0
        %1232 = vmatpush.xpose.msra.mxu0 0.0
        %1233 = vmatpush.xpose.msra.mxu0 0.0
        %1234 = vmatpush.xpose.msra.mxu0 0.0
        %1235 = vmatpush.xpose.msra.mxu0 0.0
        %1236 = vmatpush.xpose.msra.mxu0 %v1220
        %1237 = vmatpush.xpose.msra.mxu0 %v1218
        %1238 = vmatmul.f32.gmra.mxu0 %v1214
        %v1239 = vpop.f32.mrf.mxu0
        %v1240 = vadd.f32 0.0, %v1239
        %1241 = vmatmul.f32.gmra.mxu0 %v1216
        %v1242 = vpop.f32.mrf.mxu0
        %v1243 = vadd.f32 0.0, %v1242
        %1244 = vdwg.mxu0
        %v1245 = vsel %vm1058, %v467, 0
        %v1247 = vsel %vm1058, %v470, 0
        %v1249 = vsel %vm1058, %v538, 0
        %v1251 = vsel %vm1058, %v541, 0
        %1253 = vmatpush.xpose.msra.mxu0 0.0
        %1254 = vmatpush.xpose.msra.mxu0 0.0
        %1255 = vmatpush.xpose.msra.mxu0 0.0
        %1256 = vmatpush.xpose.msra.mxu0 0.0
        %1257 = vmatpush.xpose.msra.mxu0 0.0
        %1258 = vmatpush.xpose.msra.mxu0 0.0
        %1259 = vmatpush.xpose.msra.mxu0 0.0
        %1260 = vmatpush.xpose.msra.mxu0 0.0
        %1261 = vmatpush.xpose.msra.mxu0 0.0
        %1262 = vmatpush.xpose.msra.mxu0 0.0
        %1263 = vmatpush.xpose.msra.mxu0 0.0
        %1264 = vmatpush.xpose.msra.mxu0 0.0
        %1265 = vmatpush.xpose.msra.mxu0 0.0
        %1266 = vmatpush.xpose.msra.mxu0 0.0
        %1267 = vmatpush.xpose.msra.mxu0 %v1251
        %1268 = vmatpush.xpose.msra.mxu0 %v1249
        %1269 = vmatmul.f32.gmra.mxu0 %v1245
        %v1270 = vpop.f32.mrf.mxu0
        %v1271 = vadd.f32 0.0, %v1270
        %1272 = vmatmul.f32.gmra.mxu0 %v1247
        %v1273 = vpop.f32.mrf.mxu0
        %v1274 = vadd.f32 0.0, %v1273
        %1275 = vdwg.mxu0
        %v1276 = vsel %vm1058, %v473, 0
        %v1278 = vsel %vm1058, %v476, 0
        %v1280 = vsel %vm1058, %v544, 0
        %v1282 = vsel %vm1058, %v547, 0
        %1284 = vmatpush.xpose.msra.mxu0 0.0
        %1285 = vmatpush.xpose.msra.mxu0 0.0
        %1286 = vmatpush.xpose.msra.mxu0 0.0
        %1287 = vmatpush.xpose.msra.mxu0 0.0
        %1288 = vmatpush.xpose.msra.mxu0 0.0
        %1289 = vmatpush.xpose.msra.mxu0 0.0
        %1290 = vmatpush.xpose.msra.mxu0 0.0
        %1291 = vmatpush.xpose.msra.mxu0 0.0
        %1292 = vmatpush.xpose.msra.mxu0 0.0
        %1293 = vmatpush.xpose.msra.mxu0 0.0
        %1294 = vmatpush.xpose.msra.mxu0 0.0
        %1295 = vmatpush.xpose.msra.mxu0 0.0
        %1296 = vmatpush.xpose.msra.mxu0 0.0
        %1297 = vmatpush.xpose.msra.mxu0 0.0
        %1298 = vmatpush.xpose.msra.mxu0 %v1282
        %1299 = vmatpush.xpose.msra.mxu0 %v1280
        %1300 = vmatmul.f32.gmra.mxu0 %v1276
        %v1301 = vpop.f32.mrf.mxu0
        %v1302 = vadd.f32 0.0, %v1301
        %1303 = vmatmul.f32.gmra.mxu0 %v1278
        %v1304 = vpop.f32.mrf.mxu0
        %v1305 = vadd.f32 0.0, %v1304
        %1306 = vdwg.mxu0
        %v1307 = vsel %vm1058, %v479, 0
        %v1309 = vsel %vm1058, %v482, 0
        %v1311 = vsel %vm1058, %v550, 0
        %v1313 = vsel %vm1058, %v553, 0
        %1315 = vmatpush.xpose.msra.mxu0 0.0
        %1316 = vmatpush.xpose.msra.mxu0 0.0
        %1317 = vmatpush.xpose.msra.mxu0 0.0
        %1318 = vmatpush.xpose.msra.mxu0 0.0
        %1319 = vmatpush.xpose.msra.mxu0 0.0
        %1320 = vmatpush.xpose.msra.mxu0 0.0
        %1321 = vmatpush.xpose.msra.mxu0 0.0
        %1322 = vmatpush.xpose.msra.mxu0 0.0
        %1323 = vmatpush.xpose.msra.mxu0 0.0
        %1324 = vmatpush.xpose.msra.mxu0 0.0
        %1325 = vmatpush.xpose.msra.mxu0 0.0
        %1326 = vmatpush.xpose.msra.mxu0 0.0
        %1327 = vmatpush.xpose.msra.mxu0 0.0
        %1328 = vmatpush.xpose.msra.mxu0 0.0
        %1329 = vmatpush.xpose.msra.mxu0 %v1313
        %1330 = vmatpush.xpose.msra.mxu0 %v1311
        %1331 = vmatmul.f32.gmra.mxu0 %v1307
        %v1332 = vpop.f32.mrf.mxu0
        %v1333 = vadd.f32 0.0, %v1332
        %1334 = vmatmul.f32.gmra.mxu0 %v1309
        %v1335 = vpop.f32.mrf.mxu0
        %v1336 = vadd.f32 0.0, %v1335
        %1337 = vdwg.mxu0
        %v1338 = vsel %vm1058, %v645, 0
        %v1340 = vsel %vm1058, %v647, 0
        %v1342 = vsel %vm1058, %v771, 0
        %v1344 = vsel %vm1058, %v773, 0
        %1346 = vmatpush.xpose.msra.mxu0 0.0
        %1347 = vmatpush.xpose.msra.mxu0 0.0
        %1348 = vmatpush.xpose.msra.mxu0 0.0
        %1349 = vmatpush.xpose.msra.mxu0 0.0
        %1350 = vmatpush.xpose.msra.mxu0 0.0
        %1351 = vmatpush.xpose.msra.mxu0 0.0
        %1352 = vmatpush.xpose.msra.mxu0 0.0
        %1353 = vmatpush.xpose.msra.mxu0 0.0
        %1354 = vmatpush.xpose.msra.mxu0 0.0
        %1355 = vmatpush.xpose.msra.mxu0 0.0
        %1356 = vmatpush.xpose.msra.mxu0 0.0
        %1357 = vmatpush.xpose.msra.mxu0 0.0
        %1358 = vmatpush.xpose.msra.mxu0 0.0
        %1359 = vmatpush.xpose.msra.mxu0 0.0
        %1360 = vmatpush.xpose.msra.mxu0 %v1344
        %1361 = vmatpush.xpose.msra.mxu0 %v1342
        %1362 = vmatmul.f32.gmra.mxu0 %v1338
        %v1363 = vpop.f32.mrf.mxu0
        %v1364 = vadd.f32 0.0, %v1363
        %1365 = vmatmul.f32.gmra.mxu0 %v1340
        %v1366 = vpop.f32.mrf.mxu0
        %v1367 = vadd.f32 0.0, %v1366
        %1368 = vdwg.mxu0
        %v1369 = vsel %vm1058, %v649, 0
        %v1371 = vsel %vm1058, %v651, 0
        %v1373 = vsel %vm1058, %v775, 0
        %v1375 = vsel %vm1058, %v777, 0
        %1377 = vmatpush.xpose.msra.mxu0 0.0
        %1378 = vmatpush.xpose.msra.mxu0 0.0
        %1379 = vmatpush.xpose.msra.mxu0 0.0
        %1380 = vmatpush.xpose.msra.mxu0 0.0
        %1381 = vmatpush.xpose.msra.mxu0 0.0
        %1382 = vmatpush.xpose.msra.mxu0 0.0
        %1383 = vmatpush.xpose.msra.mxu0 0.0
        %1384 = vmatpush.xpose.msra.mxu0 0.0
        %1385 = vmatpush.xpose.msra.mxu0 0.0
        %1386 = vmatpush.xpose.msra.mxu0 0.0
        %1387 = vmatpush.xpose.msra.mxu0 0.0
        %1388 = vmatpush.xpose.msra.mxu0 0.0
        %1389 = vmatpush.xpose.msra.mxu0 0.0
        %1390 = vmatpush.xpose.msra.mxu0 0.0
        %1391 = vmatpush.xpose.msra.mxu0 %v1375
        %1392 = vmatpush.xpose.msra.mxu0 %v1373
        %1393 = vmatmul.f32.gmra.mxu0 %v1369
        %v1394 = vpop.f32.mrf.mxu0
        %v1395 = vadd.f32 0.0, %v1394
        %1396 = vmatmul.f32.gmra.mxu0 %v1371
        %v1397 = vpop.f32.mrf.mxu0
        %v1398 = vadd.f32 0.0, %v1397
        %1399 = vdwg.mxu0
        %v1400 = vsel %vm1058, %v653, 0
        %v1402 = vsel %vm1058, %v655, 0
        %v1404 = vsel %vm1058, %v779, 0
        %v1406 = vsel %vm1058, %v781, 0
        %1408 = vmatpush.xpose.msra.mxu0 0.0
        %1409 = vmatpush.xpose.msra.mxu0 0.0
        %1410 = vmatpush.xpose.msra.mxu0 0.0
        %1411 = vmatpush.xpose.msra.mxu0 0.0
        %1412 = vmatpush.xpose.msra.mxu0 0.0
        %1413 = vmatpush.xpose.msra.mxu0 0.0
        %1414 = vmatpush.xpose.msra.mxu0 0.0
        %1415 = vmatpush.xpose.msra.mxu0 0.0
        %1416 = vmatpush.xpose.msra.mxu0 0.0
        %1417 = vmatpush.xpose.msra.mxu0 0.0
        %1418 = vmatpush.xpose.msra.mxu0 0.0
        %1419 = vmatpush.xpose.msra.mxu0 0.0
        %1420 = vmatpush.xpose.msra.mxu0 0.0
        %1421 = vmatpush.xpose.msra.mxu0 0.0
        %1422 = vmatpush.xpose.msra.mxu0 %v1406
        %1423 = vmatpush.xpose.msra.mxu0 %v1404
        %1424 = vmatmul.f32.gmra.mxu0 %v1400
        %v1425 = vpop.f32.mrf.mxu0
        %v1426 = vadd.f32 0.0, %v1425
        %1427 = vmatmul.f32.gmra.mxu0 %v1402
        %v1428 = vpop.f32.mrf.mxu0
        %v1429 = vadd.f32 0.0, %v1428
        %1430 = vdwg.mxu0
        %v1431 = vsel %vm1058, %v657, 0
        %v1433 = vsel %vm1058, %v659, 0
        %v1435 = vsel %vm1058, %v783, 0
        %v1437 = vsel %vm1058, %v785, 0
        %1439 = vmatpush.xpose.msra.mxu0 0.0
        %1440 = vmatpush.xpose.msra.mxu0 0.0
        %1441 = vmatpush.xpose.msra.mxu0 0.0
        %1442 = vmatpush.xpose.msra.mxu0 0.0
        %1443 = vmatpush.xpose.msra.mxu0 0.0
        %1444 = vmatpush.xpose.msra.mxu0 0.0
        %1445 = vmatpush.xpose.msra.mxu0 0.0
        %1446 = vmatpush.xpose.msra.mxu0 0.0
        %1447 = vmatpush.xpose.msra.mxu0 0.0
        %1448 = vmatpush.xpose.msra.mxu0 0.0
        %1449 = vmatpush.xpose.msra.mxu0 0.0
        %1450 = vmatpush.xpose.msra.mxu0 0.0
        %1451 = vmatpush.xpose.msra.mxu0 0.0
        %1452 = vmatpush.xpose.msra.mxu0 0.0
        %1453 = vmatpush.xpose.msra.mxu0 %v1437
        %1454 = vmatpush.xpose.msra.mxu0 %v1435
        %1455 = vmatmul.f32.gmra.mxu0 %v1431
        %v1456 = vpop.f32.mrf.mxu0
        %v1457 = vadd.f32 0.0, %v1456
        %1458 = vmatmul.f32.gmra.mxu0 %v1433
        %v1459 = vpop.f32.mrf.mxu0
        %v1460 = vadd.f32 0.0, %v1459
        %1461 = vdwg.mxu0
        %v1462 = vsel %vm1058, %v661, 0
        %v1464 = vsel %vm1058, %v663, 0
        %v1466 = vsel %vm1058, %v787, 0
        %v1468 = vsel %vm1058, %v789, 0
        %1470 = vmatpush.xpose.msra.mxu0 0.0
        %1471 = vmatpush.xpose.msra.mxu0 0.0
        %1472 = vmatpush.xpose.msra.mxu0 0.0
        %1473 = vmatpush.xpose.msra.mxu0 0.0
        %1474 = vmatpush.xpose.msra.mxu0 0.0
        %1475 = vmatpush.xpose.msra.mxu0 0.0
        %1476 = vmatpush.xpose.msra.mxu0 0.0
        %1477 = vmatpush.xpose.msra.mxu0 0.0
        %1478 = vmatpush.xpose.msra.mxu0 0.0
        %1479 = vmatpush.xpose.msra.mxu0 0.0
        %1480 = vmatpush.xpose.msra.mxu0 0.0
        %1481 = vmatpush.xpose.msra.mxu0 0.0
        %1482 = vmatpush.xpose.msra.mxu0 0.0
        %1483 = vmatpush.xpose.msra.mxu0 0.0
        %1484 = vmatpush.xpose.msra.mxu0 %v1468
        %1485 = vmatpush.xpose.msra.mxu0 %v1466
        %1486 = vmatmul.f32.gmra.mxu0 %v1462
        %v1487 = vpop.f32.mrf.mxu0
        %v1488 = vadd.f32 0.0, %v1487
        %1489 = vmatmul.f32.gmra.mxu0 %v1464
        %v1490 = vpop.f32.mrf.mxu0
        %v1491 = vadd.f32 0.0, %v1490
        %1492 = vdwg.mxu0
        %v1493 = vsel %vm1058, %v665, 0
        %v1495 = vsel %vm1058, %v667, 0
        %v1497 = vsel %vm1058, %v791, 0
        %v1499 = vsel %vm1058, %v793, 0
        %1501 = vmatpush.xpose.msra.mxu0 0.0
        %1502 = vmatpush.xpose.msra.mxu0 0.0
        %1503 = vmatpush.xpose.msra.mxu0 0.0
        %1504 = vmatpush.xpose.msra.mxu0 0.0
        %1505 = vmatpush.xpose.msra.mxu0 0.0
        %1506 = vmatpush.xpose.msra.mxu0 0.0
        %1507 = vmatpush.xpose.msra.mxu0 0.0
        %1508 = vmatpush.xpose.msra.mxu0 0.0
        %1509 = vmatpush.xpose.msra.mxu0 0.0
        %1510 = vmatpush.xpose.msra.mxu0 0.0
        %1511 = vmatpush.xpose.msra.mxu0 0.0
        %1512 = vmatpush.xpose.msra.mxu0 0.0
        %1513 = vmatpush.xpose.msra.mxu0 0.0
        %1514 = vmatpush.xpose.msra.mxu0 0.0
        %1515 = vmatpush.xpose.msra.mxu0 %v1499
        %1516 = vmatpush.xpose.msra.mxu0 %v1497
        %1517 = vmatmul.f32.gmra.mxu0 %v1493
        %v1518 = vpop.f32.mrf.mxu0
        %v1519 = vadd.f32 0.0, %v1518
        %1520 = vmatmul.f32.gmra.mxu0 %v1495
        %v1521 = vpop.f32.mrf.mxu0
        %v1522 = vadd.f32 0.0, %v1521
        %1523 = vdwg.mxu0
        %v1524 = vsel %vm1058, %v669, 0
        %v1526 = vsel %vm1058, %v671, 0
        %v1528 = vsel %vm1058, %v795, 0
        %v1530 = vsel %vm1058, %v797, 0
        %1532 = vmatpush.xpose.msra.mxu0 0.0
        %1533 = vmatpush.xpose.msra.mxu0 0.0
        %1534 = vmatpush.xpose.msra.mxu0 0.0
        %1535 = vmatpush.xpose.msra.mxu0 0.0
        %1536 = vmatpush.xpose.msra.mxu0 0.0
        %1537 = vmatpush.xpose.msra.mxu0 0.0
        %1538 = vmatpush.xpose.msra.mxu0 0.0
        %1539 = vmatpush.xpose.msra.mxu0 0.0
        %1540 = vmatpush.xpose.msra.mxu0 0.0
        %1541 = vmatpush.xpose.msra.mxu0 0.0
        %1542 = vmatpush.xpose.msra.mxu0 0.0
        %1543 = vmatpush.xpose.msra.mxu0 0.0
        %1544 = vmatpush.xpose.msra.mxu0 0.0
        %1545 = vmatpush.xpose.msra.mxu0 0.0
        %1546 = vmatpush.xpose.msra.mxu0 %v1530
        %1547 = vmatpush.xpose.msra.mxu0 %v1528
        %1548 = vmatmul.f32.gmra.mxu0 %v1524
        %v1549 = vpop.f32.mrf.mxu0
        %v1550 = vadd.f32 0.0, %v1549
        %1551 = vmatmul.f32.gmra.mxu0 %v1526
        %v1552 = vpop.f32.mrf.mxu0
        %v1553 = vadd.f32 0.0, %v1552
        %1554 = vdwg.mxu0
        %v1555 = vsel %vm1058, %v673, 0
        %v1557 = vsel %vm1058, %v675, 0
        %v1559 = vsel %vm1058, %v799, 0
        %v1561 = vsel %vm1058, %v801, 0
        %1563 = vmatpush.xpose.msra.mxu0 0.0
        %1564 = vmatpush.xpose.msra.mxu0 0.0
        %1565 = vmatpush.xpose.msra.mxu0 0.0
        %1566 = vmatpush.xpose.msra.mxu0 0.0
        %1567 = vmatpush.xpose.msra.mxu0 0.0
        %1568 = vmatpush.xpose.msra.mxu0 0.0
        %1569 = vmatpush.xpose.msra.mxu0 0.0
        %1570 = vmatpush.xpose.msra.mxu0 0.0
        %1571 = vmatpush.xpose.msra.mxu0 0.0
        %1572 = vmatpush.xpose.msra.mxu0 0.0
        %1573 = vmatpush.xpose.msra.mxu0 0.0
        %1574 = vmatpush.xpose.msra.mxu0 0.0
        %1575 = vmatpush.xpose.msra.mxu0 0.0
        %1576 = vmatpush.xpose.msra.mxu0 0.0
        %1577 = vmatpush.xpose.msra.mxu0 %v1561
        %1578 = vmatpush.xpose.msra.mxu0 %v1559
        %1579 = vmatmul.f32.gmra.mxu0 %v1555
        %v1580 = vpop.f32.mrf.mxu0
        %v1581 = vadd.f32 0.0, %v1580
        %1582 = vmatmul.f32.gmra.mxu0 %v1557
        %v1583 = vpop.f32.mrf.mxu0
        %v1584 = vadd.f32 0.0, %v1583
        %1585 = vdwg.mxu0
        %v1586 = vsel %vm1058, %v677, 0
        %v1588 = vsel %vm1058, %v679, 0
        %v1590 = vsel %vm1058, %v803, 0
        %v1592 = vsel %vm1058, %v805, 0
        %1594 = vmatpush.xpose.msra.mxu0 0.0
        %1595 = vmatpush.xpose.msra.mxu0 0.0
        %1596 = vmatpush.xpose.msra.mxu0 0.0
        %1597 = vmatpush.xpose.msra.mxu0 0.0
        %1598 = vmatpush.xpose.msra.mxu0 0.0
        %1599 = vmatpush.xpose.msra.mxu0 0.0
        %1600 = vmatpush.xpose.msra.mxu0 0.0
        %1601 = vmatpush.xpose.msra.mxu0 0.0
        %1602 = vmatpush.xpose.msra.mxu0 0.0
        %1603 = vmatpush.xpose.msra.mxu0 0.0
        %1604 = vmatpush.xpose.msra.mxu0 0.0
        %1605 = vmatpush.xpose.msra.mxu0 0.0
        %1606 = vmatpush.xpose.msra.mxu0 0.0
        %1607 = vmatpush.xpose.msra.mxu0 0.0
        %1608 = vmatpush.xpose.msra.mxu0 %v1592
        %1609 = vmatpush.xpose.msra.mxu0 %v1590
        %1610 = vmatmul.f32.gmra.mxu0 %v1586
        %v1611 = vpop.f32.mrf.mxu0
        %v1612 = vadd.f32 0.0, %v1611
        %1613 = vmatmul.f32.gmra.mxu0 %v1588
        %v1614 = vpop.f32.mrf.mxu0
        %v1615 = vadd.f32 0.0, %v1614
        %1616 = vdwg.mxu0
        %v1617 = vsel %vm1058, %v681, 0
        %v1619 = vsel %vm1058, %v683, 0
        %v1621 = vsel %vm1058, %v807, 0
        %v1623 = vsel %vm1058, %v809, 0
        %1625 = vmatpush.xpose.msra.mxu0 0.0
        %1626 = vmatpush.xpose.msra.mxu0 0.0
        %1627 = vmatpush.xpose.msra.mxu0 0.0
        %1628 = vmatpush.xpose.msra.mxu0 0.0
        %1629 = vmatpush.xpose.msra.mxu0 0.0
        %1630 = vmatpush.xpose.msra.mxu0 0.0
        %1631 = vmatpush.xpose.msra.mxu0 0.0
        %1632 = vmatpush.xpose.msra.mxu0 0.0
        %1633 = vmatpush.xpose.msra.mxu0 0.0
        %1634 = vmatpush.xpose.msra.mxu0 0.0
        %1635 = vmatpush.xpose.msra.mxu0 0.0
        %1636 = vmatpush.xpose.msra.mxu0 0.0
        %1637 = vmatpush.xpose.msra.mxu0 0.0
        %1638 = vmatpush.xpose.msra.mxu0 0.0
        %1639 = vmatpush.xpose.msra.mxu0 %v1623
        %1640 = vmatpush.xpose.msra.mxu0 %v1621
        %1641 = vmatmul.f32.gmra.mxu0 %v1617
        %v1642 = vpop.f32.mrf.mxu0
        %v1643 = vadd.f32 0.0, %v1642
        %1644 = vmatmul.f32.gmra.mxu0 %v1619
        %v1645 = vpop.f32.mrf.mxu0
        %v1646 = vadd.f32 0.0, %v1645
        %1647 = vdwg.mxu0
        %v1648 = vsel %vm1058, %v685, 0
        %v1650 = vsel %vm1058, %v687, 0
        %v1652 = vsel %vm1058, %v811, 0
        %v1654 = vsel %vm1058, %v813, 0
        %1656 = vmatpush.xpose.msra.mxu0 0.0
        %1657 = vmatpush.xpose.msra.mxu0 0.0
        %1658 = vmatpush.xpose.msra.mxu0 0.0
        %1659 = vmatpush.xpose.msra.mxu0 0.0
        %1660 = vmatpush.xpose.msra.mxu0 0.0
        %1661 = vmatpush.xpose.msra.mxu0 0.0
        %1662 = vmatpush.xpose.msra.mxu0 0.0
        %1663 = vmatpush.xpose.msra.mxu0 0.0
        %1664 = vmatpush.xpose.msra.mxu0 0.0
        %1665 = vmatpush.xpose.msra.mxu0 0.0
        %1666 = vmatpush.xpose.msra.mxu0 0.0
        %1667 = vmatpush.xpose.msra.mxu0 0.0
        %1668 = vmatpush.xpose.msra.mxu0 0.0
        %1669 = vmatpush.xpose.msra.mxu0 0.0
        %1670 = vmatpush.xpose.msra.mxu0 %v1654
        %1671 = vmatpush.xpose.msra.mxu0 %v1652
        %1672 = vmatmul.f32.gmra.mxu0 %v1648
        %v1673 = vpop.f32.mrf.mxu0
        %v1674 = vadd.f32 0.0, %v1673
        %1675 = vmatmul.f32.gmra.mxu0 %v1650
        %v1676 = vpop.f32.mrf.mxu0
        %v1677 = vadd.f32 0.0, %v1676
        %1678 = vdwg.mxu0
        %v1679 = vsel %vm1058, %v689, 0
        %v1681 = vsel %vm1058, %v691, 0
        %v1683 = vsel %vm1058, %v815, 0
        %v1685 = vsel %vm1058, %v817, 0
        %1687 = vmatpush.xpose.msra.mxu0 0.0
        %1688 = vmatpush.xpose.msra.mxu0 0.0
        %1689 = vmatpush.xpose.msra.mxu0 0.0
        %1690 = vmatpush.xpose.msra.mxu0 0.0
        %1691 = vmatpush.xpose.msra.mxu0 0.0
        %1692 = vmatpush.xpose.msra.mxu0 0.0
        %1693 = vmatpush.xpose.msra.mxu0 0.0
        %1694 = vmatpush.xpose.msra.mxu0 0.0
        %1695 = vmatpush.xpose.msra.mxu0 0.0
        %1696 = vmatpush.xpose.msra.mxu0 0.0
        %1697 = vmatpush.xpose.msra.mxu0 0.0
        %1698 = vmatpush.xpose.msra.mxu0 0.0
        %1699 = vmatpush.xpose.msra.mxu0 0.0
        %1700 = vmatpush.xpose.msra.mxu0 0.0
        %1701 = vmatpush.xpose.msra.mxu0 %v1685
        %1702 = vmatpush.xpose.msra.mxu0 %v1683
        %1703 = vmatmul.f32.gmra.mxu0 %v1679
        %v1704 = vpop.f32.mrf.mxu0
        %v1705 = vadd.f32 0.0, %v1704
        %1706 = vmatmul.f32.gmra.mxu0 %v1681
        %v1707 = vpop.f32.mrf.mxu0
        %v1708 = vadd.f32 0.0, %v1707
        %1709 = vdwg.mxu0
        %v1710 = vsel %vm1058, %v693, 0
        %v1712 = vsel %vm1058, %v695, 0
        %v1714 = vsel %vm1058, %v819, 0
        %v1716 = vsel %vm1058, %v821, 0
        %1718 = vmatpush.xpose.msra.mxu0 0.0
        %1719 = vmatpush.xpose.msra.mxu0 0.0
        %1720 = vmatpush.xpose.msra.mxu0 0.0
        %1721 = vmatpush.xpose.msra.mxu0 0.0
        %1722 = vmatpush.xpose.msra.mxu0 0.0
        %1723 = vmatpush.xpose.msra.mxu0 0.0
        %1724 = vmatpush.xpose.msra.mxu0 0.0
        %1725 = vmatpush.xpose.msra.mxu0 0.0
        %1726 = vmatpush.xpose.msra.mxu0 0.0
        %1727 = vmatpush.xpose.msra.mxu0 0.0
        %1728 = vmatpush.xpose.msra.mxu0 0.0
        %1729 = vmatpush.xpose.msra.mxu0 0.0
        %1730 = vmatpush.xpose.msra.mxu0 0.0
        %1731 = vmatpush.xpose.msra.mxu0 0.0
        %1732 = vmatpush.xpose.msra.mxu0 %v1716
        %1733 = vmatpush.xpose.msra.mxu0 %v1714
        %1734 = vmatmul.f32.gmra.mxu0 %v1710
        %v1735 = vpop.f32.mrf.mxu0
        %v1736 = vadd.f32 0.0, %v1735
        %1737 = vmatmul.f32.gmra.mxu0 %v1712
        %v1738 = vpop.f32.mrf.mxu0
        %v1739 = vadd.f32 0.0, %v1738
        %1740 = vdwg.mxu0
        %v1741 = vsel %vm1058, %v697, 0
        %v1743 = vsel %vm1058, %v699, 0
        %v1745 = vsel %vm1058, %v823, 0
        %v1747 = vsel %vm1058, %v825, 0
        %1749 = vmatpush.xpose.msra.mxu0 0.0
        %1750 = vmatpush.xpose.msra.mxu0 0.0
        %1751 = vmatpush.xpose.msra.mxu0 0.0
        %1752 = vmatpush.xpose.msra.mxu0 0.0
        %1753 = vmatpush.xpose.msra.mxu0 0.0
        %1754 = vmatpush.xpose.msra.mxu0 0.0
        %1755 = vmatpush.xpose.msra.mxu0 0.0
        %1756 = vmatpush.xpose.msra.mxu0 0.0
        %1757 = vmatpush.xpose.msra.mxu0 0.0
        %1758 = vmatpush.xpose.msra.mxu0 0.0
        %1759 = vmatpush.xpose.msra.mxu0 0.0
        %1760 = vmatpush.xpose.msra.mxu0 0.0
        %1761 = vmatpush.xpose.msra.mxu0 0.0
        %1762 = vmatpush.xpose.msra.mxu0 0.0
        %1763 = vmatpush.xpose.msra.mxu0 %v1747
        %1764 = vmatpush.xpose.msra.mxu0 %v1745
        %1765 = vmatmul.f32.gmra.mxu0 %v1741
        %v1766 = vpop.f32.mrf.mxu0
        %v1767 = vadd.f32 0.0, %v1766
        %1768 = vmatmul.f32.gmra.mxu0 %v1743
        %v1769 = vpop.f32.mrf.mxu0
        %v1770 = vadd.f32 0.0, %v1769
        %1771 = vdwg.mxu0
        %v1772 = vsel %vm1058, %v701, 0
        %v1774 = vsel %vm1058, %v703, 0
        %v1776 = vsel %vm1058, %v827, 0
        %v1778 = vsel %vm1058, %v829, 0
        %1780 = vmatpush.xpose.msra.mxu0 0.0
        %1781 = vmatpush.xpose.msra.mxu0 0.0
        %1782 = vmatpush.xpose.msra.mxu0 0.0
        %1783 = vmatpush.xpose.msra.mxu0 0.0
        %1784 = vmatpush.xpose.msra.mxu0 0.0
        %1785 = vmatpush.xpose.msra.mxu0 0.0
        %1786 = vmatpush.xpose.msra.mxu0 0.0
        %1787 = vmatpush.xpose.msra.mxu0 0.0
        %1788 = vmatpush.xpose.msra.mxu0 0.0
        %1789 = vmatpush.xpose.msra.mxu0 0.0
        %1790 = vmatpush.xpose.msra.mxu0 0.0
        %1791 = vmatpush.xpose.msra.mxu0 0.0
        %1792 = vmatpush.xpose.msra.mxu0 0.0
        %1793 = vmatpush.xpose.msra.mxu0 0.0
        %1794 = vmatpush.xpose.msra.mxu0 %v1778
        %1795 = vmatpush.xpose.msra.mxu0 %v1776
        %1796 = vmatmul.f32.gmra.mxu0 %v1772
        %v1797 = vpop.f32.mrf.mxu0
        %v1798 = vadd.f32 0.0, %v1797
        %1799 = vmatmul.f32.gmra.mxu0 %v1774
        %v1800 = vpop.f32.mrf.mxu0
        %v1801 = vadd.f32 0.0, %v1800
        %1802 = vdwg.mxu0
        %v1803 = vsel %vm1058, %v705, 0
        %v1805 = vsel %vm1058, %v707, 0
        %v1807 = vsel %vm1058, %v831, 0
        %v1809 = vsel %vm1058, %v833, 0
        %1811 = vmatpush.xpose.msra.mxu0 0.0
        %1812 = vmatpush.xpose.msra.mxu0 0.0
        %1813 = vmatpush.xpose.msra.mxu0 0.0
        %1814 = vmatpush.xpose.msra.mxu0 0.0
        %1815 = vmatpush.xpose.msra.mxu0 0.0
        %1816 = vmatpush.xpose.msra.mxu0 0.0
        %1817 = vmatpush.xpose.msra.mxu0 0.0
        %1818 = vmatpush.xpose.msra.mxu0 0.0
        %1819 = vmatpush.xpose.msra.mxu0 0.0
        %1820 = vmatpush.xpose.msra.mxu0 0.0
        %1821 = vmatpush.xpose.msra.mxu0 0.0
        %1822 = vmatpush.xpose.msra.mxu0 0.0
        %1823 = vmatpush.xpose.msra.mxu0 0.0
        %1824 = vmatpush.xpose.msra.mxu0 0.0
        %1825 = vmatpush.xpose.msra.mxu0 %v1809
        %1826 = vmatpush.xpose.msra.mxu0 %v1807
        %1827 = vmatmul.f32.gmra.mxu0 %v1803
        %v1828 = vpop.f32.mrf.mxu0
        %v1829 = vadd.f32 0.0, %v1828
        %1830 = vmatmul.f32.gmra.mxu0 %v1805
        %v1831 = vpop.f32.mrf.mxu0
        %v1832 = vadd.f32 0.0, %v1831
        %1833 = vdwg.mxu0
        %v1834 = vsel %vm1058, %v709, 0
        %v1836 = vsel %vm1058, %v711, 0
        %v1838 = vsel %vm1058, %v835, 0
        %v1840 = vsel %vm1058, %v837, 0
        %1842 = vmatpush.xpose.msra.mxu0 0.0
        %1843 = vmatpush.xpose.msra.mxu0 0.0
        %1844 = vmatpush.xpose.msra.mxu0 0.0
        %1845 = vmatpush.xpose.msra.mxu0 0.0
        %1846 = vmatpush.xpose.msra.mxu0 0.0
        %1847 = vmatpush.xpose.msra.mxu0 0.0
        %1848 = vmatpush.xpose.msra.mxu0 0.0
        %1849 = vmatpush.xpose.msra.mxu0 0.0
        %1850 = vmatpush.xpose.msra.mxu0 0.0
        %1851 = vmatpush.xpose.msra.mxu0 0.0
        %1852 = vmatpush.xpose.msra.mxu0 0.0
        %1853 = vmatpush.xpose.msra.mxu0 0.0
        %1854 = vmatpush.xpose.msra.mxu0 0.0
        %1855 = vmatpush.xpose.msra.mxu0 0.0
        %1856 = vmatpush.xpose.msra.mxu0 %v1840
        %1857 = vmatpush.xpose.msra.mxu0 %v1838
        %1858 = vmatmul.f32.gmra.mxu0 %v1834
        %v1859 = vpop.f32.mrf.mxu0
        %v1860 = vadd.f32 0.0, %v1859
        %1861 = vmatmul.f32.gmra.mxu0 %v1836
        %v1862 = vpop.f32.mrf.mxu0
        %v1863 = vadd.f32 0.0, %v1862
        %1864 = vdwg.mxu0
        %v1865 = vsel %vm1058, %v713, 0
        %v1867 = vsel %vm1058, %v715, 0
        %v1869 = vsel %vm1058, %v839, 0
        %v1871 = vsel %vm1058, %v841, 0
        %1873 = vmatpush.xpose.msra.mxu0 0.0
        %1874 = vmatpush.xpose.msra.mxu0 0.0
        %1875 = vmatpush.xpose.msra.mxu0 0.0
        %1876 = vmatpush.xpose.msra.mxu0 0.0
        %1877 = vmatpush.xpose.msra.mxu0 0.0
        %1878 = vmatpush.xpose.msra.mxu0 0.0
        %1879 = vmatpush.xpose.msra.mxu0 0.0
        %1880 = vmatpush.xpose.msra.mxu0 0.0
        %1881 = vmatpush.xpose.msra.mxu0 0.0
        %1882 = vmatpush.xpose.msra.mxu0 0.0
        %1883 = vmatpush.xpose.msra.mxu0 0.0
        %1884 = vmatpush.xpose.msra.mxu0 0.0
        %1885 = vmatpush.xpose.msra.mxu0 0.0
        %1886 = vmatpush.xpose.msra.mxu0 0.0
        %1887 = vmatpush.xpose.msra.mxu0 %v1871
        %1888 = vmatpush.xpose.msra.mxu0 %v1869
        %1889 = vmatmul.f32.gmra.mxu0 %v1865
        %v1890 = vpop.f32.mrf.mxu0
        %v1891 = vadd.f32 0.0, %v1890
        %1892 = vmatmul.f32.gmra.mxu0 %v1867
        %v1893 = vpop.f32.mrf.mxu0
        %v1894 = vadd.f32 0.0, %v1893
        %1895 = vdwg.mxu0
        %v1896 = vsel %vm1058, %v717, 0
        %v1898 = vsel %vm1058, %v719, 0
        %v1900 = vsel %vm1058, %v843, 0
        %v1902 = vsel %vm1058, %v845, 0
        %1904 = vmatpush.xpose.msra.mxu0 0.0
        %1905 = vmatpush.xpose.msra.mxu0 0.0
        %1906 = vmatpush.xpose.msra.mxu0 0.0
        %1907 = vmatpush.xpose.msra.mxu0 0.0
        %1908 = vmatpush.xpose.msra.mxu0 0.0
        %1909 = vmatpush.xpose.msra.mxu0 0.0
        %1910 = vmatpush.xpose.msra.mxu0 0.0
        %1911 = vmatpush.xpose.msra.mxu0 0.0
        %1912 = vmatpush.xpose.msra.mxu0 0.0
        %1913 = vmatpush.xpose.msra.mxu0 0.0
        %1914 = vmatpush.xpose.msra.mxu0 0.0
        %1915 = vmatpush.xpose.msra.mxu0 0.0
        %1916 = vmatpush.xpose.msra.mxu0 0.0
        %1917 = vmatpush.xpose.msra.mxu0 0.0
        %1918 = vmatpush.xpose.msra.mxu0 %v1902
        %1919 = vmatpush.xpose.msra.mxu0 %v1900
        %1920 = vmatmul.f32.gmra.mxu0 %v1896
        %v1921 = vpop.f32.mrf.mxu0
        %v1922 = vadd.f32 0.0, %v1921
        %1923 = vmatmul.f32.gmra.mxu0 %v1898
        %v1924 = vpop.f32.mrf.mxu0
        %v1925 = vadd.f32 0.0, %v1924
        %1926 = vdwg.mxu0
        %v1927 = vsel %vm1058, %v721, 0
        %v1929 = vsel %vm1058, %v723, 0
        %v1931 = vsel %vm1058, %v847, 0
        %v1933 = vsel %vm1058, %v849, 0
        %1935 = vmatpush.xpose.msra.mxu0 0.0
        %1936 = vmatpush.xpose.msra.mxu0 0.0
        %1937 = vmatpush.xpose.msra.mxu0 0.0
        %1938 = vmatpush.xpose.msra.mxu0 0.0
        %1939 = vmatpush.xpose.msra.mxu0 0.0
        %1940 = vmatpush.xpose.msra.mxu0 0.0
        %1941 = vmatpush.xpose.msra.mxu0 0.0
        %1942 = vmatpush.xpose.msra.mxu0 0.0
        %1943 = vmatpush.xpose.msra.mxu0 0.0
        %1944 = vmatpush.xpose.msra.mxu0 0.0
        %1945 = vmatpush.xpose.msra.mxu0 0.0
        %1946 = vmatpush.xpose.msra.mxu0 0.0
        %1947 = vmatpush.xpose.msra.mxu0 0.0
        %1948 = vmatpush.xpose.msra.mxu0 0.0
        %1949 = vmatpush.xpose.msra.mxu0 %v1933
        %1950 = vmatpush.xpose.msra.mxu0 %v1931
        %1951 = vmatmul.f32.gmra.mxu0 %v1927
        %v1952 = vpop.f32.mrf.mxu0
        %v1953 = vadd.f32 0.0, %v1952
        %1954 = vmatmul.f32.gmra.mxu0 %v1929
        %v1955 = vpop.f32.mrf.mxu0
        %v1956 = vadd.f32 0.0, %v1955
        %1957 = vdwg.mxu0
        %v1958 = vsel %vm1058, %v725, 0
        %v1960 = vsel %vm1058, %v727, 0
        %v1962 = vsel %vm1058, %v851, 0
        %v1964 = vsel %vm1058, %v853, 0
        %1966 = vmatpush.xpose.msra.mxu0 0.0
        %1967 = vmatpush.xpose.msra.mxu0 0.0
        %1968 = vmatpush.xpose.msra.mxu0 0.0
        %1969 = vmatpush.xpose.msra.mxu0 0.0
        %1970 = vmatpush.xpose.msra.mxu0 0.0
        %1971 = vmatpush.xpose.msra.mxu0 0.0
        %1972 = vmatpush.xpose.msra.mxu0 0.0
        %1973 = vmatpush.xpose.msra.mxu0 0.0
        %1974 = vmatpush.xpose.msra.mxu0 0.0
        %1975 = vmatpush.xpose.msra.mxu0 0.0
        %1976 = vmatpush.xpose.msra.mxu0 0.0
        %1977 = vmatpush.xpose.msra.mxu0 0.0
        %1978 = vmatpush.xpose.msra.mxu0 0.0
        %1979 = vmatpush.xpose.msra.mxu0 0.0
        %1980 = vmatpush.xpose.msra.mxu0 %v1964
        %1981 = vmatpush.xpose.msra.mxu0 %v1962
        %1982 = vmatmul.f32.gmra.mxu0 %v1958
        %v1983 = vpop.f32.mrf.mxu0
        %v1984 = vadd.f32 0.0, %v1983
        %1985 = vmatmul.f32.gmra.mxu0 %v1960
        %v1986 = vpop.f32.mrf.mxu0
        %v1987 = vadd.f32 0.0, %v1986
        %1988 = vdwg.mxu0
        %v1989 = vsel %vm1058, %v729, 0
        %v1991 = vsel %vm1058, %v731, 0
        %v1993 = vsel %vm1058, %v855, 0
        %v1995 = vsel %vm1058, %v857, 0
        %1997 = vmatpush.xpose.msra.mxu0 0.0
        %1998 = vmatpush.xpose.msra.mxu0 0.0
        %1999 = vmatpush.xpose.msra.mxu0 0.0
        %2000 = vmatpush.xpose.msra.mxu0 0.0
        %2001 = vmatpush.xpose.msra.mxu0 0.0
        %2002 = vmatpush.xpose.msra.mxu0 0.0
        %2003 = vmatpush.xpose.msra.mxu0 0.0
        %2004 = vmatpush.xpose.msra.mxu0 0.0
        %2005 = vmatpush.xpose.msra.mxu0 0.0
        %2006 = vmatpush.xpose.msra.mxu0 0.0
        %2007 = vmatpush.xpose.msra.mxu0 0.0
        %2008 = vmatpush.xpose.msra.mxu0 0.0
        %2009 = vmatpush.xpose.msra.mxu0 0.0
        %2010 = vmatpush.xpose.msra.mxu0 0.0
        %2011 = vmatpush.xpose.msra.mxu0 %v1995
        %2012 = vmatpush.xpose.msra.mxu0 %v1993
        %2013 = vmatmul.f32.gmra.mxu0 %v1989
        %v2014 = vpop.f32.mrf.mxu0
        %v2015 = vadd.f32 0.0, %v2014
        %2016 = vmatmul.f32.gmra.mxu0 %v1991
        %v2017 = vpop.f32.mrf.mxu0
        %v2018 = vadd.f32 0.0, %v2017
        %2019 = vdwg.mxu0
        %v2020 = vsel %vm1058, %v733, 0
        %v2022 = vsel %vm1058, %v735, 0
        %v2024 = vsel %vm1058, %v859, 0
        %v2026 = vsel %vm1058, %v861, 0
        %2028 = vmatpush.xpose.msra.mxu0 0.0
        %2029 = vmatpush.xpose.msra.mxu0 0.0
        %2030 = vmatpush.xpose.msra.mxu0 0.0
        %2031 = vmatpush.xpose.msra.mxu0 0.0
        %2032 = vmatpush.xpose.msra.mxu0 0.0
        %2033 = vmatpush.xpose.msra.mxu0 0.0
        %2034 = vmatpush.xpose.msra.mxu0 0.0
        %2035 = vmatpush.xpose.msra.mxu0 0.0
        %2036 = vmatpush.xpose.msra.mxu0 0.0
        %2037 = vmatpush.xpose.msra.mxu0 0.0
        %2038 = vmatpush.xpose.msra.mxu0 0.0
        %2039 = vmatpush.xpose.msra.mxu0 0.0
        %2040 = vmatpush.xpose.msra.mxu0 0.0
        %2041 = vmatpush.xpose.msra.mxu0 0.0
        %2042 = vmatpush.xpose.msra.mxu0 %v2026
        %2043 = vmatpush.xpose.msra.mxu0 %v2024
        %2044 = vmatmul.f32.gmra.mxu0 %v2020
        %v2045 = vpop.f32.mrf.mxu0
        %v2046 = vadd.f32 0.0, %v2045
        %2047 = vmatmul.f32.gmra.mxu0 %v2022
        %v2048 = vpop.f32.mrf.mxu0
        %v2049 = vadd.f32 0.0, %v2048
        %2050 = vdwg.mxu0
        %v2051 = vsel %vm1058, %v737, 0
        %v2053 = vsel %vm1058, %v739, 0
        %v2055 = vsel %vm1058, %v863, 0
        %v2057 = vsel %vm1058, %v865, 0
        %2059 = vmatpush.xpose.msra.mxu0 0.0
        %2060 = vmatpush.xpose.msra.mxu0 0.0
        %2061 = vmatpush.xpose.msra.mxu0 0.0
        %2062 = vmatpush.xpose.msra.mxu0 0.0
        %2063 = vmatpush.xpose.msra.mxu0 0.0
        %2064 = vmatpush.xpose.msra.mxu0 0.0
        %2065 = vmatpush.xpose.msra.mxu0 0.0
        %2066 = vmatpush.xpose.msra.mxu0 0.0
        %2067 = vmatpush.xpose.msra.mxu0 0.0
        %2068 = vmatpush.xpose.msra.mxu0 0.0
        %2069 = vmatpush.xpose.msra.mxu0 0.0
        %2070 = vmatpush.xpose.msra.mxu0 0.0
        %2071 = vmatpush.xpose.msra.mxu0 0.0
        %2072 = vmatpush.xpose.msra.mxu0 0.0
        %2073 = vmatpush.xpose.msra.mxu0 %v2057
        %2074 = vmatpush.xpose.msra.mxu0 %v2055
        %2075 = vmatmul.f32.gmra.mxu0 %v2051
        %v2076 = vpop.f32.mrf.mxu0
        %v2077 = vadd.f32 0.0, %v2076
        %2078 = vmatmul.f32.gmra.mxu0 %v2053
        %v2079 = vpop.f32.mrf.mxu0
        %v2080 = vadd.f32 0.0, %v2079
        %2081 = vdwg.mxu0
        %v2082 = vsel %vm1058, %v741, 0
        %v2084 = vsel %vm1058, %v743, 0
        %v2086 = vsel %vm1058, %v867, 0
        %v2088 = vsel %vm1058, %v869, 0
        %2090 = vmatpush.xpose.msra.mxu0 0.0
        %2091 = vmatpush.xpose.msra.mxu0 0.0
        %2092 = vmatpush.xpose.msra.mxu0 0.0
        %2093 = vmatpush.xpose.msra.mxu0 0.0
        %2094 = vmatpush.xpose.msra.mxu0 0.0
        %2095 = vmatpush.xpose.msra.mxu0 0.0
        %2096 = vmatpush.xpose.msra.mxu0 0.0
        %2097 = vmatpush.xpose.msra.mxu0 0.0
        %2098 = vmatpush.xpose.msra.mxu0 0.0
        %2099 = vmatpush.xpose.msra.mxu0 0.0
        %2100 = vmatpush.xpose.msra.mxu0 0.0
        %2101 = vmatpush.xpose.msra.mxu0 0.0
        %2102 = vmatpush.xpose.msra.mxu0 0.0
        %2103 = vmatpush.xpose.msra.mxu0 0.0
        %2104 = vmatpush.xpose.msra.mxu0 %v2088
        %2105 = vmatpush.xpose.msra.mxu0 %v2086
        %2106 = vmatmul.f32.gmra.mxu0 %v2082
        %v2107 = vpop.f32.mrf.mxu0
        %v2108 = vadd.f32 0.0, %v2107
        %2109 = vmatmul.f32.gmra.mxu0 %v2084
        %v2110 = vpop.f32.mrf.mxu0
        %v2111 = vadd.f32 0.0, %v2110
        %2112 = vdwg.mxu0
        %v2113 = vsel %vm1058, %v745, 0
        %v2115 = vsel %vm1058, %v747, 0
        %v2117 = vsel %vm1058, %v871, 0
        %v2119 = vsel %vm1058, %v873, 0
        %2121 = vmatpush.xpose.msra.mxu0 0.0
        %2122 = vmatpush.xpose.msra.mxu0 0.0
        %2123 = vmatpush.xpose.msra.mxu0 0.0
        %2124 = vmatpush.xpose.msra.mxu0 0.0
        %2125 = vmatpush.xpose.msra.mxu0 0.0
        %2126 = vmatpush.xpose.msra.mxu0 0.0
        %2127 = vmatpush.xpose.msra.mxu0 0.0
        %2128 = vmatpush.xpose.msra.mxu0 0.0
        %2129 = vmatpush.xpose.msra.mxu0 0.0
        %2130 = vmatpush.xpose.msra.mxu0 0.0
        %2131 = vmatpush.xpose.msra.mxu0 0.0
        %2132 = vmatpush.xpose.msra.mxu0 0.0
        %2133 = vmatpush.xpose.msra.mxu0 0.0
        %2134 = vmatpush.xpose.msra.mxu0 0.0
        %2135 = vmatpush.xpose.msra.mxu0 %v2119
        %2136 = vmatpush.xpose.msra.mxu0 %v2117
        %2137 = vmatmul.f32.gmra.mxu0 %v2113
        %v2138 = vpop.f32.mrf.mxu0
        %v2139 = vadd.f32 0.0, %v2138
        %2140 = vmatmul.f32.gmra.mxu0 %v2115
        %v2141 = vpop.f32.mrf.mxu0
        %v2142 = vadd.f32 0.0, %v2141
        %2143 = vdwg.mxu0
        %v2144 = vsel %vm1058, %v749, 0
        %v2146 = vsel %vm1058, %v751, 0
        %v2148 = vsel %vm1058, %v875, 0
        %v2150 = vsel %vm1058, %v877, 0
        %2152 = vmatpush.xpose.msra.mxu0 0.0
        %2153 = vmatpush.xpose.msra.mxu0 0.0
        %2154 = vmatpush.xpose.msra.mxu0 0.0
        %2155 = vmatpush.xpose.msra.mxu0 0.0
        %2156 = vmatpush.xpose.msra.mxu0 0.0
        %2157 = vmatpush.xpose.msra.mxu0 0.0
        %2158 = vmatpush.xpose.msra.mxu0 0.0
        %2159 = vmatpush.xpose.msra.mxu0 0.0
        %2160 = vmatpush.xpose.msra.mxu0 0.0
        %2161 = vmatpush.xpose.msra.mxu0 0.0
        %2162 = vmatpush.xpose.msra.mxu0 0.0
        %2163 = vmatpush.xpose.msra.mxu0 0.0
        %2164 = vmatpush.xpose.msra.mxu0 0.0
        %2165 = vmatpush.xpose.msra.mxu0 0.0
        %2166 = vmatpush.xpose.msra.mxu0 %v2150
        %2167 = vmatpush.xpose.msra.mxu0 %v2148
        %2168 = vmatmul.f32.gmra.mxu0 %v2144
        %v2169 = vpop.f32.mrf.mxu0
        %v2170 = vadd.f32 0.0, %v2169
        %2171 = vmatmul.f32.gmra.mxu0 %v2146
        %v2172 = vpop.f32.mrf.mxu0
        %v2173 = vadd.f32 0.0, %v2172
        %2174 = vdwg.mxu0
        %v2175 = vld [vmem:[#allocation11] sm:$0xff]
        %v2176 = vld [vmem:[#allocation11 + $0x8] sm:$0xff]
        %v2177 = vld [vmem:[#allocation11 + $0x10] sm:$0xff]
        %v2178 = vld [vmem:[#allocation11 + $0x18] sm:$0xff]
        %v2179 = vld [vmem:[#allocation11 + $0x20] sm:$0xff]
        %v2180 = vld [vmem:[#allocation11 + $0x28] sm:$0xff]
        %v2181 = vld [vmem:[#allocation11 + $0x30] sm:$0xff]
        %v2182 = vld [vmem:[#allocation11 + $0x38] sm:$0xff]
        %v2183 = vld [vmem:[#allocation11 + $0x40] sm:$0xff]
        %v2184 = vld [vmem:[#allocation11 + $0x48] sm:$0xff]
        %v2185 = vld [vmem:[#allocation11 + $0x50] sm:$0xff]
        %v2186 = vld [vmem:[#allocation11 + $0x58] sm:$0xff]
        %v2187 = vld [vmem:[#allocation11 + $0x60] sm:$0xff]
        %v2188 = vld [vmem:[#allocation11 + $0x68] sm:$0xff]
        %v2189 = vld [vmem:[#allocation11 + $0x70] sm:$0xff]
        %v2190 = vld [vmem:[#allocation11 + $0x78] sm:$0xff]
        %v2191 = vld [vmem:[#allocation11 + $0x80] sm:$0xff]
        %v2192 = vld [vmem:[#allocation11 + $0x88] sm:$0xff]
        %v2193 = vld [vmem:[#allocation11 + $0x90] sm:$0xff]
        %v2194 = vld [vmem:[#allocation11 + $0x98] sm:$0xff]
        %v2195 = vld [vmem:[#allocation11 + $0xa0] sm:$0xff]
        %v2196 = vld [vmem:[#allocation11 + $0xa8] sm:$0xff]
        %v2197 = vld [vmem:[#allocation11 + $0xb0] sm:$0xff]
        %v2198 = vld [vmem:[#allocation11 + $0xb8] sm:$0xff]
        %v2199 = vld [vmem:[#allocation11 + $0xc0] sm:$0xff]
        %v2200 = vld [vmem:[#allocation11 + $0xc8] sm:$0xff]
        %v2201 = vld [vmem:[#allocation11 + $0xd0] sm:$0xff]
        %v2202 = vld [vmem:[#allocation11 + $0xd8] sm:$0xff]
        %v2203 = vld [vmem:[#allocation11 + $0xe0] sm:$0xff]
        %v2204 = vld [vmem:[#allocation11 + $0xe8] sm:$0xff]
        %v2205 = vld [vmem:[#allocation11 + $0xf0] sm:$0xff]
        %v2206 = vld [vmem:[#allocation11 + $0xf8] sm:$0xff]
        %v2207 = vld [vmem:[#allocation11 + $0x100] sm:$0xff]
        %v2208 = vld [vmem:[#allocation11 + $0x108] sm:$0xff]
        %v2209 = vld [vmem:[#allocation11 + $0x110] sm:$0xff]
        %v2210 = vld [vmem:[#allocation11 + $0x118] sm:$0xff]
        %v2211 = vld [vmem:[#allocation11 + $0x120] sm:$0xff]
        %v2212 = vld [vmem:[#allocation11 + $0x128] sm:$0xff]
        %v2213 = vld [vmem:[#allocation11 + $0x130] sm:$0xff]
        %v2214 = vld [vmem:[#allocation11 + $0x138] sm:$0xff]
        %v2215 = vld [vmem:[#allocation11 + $0x140] sm:$0xff]
        %v2216 = vld [vmem:[#allocation11 + $0x148] sm:$0xff]
        %v2217 = vld [vmem:[#allocation11 + $0x150] sm:$0xff]
        %v2218 = vld [vmem:[#allocation11 + $0x158] sm:$0xff]
        %v2219 = vld [vmem:[#allocation11 + $0x160] sm:$0xff]
        %v2220 = vld [vmem:[#allocation11 + $0x168] sm:$0xff]
        %v2221 = vld [vmem:[#allocation11 + $0x170] sm:$0xff]
        %v2222 = vld [vmem:[#allocation11 + $0x178] sm:$0xff]
        %v2223 = vld [vmem:[#allocation11 + $0x180] sm:$0xff]
        %v2224 = vld [vmem:[#allocation11 + $0x188] sm:$0xff]
        %v2225 = vld [vmem:[#allocation11 + $0x190] sm:$0xff]
        %v2226 = vld [vmem:[#allocation11 + $0x198] sm:$0xff]
        %v2227 = vld [vmem:[#allocation11 + $0x1a0] sm:$0xff]
        %v2228 = vld [vmem:[#allocation11 + $0x1a8] sm:$0xff]
        %v2229 = vld [vmem:[#allocation11 + $0x1b0] sm:$0xff]
        %v2230 = vld [vmem:[#allocation11 + $0x1b8] sm:$0xff]
        %v2231 = vld [vmem:[#allocation11 + $0x1c0] sm:$0xff]
        %v2232 = vld [vmem:[#allocation11 + $0x1c8] sm:$0xff]
        %v2233 = vld [vmem:[#allocation11 + $0x1d0] sm:$0xff]
        %v2234 = vld [vmem:[#allocation11 + $0x1d8] sm:$0xff]
        %v2235 = vld [vmem:[#allocation11 + $0x1e0] sm:$0xff]
        %v2236 = vld [vmem:[#allocation11 + $0x1e8] sm:$0xff]
        %v2237 = vld [vmem:[#allocation11 + $0x1f0] sm:$0xff]
        %v2238 = vld [vmem:[#allocation11 + $0x1f8] sm:$0xff]
        %v2239 = vld [vmem:[#allocation11 + $0x200] sm:$0xff]
        %v2240 = vld [vmem:[#allocation11 + $0x208] sm:$0xff]
        %v2241 = vld [vmem:[#allocation11 + $0x210] sm:$0xff]
        %v2242 = vld [vmem:[#allocation11 + $0x218] sm:$0xff]
        %v2243 = vld [vmem:[#allocation11 + $0x220] sm:$0xff]
        %v2244 = vld [vmem:[#allocation11 + $0x228] sm:$0xff]
        %v2245 = vld [vmem:[#allocation11 + $0x230] sm:$0xff]
        %v2246 = vld [vmem:[#allocation11 + $0x238] sm:$0xff]
        %v2247 = vadd.f32 %v1085, %v2175
        %v2248 = vadd.f32 %v1088, %v2176
        %v2249 = vadd.f32 %v1116, %v2177
        %v2250 = vadd.f32 %v1119, %v2178
        %v2251 = vadd.f32 %v1147, %v2179
        %v2252 = vadd.f32 %v1150, %v2180
        %v2253 = vadd.f32 %v1178, %v2181
        %v2254 = vadd.f32 %v1181, %v2182
        %v2255 = vadd.f32 %v1209, %v2183
        %v2256 = vadd.f32 %v1212, %v2184
        %v2257 = vadd.f32 %v1240, %v2185
        %v2258 = vadd.f32 %v1243, %v2186
        %v2259 = vadd.f32 %v1271, %v2187
        %v2260 = vadd.f32 %v1274, %v2188
        %v2261 = vadd.f32 %v1302, %v2189
        %v2262 = vadd.f32 %v1305, %v2190
        %v2263 = vadd.f32 %v1333, %v2191
        %v2264 = vadd.f32 %v1336, %v2192
        %v2265 = vadd.f32 %v1364, %v2193
        %v2266 = vadd.f32 %v1367, %v2194
        %v2267 = vadd.f32 %v1395, %v2195
        %v2268 = vadd.f32 %v1398, %v2196
        %v2269 = vadd.f32 %v1426, %v2197
        %v2270 = vadd.f32 %v1429, %v2198
        %v2271 = vadd.f32 %v1457, %v2199
        %v2272 = vadd.f32 %v1460, %v2200
        %v2273 = vadd.f32 %v1488, %v2201
        %v2274 = vadd.f32 %v1491, %v2202
        %v2275 = vadd.f32 %v1519, %v2203
        %v2276 = vadd.f32 %v1522, %v2204
        %v2277 = vadd.f32 %v1550, %v2205
        %v2278 = vadd.f32 %v1553, %v2206
        %v2279 = vadd.f32 %v1581, %v2207
        %v2280 = vadd.f32 %v1584, %v2208
        %v2281 = vadd.f32 %v1612, %v2209
        %v2282 = vadd.f32 %v1615, %v2210
        %v2283 = vadd.f32 %v1643, %v2211
        %v2284 = vadd.f32 %v1646, %v2212
        %v2285 = vadd.f32 %v1674, %v2213
        %v2286 = vadd.f32 %v1677, %v2214
        %v2287 = vadd.f32 %v1705, %v2215
        %v2288 = vadd.f32 %v1708, %v2216
        %v2289 = vadd.f32 %v1736, %v2217
        %v2290 = vadd.f32 %v1739, %v2218
        %v2291 = vadd.f32 %v1767, %v2219
        %v2292 = vadd.f32 %v1770, %v2220
        %v2293 = vadd.f32 %v1798, %v2221
        %v2294 = vadd.f32 %v1801, %v2222
        %v2295 = vadd.f32 %v1829, %v2223
        %v2296 = vadd.f32 %v1832, %v2224
        %v2297 = vadd.f32 %v1860, %v2225
        %v2298 = vadd.f32 %v1863, %v2226
        %v2299 = vadd.f32 %v1891, %v2227
        %v2300 = vadd.f32 %v1894, %v2228
        %v2301 = vadd.f32 %v1922, %v2229
        %v2302 = vadd.f32 %v1925, %v2230
        %v2303 = vadd.f32 %v1953, %v2231
        %v2304 = vadd.f32 %v1956, %v2232
        %v2305 = vadd.f32 %v1984, %v2233
        %v2306 = vadd.f32 %v1987, %v2234
        %v2307 = vadd.f32 %v2015, %v2235
        %v2308 = vadd.f32 %v2018, %v2236
        %v2309 = vadd.f32 %v2046, %v2237
        %v2310 = vadd.f32 %v2049, %v2238
        %v2311 = vadd.f32 %v2077, %v2239
        %v2312 = vadd.f32 %v2080, %v2240
        %v2313 = vadd.f32 %v2108, %v2241
        %v2314 = vadd.f32 %v2111, %v2242
        %v2315 = vadd.f32 %v2139, %v2243
        %v2316 = vadd.f32 %v2142, %v2244
        %v2317 = vadd.f32 %v2170, %v2245
        %v2318 = vadd.f32 %v2173, %v2246
        %vm2319 = vcmask 130048
        %v2320 = vsel %vm2319, %v2247, -inf
        %2321 = vmax.xlane.f32.xlu0 %v2320
        %v2322 = vpop.xlane.xlu0 %2321
        %v2323 = vsel %vm2319, %v2248, -inf
        %2324 = vmax.xlane.f32.xlu0 %v2323
        %v2325 = vpop.xlane.xlu0 %2324
        %v2326 = vsel %vm2319, %v2249, -inf
        %2327 = vmax.xlane.f32.xlu0 %v2326
        %v2328 = vpop.xlane.xlu0 %2327
        %v2329 = vsel %vm2319, %v2250, -inf
        %2330 = vmax.xlane.f32.xlu0 %v2329
        %v2331 = vpop.xlane.xlu0 %2330
        %v2332 = vsel %vm2319, %v2251, -inf
        %2333 = vmax.xlane.f32.xlu0 %v2332
        %v2334 = vpop.xlane.xlu0 %2333
        %v2335 = vsel %vm2319, %v2252, -inf
        %2336 = vmax.xlane.f32.xlu0 %v2335
        %v2337 = vpop.xlane.xlu0 %2336
        %v2338 = vsel %vm2319, %v2253, -inf
        %2339 = vmax.xlane.f32.xlu0 %v2338
        %v2340 = vpop.xlane.xlu0 %2339
        %v2341 = vsel %vm2319, %v2254, -inf
        %2342 = vmax.xlane.f32.xlu0 %v2341
        %v2343 = vpop.xlane.xlu0 %2342
        %v2344 = vsel %vm2319, %v2255, -inf
        %2345 = vmax.xlane.f32.xlu0 %v2344
        %v2346 = vpop.xlane.xlu0 %2345
        %v2347 = vsel %vm2319, %v2256, -inf
        %2348 = vmax.xlane.f32.xlu0 %v2347
        %v2349 = vpop.xlane.xlu0 %2348
        %v2350 = vsel %vm2319, %v2257, -inf
        %2351 = vmax.xlane.f32.xlu0 %v2350
        %v2352 = vpop.xlane.xlu0 %2351
        %v2353 = vsel %vm2319, %v2258, -inf
        %2354 = vmax.xlane.f32.xlu0 %v2353
        %v2355 = vpop.xlane.xlu0 %2354
        %v2356 = vsel %vm2319, %v2259, -inf
        %2357 = vmax.xlane.f32.xlu0 %v2356
        %v2358 = vpop.xlane.xlu0 %2357
        %v2359 = vsel %vm2319, %v2260, -inf
        %2360 = vmax.xlane.f32.xlu0 %v2359
        %v2361 = vpop.xlane.xlu0 %2360
        %v2362 = vsel %vm2319, %v2261, -inf
        %2363 = vmax.xlane.f32.xlu0 %v2362
        %v2364 = vpop.xlane.xlu0 %2363
        %v2365 = vsel %vm2319, %v2262, -inf
        %2366 = vmax.xlane.f32.xlu0 %v2365
        %v2367 = vpop.xlane.xlu0 %2366
        %v2368 = vsel %vm2319, %v2263, -inf
        %2369 = vmax.xlane.f32.xlu0 %v2368
        %v2370 = vpop.xlane.xlu0 %2369
        %v2371 = vsel %vm2319, %v2264, -inf
        %2372 = vmax.xlane.f32.xlu0 %v2371
        %v2373 = vpop.xlane.xlu0 %2372
        %v2374 = vsel %vm2319, %v2265, -inf
        %2375 = vmax.xlane.f32.xlu0 %v2374
        %v2376 = vpop.xlane.xlu0 %2375
        %v2377 = vsel %vm2319, %v2266, -inf
        %2378 = vmax.xlane.f32.xlu0 %v2377
        %v2379 = vpop.xlane.xlu0 %2378
        %v2380 = vsel %vm2319, %v2267, -inf
        %2381 = vmax.xlane.f32.xlu0 %v2380
        %v2382 = vpop.xlane.xlu0 %2381
        %v2383 = vsel %vm2319, %v2268, -inf
        %2384 = vmax.xlane.f32.xlu0 %v2383
        %v2385 = vpop.xlane.xlu0 %2384
        %v2386 = vsel %vm2319, %v2269, -inf
        %2387 = vmax.xlane.f32.xlu0 %v2386
        %v2388 = vpop.xlane.xlu0 %2387
        %v2389 = vsel %vm2319, %v2270, -inf
        %2390 = vmax.xlane.f32.xlu0 %v2389
        %v2391 = vpop.xlane.xlu0 %2390
        %v2392 = vsel %vm2319, %v2271, -inf
        %2393 = vmax.xlane.f32.xlu0 %v2392
        %v2394 = vpop.xlane.xlu0 %2393
        %v2395 = vsel %vm2319, %v2272, -inf
        %2396 = vmax.xlane.f32.xlu0 %v2395
        %v2397 = vpop.xlane.xlu0 %2396
        %v2398 = vsel %vm2319, %v2273, -inf
        %2399 = vmax.xlane.f32.xlu0 %v2398
        %v2400 = vpop.xlane.xlu0 %2399
        %v2401 = vsel %vm2319, %v2274, -inf
        %2402 = vmax.xlane.f32.xlu0 %v2401
        %v2403 = vpop.xlane.xlu0 %2402
        %v2404 = vsel %vm2319, %v2275, -inf
        %2405 = vmax.xlane.f32.xlu0 %v2404
        %v2406 = vpop.xlane.xlu0 %2405
        %v2407 = vsel %vm2319, %v2276, -inf
        %2408 = vmax.xlane.f32.xlu0 %v2407
        %v2409 = vpop.xlane.xlu0 %2408
        %v2410 = vsel %vm2319, %v2277, -inf
        %2411 = vmax.xlane.f32.xlu0 %v2410
        %v2412 = vpop.xlane.xlu0 %2411
        %v2413 = vsel %vm2319, %v2278, -inf
        %2414 = vmax.xlane.f32.xlu0 %v2413
        %v2415 = vpop.xlane.xlu0 %2414
        %v2416 = vsel %vm2319, %v2279, -inf
        %2417 = vmax.xlane.f32.xlu0 %v2416
        %v2418 = vpop.xlane.xlu0 %2417
        %v2419 = vsel %vm2319, %v2280, -inf
        %2420 = vmax.xlane.f32.xlu0 %v2419
        %v2421 = vpop.xlane.xlu0 %2420
        %v2422 = vsel %vm2319, %v2281, -inf
        %2423 = vmax.xlane.f32.xlu0 %v2422
        %v2424 = vpop.xlane.xlu0 %2423
        %v2425 = vsel %vm2319, %v2282, -inf
        %2426 = vmax.xlane.f32.xlu0 %v2425
        %v2427 = vpop.xlane.xlu0 %2426
        %v2428 = vsel %vm2319, %v2283, -inf
        %2429 = vmax.xlane.f32.xlu0 %v2428
        %v2430 = vpop.xlane.xlu0 %2429
        %v2431 = vsel %vm2319, %v2284, -inf
        %2432 = vmax.xlane.f32.xlu0 %v2431
        %v2433 = vpop.xlane.xlu0 %2432
        %v2434 = vsel %vm2319, %v2285, -inf
        %2435 = vmax.xlane.f32.xlu0 %v2434
        %v2436 = vpop.xlane.xlu0 %2435
        %v2437 = vsel %vm2319, %v2286, -inf
        %2438 = vmax.xlane.f32.xlu0 %v2437
        %v2439 = vpop.xlane.xlu0 %2438
        %v2440 = vsel %vm2319, %v2287, -inf
        %2441 = vmax.xlane.f32.xlu0 %v2440
        %v2442 = vpop.xlane.xlu0 %2441
        %v2443 = vsel %vm2319, %v2288, -inf
        %2444 = vmax.xlane.f32.xlu0 %v2443
        %v2445 = vpop.xlane.xlu0 %2444
        %v2446 = vsel %vm2319, %v2289, -inf
        %2447 = vmax.xlane.f32.xlu0 %v2446
        %v2448 = vpop.xlane.xlu0 %2447
        %v2449 = vsel %vm2319, %v2290, -inf
        %2450 = vmax.xlane.f32.xlu0 %v2449
        %v2451 = vpop.xlane.xlu0 %2450
        %v2452 = vsel %vm2319, %v2291, -inf
        %2453 = vmax.xlane.f32.xlu0 %v2452
        %v2454 = vpop.xlane.xlu0 %2453
        %v2455 = vsel %vm2319, %v2292, -inf
        %2456 = vmax.xlane.f32.xlu0 %v2455
        %v2457 = vpop.xlane.xlu0 %2456
        %v2458 = vsel %vm2319, %v2293, -inf
        %2459 = vmax.xlane.f32.xlu0 %v2458
        %v2460 = vpop.xlane.xlu0 %2459
        %v2461 = vsel %vm2319, %v2294, -inf
        %2462 = vmax.xlane.f32.xlu0 %v2461
        %v2463 = vpop.xlane.xlu0 %2462
        %v2464 = vsel %vm2319, %v2295, -inf
        %2465 = vmax.xlane.f32.xlu0 %v2464
        %v2466 = vpop.xlane.xlu0 %2465
        %v2467 = vsel %vm2319, %v2296, -inf
        %2468 = vmax.xlane.f32.xlu0 %v2467
        %v2469 = vpop.xlane.xlu0 %2468
        %v2470 = vsel %vm2319, %v2297, -inf
        %2471 = vmax.xlane.f32.xlu0 %v2470
        %v2472 = vpop.xlane.xlu0 %2471
        %v2473 = vsel %vm2319, %v2298, -inf
        %2474 = vmax.xlane.f32.xlu0 %v2473
        %v2475 = vpop.xlane.xlu0 %2474
        %v2476 = vsel %vm2319, %v2299, -inf
        %2477 = vmax.xlane.f32.xlu0 %v2476
        %v2478 = vpop.xlane.xlu0 %2477
        %v2479 = vsel %vm2319, %v2300, -inf
        %2480 = vmax.xlane.f32.xlu0 %v2479
        %v2481 = vpop.xlane.xlu0 %2480
        %v2482 = vsel %vm2319, %v2301, -inf
        %2483 = vmax.xlane.f32.xlu0 %v2482
        %v2484 = vpop.xlane.xlu0 %2483
        %v2485 = vsel %vm2319, %v2302, -inf
        %2486 = vmax.xlane.f32.xlu0 %v2485
        %v2487 = vpop.xlane.xlu0 %2486
        %v2488 = vsel %vm2319, %v2303, -inf
        %2489 = vmax.xlane.f32.xlu0 %v2488
        %v2490 = vpop.xlane.xlu0 %2489
        %v2491 = vsel %vm2319, %v2304, -inf
        %2492 = vmax.xlane.f32.xlu0 %v2491
        %v2493 = vpop.xlane.xlu0 %2492
        %v2494 = vsel %vm2319, %v2305, -inf
        %2495 = vmax.xlane.f32.xlu0 %v2494
        %v2496 = vpop.xlane.xlu0 %2495
        %v2497 = vsel %vm2319, %v2306, -inf
        %2498 = vmax.xlane.f32.xlu0 %v2497
        %v2499 = vpop.xlane.xlu0 %2498
        %v2500 = vsel %vm2319, %v2307, -inf
        %2501 = vmax.xlane.f32.xlu0 %v2500
        %v2502 = vpop.xlane.xlu0 %2501
        %v2503 = vsel %vm2319, %v2308, -inf
        %2504 = vmax.xlane.f32.xlu0 %v2503
        %v2505 = vpop.xlane.xlu0 %2504
        %v2506 = vsel %vm2319, %v2309, -inf
        %2507 = vmax.xlane.f32.xlu0 %v2506
        %v2508 = vpop.xlane.xlu0 %2507
        %v2509 = vsel %vm2319, %v2310, -inf
        %2510 = vmax.xlane.f32.xlu0 %v2509
        %v2511 = vpop.xlane.xlu0 %2510
        %v2512 = vsel %vm2319, %v2311, -inf
        %2513 = vmax.xlane.f32.xlu0 %v2512
        %v2514 = vpop.xlane.xlu0 %2513
        %v2515 = vsel %vm2319, %v2312, -inf
        %2516 = vmax.xlane.f32.xlu0 %v2515
        %v2517 = vpop.xlane.xlu0 %2516
        %v2518 = vsel %vm2319, %v2313, -inf
        %2519 = vmax.xlane.f32.xlu0 %v2518
        %v2520 = vpop.xlane.xlu0 %2519
        %v2521 = vsel %vm2319, %v2314, -inf
        %2522 = vmax.xlane.f32.xlu0 %v2521
        %v2523 = vpop.xlane.xlu0 %2522
        %v2524 = vsel %vm2319, %v2315, -inf
        %2525 = vmax.xlane.f32.xlu0 %v2524
        %v2526 = vpop.xlane.xlu0 %2525
        %v2527 = vsel %vm2319, %v2316, -inf
        %2528 = vmax.xlane.f32.xlu0 %v2527
        %v2529 = vpop.xlane.xlu0 %2528
        %v2530 = vsel %vm2319, %v2317, -inf
        %2531 = vmax.xlane.f32.xlu0 %v2530
        %v2532 = vpop.xlane.xlu0 %2531
        %v2533 = vsel %vm2319, %v2318, -inf
        %2534 = vmax.xlane.f32.xlu0 %v2533
        %v2535 = vpop.xlane.xlu0 %2534
        %v2536 = vsub.f32 %v2247, %v2322
        %v2537 = vsub.f32 %v2248, %v2325
        %v2538 = vsub.f32 %v2249, %v2328
        %v2539 = vsub.f32 %v2250, %v2331
        %v2540 = vsub.f32 %v2251, %v2334
        %v2541 = vsub.f32 %v2252, %v2337
        %v2542 = vsub.f32 %v2253, %v2340
        %v2543 = vsub.f32 %v2254, %v2343
        %v2544 = vsub.f32 %v2255, %v2346
        %v2545 = vsub.f32 %v2256, %v2349
        %v2546 = vsub.f32 %v2257, %v2352
        %v2547 = vsub.f32 %v2258, %v2355
        %v2548 = vsub.f32 %v2259, %v2358
        %v2549 = vsub.f32 %v2260, %v2361
        %v2550 = vsub.f32 %v2261, %v2364
        %v2551 = vsub.f32 %v2262, %v2367
        %v2552 = vsub.f32 %v2263, %v2370
        %v2553 = vsub.f32 %v2264, %v2373
        %v2554 = vsub.f32 %v2265, %v2376
        %v2555 = vsub.f32 %v2266, %v2379
        %v2556 = vsub.f32 %v2267, %v2382
        %v2557 = vsub.f32 %v2268, %v2385
        %v2558 = vsub.f32 %v2269, %v2388
        %v2559 = vsub.f32 %v2270, %v2391
        %v2560 = vsub.f32 %v2271, %v2394
        %v2561 = vsub.f32 %v2272, %v2397
        %v2562 = vsub.f32 %v2273, %v2400
        %v2563 = vsub.f32 %v2274, %v2403
        %v2564 = vsub.f32 %v2275, %v2406
        %v2565 = vsub.f32 %v2276, %v2409
        %v2566 = vsub.f32 %v2277, %v2412
        %v2567 = vsub.f32 %v2278, %v2415
        %v2568 = vsub.f32 %v2279, %v2418
        %v2569 = vsub.f32 %v2280, %v2421
        %v2570 = vsub.f32 %v2281, %v2424
        %v2571 = vsub.f32 %v2282, %v2427
        %v2572 = vsub.f32 %v2283, %v2430
        %v2573 = vsub.f32 %v2284, %v2433
        %v2574 = vsub.f32 %v2285, %v2436
        %v2575 = vsub.f32 %v2286, %v2439
        %v2576 = vsub.f32 %v2287, %v2442
        %v2577 = vsub.f32 %v2288, %v2445
        %v2578 = vsub.f32 %v2289, %v2448
        %v2579 = vsub.f32 %v2290, %v2451
        %v2580 = vsub.f32 %v2291, %v2454
        %v2581 = vsub.f32 %v2292, %v2457
        %v2582 = vsub.f32 %v2293, %v2460
        %v2583 = vsub.f32 %v2294, %v2463
        %v2584 = vsub.f32 %v2295, %v2466
        %v2585 = vsub.f32 %v2296, %v2469
        %v2586 = vsub.f32 %v2297, %v2472
        %v2587 = vsub.f32 %v2298, %v2475
        %v2588 = vsub.f32 %v2299, %v2478
        %v2589 = vsub.f32 %v2300, %v2481
        %v2590 = vsub.f32 %v2301, %v2484
        %v2591 = vsub.f32 %v2302, %v2487
        %v2592 = vsub.f32 %v2303, %v2490
        %v2593 = vsub.f32 %v2304, %v2493
        %v2594 = vsub.f32 %v2305, %v2496
        %v2595 = vsub.f32 %v2306, %v2499
        %v2596 = vsub.f32 %v2307, %v2502
        %v2597 = vsub.f32 %v2308, %v2505
        %v2598 = vsub.f32 %v2309, %v2508
        %v2599 = vsub.f32 %v2310, %v2511
        %v2600 = vsub.f32 %v2311, %v2514
        %v2601 = vsub.f32 %v2312, %v2517
        %v2602 = vsub.f32 %v2313, %v2520
        %v2603 = vsub.f32 %v2314, %v2523
        %v2604 = vsub.f32 %v2315, %v2526
        %v2605 = vsub.f32 %v2316, %v2529
        %v2606 = vsub.f32 %v2317, %v2532
        %v2607 = vsub.f32 %v2318, %v2535
        %v2608 = vmul.f32 %v2536, 1.442695
        %v2609 = vpow.pop %v2608
        %v2610 = vmul.f32 %v2537, 1.442695
        %v2611 = vpow.pop %v2610
        %v2612 = vmul.f32 %v2538, 1.442695
        %v2613 = vpow.pop %v2612
        %v2614 = vmul.f32 %v2539, 1.442695
        %v2615 = vpow.pop %v2614
        %v2616 = vmul.f32 %v2540, 1.442695
        %v2617 = vpow.pop %v2616
        %v2618 = vmul.f32 %v2541, 1.442695
        %v2619 = vpow.pop %v2618
        %v2620 = vmul.f32 %v2542, 1.442695
        %v2621 = vpow.pop %v2620
        %v2622 = vmul.f32 %v2543, 1.442695
        %v2623 = vpow.pop %v2622
        %v2624 = vmul.f32 %v2544, 1.442695
        %v2625 = vpow.pop %v2624
        %v2626 = vmul.f32 %v2545, 1.442695
        %v2627 = vpow.pop %v2626
        %v2628 = vmul.f32 %v2546, 1.442695
        %v2629 = vpow.pop %v2628
        %v2630 = vmul.f32 %v2547, 1.442695
        %v2631 = vpow.pop %v2630
        %v2632 = vmul.f32 %v2548, 1.442695
        %v2633 = vpow.pop %v2632
        %v2634 = vmul.f32 %v2549, 1.442695
        %v2635 = vpow.pop %v2634
        %v2636 = vmul.f32 %v2550, 1.442695
        %v2637 = vpow.pop %v2636
        %v2638 = vmul.f32 %v2551, 1.442695
        %v2639 = vpow.pop %v2638
        %v2640 = vmul.f32 %v2552, 1.442695
        %v2641 = vpow.pop %v2640
        %v2642 = vmul.f32 %v2553, 1.442695
        %v2643 = vpow.pop %v2642
        %v2644 = vmul.f32 %v2554, 1.442695
        %v2645 = vpow.pop %v2644
        %v2646 = vmul.f32 %v2555, 1.442695
        %v2647 = vpow.pop %v2646
        %v2648 = vmul.f32 %v2556, 1.442695
        %v2649 = vpow.pop %v2648
        %v2650 = vmul.f32 %v2557, 1.442695
        %v2651 = vpow.pop %v2650
        %v2652 = vmul.f32 %v2558, 1.442695
        %v2653 = vpow.pop %v2652
        %v2654 = vmul.f32 %v2559, 1.442695
        %v2655 = vpow.pop %v2654
        %v2656 = vmul.f32 %v2560, 1.442695
        %v2657 = vpow.pop %v2656
        %v2658 = vmul.f32 %v2561, 1.442695
        %v2659 = vpow.pop %v2658
        %v2660 = vmul.f32 %v2562, 1.442695
        %v2661 = vpow.pop %v2660
        %v2662 = vmul.f32 %v2563, 1.442695
        %v2663 = vpow.pop %v2662
        %v2664 = vmul.f32 %v2564, 1.442695
        %v2665 = vpow.pop %v2664
        %v2666 = vmul.f32 %v2565, 1.442695
        %v2667 = vpow.pop %v2666
        %v2668 = vmul.f32 %v2566, 1.442695
        %v2669 = vpow.pop %v2668
        %v2670 = vmul.f32 %v2567, 1.442695
        %v2671 = vpow.pop %v2670
        %v2672 = vmul.f32 %v2568, 1.442695
        %v2673 = vpow.pop %v2672
        %v2674 = vmul.f32 %v2569, 1.442695
        %v2675 = vpow.pop %v2674
        %v2676 = vmul.f32 %v2570, 1.442695
        %v2677 = vpow.pop %v2676
        %v2678 = vmul.f32 %v2571, 1.442695
        %v2679 = vpow.pop %v2678
        %v2680 = vmul.f32 %v2572, 1.442695
        %v2681 = vpow.pop %v2680
        %v2682 = vmul.f32 %v2573, 1.442695
        %v2683 = vpow.pop %v2682
        %v2684 = vmul.f32 %v2574, 1.442695
        %v2685 = vpow.pop %v2684
        %v2686 = vmul.f32 %v2575, 1.442695
        %v2687 = vpow.pop %v2686
        %v2688 = vmul.f32 %v2576, 1.442695
        %v2689 = vpow.pop %v2688
        %v2690 = vmul.f32 %v2577, 1.442695
        %v2691 = vpow.pop %v2690
        %v2692 = vmul.f32 %v2578, 1.442695
        %v2693 = vpow.pop %v2692
        %v2694 = vmul.f32 %v2579, 1.442695
        %v2695 = vpow.pop %v2694
        %v2696 = vmul.f32 %v2580, 1.442695
        %v2697 = vpow.pop %v2696
        %v2698 = vmul.f32 %v2581, 1.442695
        %v2699 = vpow.pop %v2698
        %v2700 = vmul.f32 %v2582, 1.442695
        %v2701 = vpow.pop %v2700
        %v2702 = vmul.f32 %v2583, 1.442695
        %v2703 = vpow.pop %v2702
        %v2704 = vmul.f32 %v2584, 1.442695
        %v2705 = vpow.pop %v2704
        %v2706 = vmul.f32 %v2585, 1.442695
        %v2707 = vpow.pop %v2706
        %v2708 = vmul.f32 %v2586, 1.442695
        %v2709 = vpow.pop %v2708
        %v2710 = vmul.f32 %v2587, 1.442695
        %v2711 = vpow.pop %v2710
        %v2712 = vmul.f32 %v2588, 1.442695
        %v2713 = vpow.pop %v2712
        %v2714 = vmul.f32 %v2589, 1.442695
        %v2715 = vpow.pop %v2714
        %v2716 = vmul.f32 %v2590, 1.442695
        %v2717 = vpow.pop %v2716
        %v2718 = vmul.f32 %v2591, 1.442695
        %v2719 = vpow.pop %v2718
        %v2720 = vmul.f32 %v2592, 1.442695
        %v2721 = vpow.pop %v2720
        %v2722 = vmul.f32 %v2593, 1.442695
        %v2723 = vpow.pop %v2722
        %v2724 = vmul.f32 %v2594, 1.442695
        %v2725 = vpow.pop %v2724
        %v2726 = vmul.f32 %v2595, 1.442695
        %v2727 = vpow.pop %v2726
        %v2728 = vmul.f32 %v2596, 1.442695
        %v2729 = vpow.pop %v2728
        %v2730 = vmul.f32 %v2597, 1.442695
        %v2731 = vpow.pop %v2730
        %v2732 = vmul.f32 %v2598, 1.442695
        %v2733 = vpow.pop %v2732
        %v2734 = vmul.f32 %v2599, 1.442695
        %v2735 = vpow.pop %v2734
        %v2736 = vmul.f32 %v2600, 1.442695
        %v2737 = vpow.pop %v2736
        %v2738 = vmul.f32 %v2601, 1.442695
        %v2739 = vpow.pop %v2738
        %v2740 = vmul.f32 %v2602, 1.442695
        %v2741 = vpow.pop %v2740
        %v2742 = vmul.f32 %v2603, 1.442695
        %v2743 = vpow.pop %v2742
        %v2744 = vmul.f32 %v2604, 1.442695
        %v2745 = vpow.pop %v2744
        %v2746 = vmul.f32 %v2605, 1.442695
        %v2747 = vpow.pop %v2746
        %v2748 = vmul.f32 %v2606, 1.442695
        %v2749 = vpow.pop %v2748
        %v2750 = vmul.f32 %v2607, 1.442695
        %v2751 = vpow.pop %v2750
        %v2752 = vsel %vm2319, %v2609, 0.0
        %2753 = vadd.xlane.f32.xlu0 %v2752
        %v2754 = vpop.xlane.xlu0 %2753
        %v2755 = vsel %vm2319, %v2611, 0.0
        %2756 = vadd.xlane.f32.xlu0 %v2755
        %v2757 = vpop.xlane.xlu0 %2756
        %v2758 = vsel %vm2319, %v2613, 0.0
        %2759 = vadd.xlane.f32.xlu0 %v2758
        %v2760 = vpop.xlane.xlu0 %2759
        %v2761 = vsel %vm2319, %v2615, 0.0
        %2762 = vadd.xlane.f32.xlu0 %v2761
        %v2763 = vpop.xlane.xlu0 %2762
        %v2764 = vsel %vm2319, %v2617, 0.0
        %2765 = vadd.xlane.f32.xlu0 %v2764
        %v2766 = vpop.xlane.xlu0 %2765
        %v2767 = vsel %vm2319, %v2619, 0.0
        %2768 = vadd.xlane.f32.xlu0 %v2767
        %v2769 = vpop.xlane.xlu0 %2768
        %v2770 = vsel %vm2319, %v2621, 0.0
        %2771 = vadd.xlane.f32.xlu0 %v2770
        %v2772 = vpop.xlane.xlu0 %2771
        %v2773 = vsel %vm2319, %v2623, 0.0
        %2774 = vadd.xlane.f32.xlu0 %v2773
        %v2775 = vpop.xlane.xlu0 %2774
        %v2776 = vsel %vm2319, %v2625, 0.0
        %2777 = vadd.xlane.f32.xlu0 %v2776
        %v2778 = vpop.xlane.xlu0 %2777
        %v2779 = vsel %vm2319, %v2627, 0.0
        %2780 = vadd.xlane.f32.xlu0 %v2779
        %v2781 = vpop.xlane.xlu0 %2780
        %v2782 = vsel %vm2319, %v2629, 0.0
        %2783 = vadd.xlane.f32.xlu0 %v2782
        %v2784 = vpop.xlane.xlu0 %2783
        %v2785 = vsel %vm2319, %v2631, 0.0
        %2786 = vadd.xlane.f32.xlu0 %v2785
        %v2787 = vpop.xlane.xlu0 %2786
        %v2788 = vsel %vm2319, %v2633, 0.0
        %2789 = vadd.xlane.f32.xlu0 %v2788
        %v2790 = vpop.xlane.xlu0 %2789
        %v2791 = vsel %vm2319, %v2635, 0.0
        %2792 = vadd.xlane.f32.xlu0 %v2791
        %v2793 = vpop.xlane.xlu0 %2792
        %v2794 = vsel %vm2319, %v2637, 0.0
        %2795 = vadd.xlane.f32.xlu0 %v2794
        %v2796 = vpop.xlane.xlu0 %2795
        %v2797 = vsel %vm2319, %v2639, 0.0
        %2798 = vadd.xlane.f32.xlu0 %v2797
        %v2799 = vpop.xlane.xlu0 %2798
        %v2800 = vsel %vm2319, %v2641, 0.0
        %2801 = vadd.xlane.f32.xlu0 %v2800
        %v2802 = vpop.xlane.xlu0 %2801
        %v2803 = vsel %vm2319, %v2643, 0.0
        %2804 = vadd.xlane.f32.xlu0 %v2803
        %v2805 = vpop.xlane.xlu0 %2804
        %v2806 = vsel %vm2319, %v2645, 0.0
        %2807 = vadd.xlane.f32.xlu0 %v2806
        %v2808 = vpop.xlane.xlu0 %2807
        %v2809 = vsel %vm2319, %v2647, 0.0
        %2810 = vadd.xlane.f32.xlu0 %v2809
        %v2811 = vpop.xlane.xlu0 %2810
        %v2812 = vsel %vm2319, %v2649, 0.0
        %2813 = vadd.xlane.f32.xlu0 %v2812
        %v2814 = vpop.xlane.xlu0 %2813
        %v2815 = vsel %vm2319, %v2651, 0.0
        %2816 = vadd.xlane.f32.xlu0 %v2815
        %v2817 = vpop.xlane.xlu0 %2816
        %v2818 = vsel %vm2319, %v2653, 0.0
        %2819 = vadd.xlane.f32.xlu0 %v2818
        %v2820 = vpop.xlane.xlu0 %2819
        %v2821 = vsel %vm2319, %v2655, 0.0
        %2822 = vadd.xlane.f32.xlu0 %v2821
        %v2823 = vpop.xlane.xlu0 %2822
        %v2824 = vsel %vm2319, %v2657, 0.0
        %2825 = vadd.xlane.f32.xlu0 %v2824
        %v2826 = vpop.xlane.xlu0 %2825
        %v2827 = vsel %vm2319, %v2659, 0.0
        %2828 = vadd.xlane.f32.xlu0 %v2827
        %v2829 = vpop.xlane.xlu0 %2828
        %v2830 = vsel %vm2319, %v2661, 0.0
        %2831 = vadd.xlane.f32.xlu0 %v2830
        %v2832 = vpop.xlane.xlu0 %2831
        %v2833 = vsel %vm2319, %v2663, 0.0
        %2834 = vadd.xlane.f32.xlu0 %v2833
        %v2835 = vpop.xlane.xlu0 %2834
        %v2836 = vsel %vm2319, %v2665, 0.0
        %2837 = vadd.xlane.f32.xlu0 %v2836
        %v2838 = vpop.xlane.xlu0 %2837
        %v2839 = vsel %vm2319, %v2667, 0.0
        %2840 = vadd.xlane.f32.xlu0 %v2839
        %v2841 = vpop.xlane.xlu0 %2840
        %v2842 = vsel %vm2319, %v2669, 0.0
        %2843 = vadd.xlane.f32.xlu0 %v2842
        %v2844 = vpop.xlane.xlu0 %2843
        %v2845 = vsel %vm2319, %v2671, 0.0
        %2846 = vadd.xlane.f32.xlu0 %v2845
        %v2847 = vpop.xlane.xlu0 %2846
        %v2848 = vsel %vm2319, %v2673, 0.0
        %2849 = vadd.xlane.f32.xlu0 %v2848
        %v2850 = vpop.xlane.xlu0 %2849
        %v2851 = vsel %vm2319, %v2675, 0.0
        %2852 = vadd.xlane.f32.xlu0 %v2851
        %v2853 = vpop.xlane.xlu0 %2852
        %v2854 = vsel %vm2319, %v2677, 0.0
        %2855 = vadd.xlane.f32.xlu0 %v2854
        %v2856 = vpop.xlane.xlu0 %2855
        %v2857 = vsel %vm2319, %v2679, 0.0
        %2858 = vadd.xlane.f32.xlu0 %v2857
        %v2859 = vpop.xlane.xlu0 %2858
        %v2860 = vsel %vm2319, %v2681, 0.0
        %2861 = vadd.xlane.f32.xlu0 %v2860
        %v2862 = vpop.xlane.xlu0 %2861
        %v2863 = vsel %vm2319, %v2683, 0.0
        %2864 = vadd.xlane.f32.xlu0 %v2863
        %v2865 = vpop.xlane.xlu0 %2864
        %v2866 = vsel %vm2319, %v2685, 0.0
        %2867 = vadd.xlane.f32.xlu0 %v2866
        %v2868 = vpop.xlane.xlu0 %2867
        %v2869 = vsel %vm2319, %v2687, 0.0
        %2870 = vadd.xlane.f32.xlu0 %v2869
        %v2871 = vpop.xlane.xlu0 %2870
        %v2872 = vsel %vm2319, %v2689, 0.0
        %2873 = vadd.xlane.f32.xlu0 %v2872
        %v2874 = vpop.xlane.xlu0 %2873
        %v2875 = vsel %vm2319, %v2691, 0.0
        %2876 = vadd.xlane.f32.xlu0 %v2875
        %v2877 = vpop.xlane.xlu0 %2876
        %v2878 = vsel %vm2319, %v2693, 0.0
        %2879 = vadd.xlane.f32.xlu0 %v2878
        %v2880 = vpop.xlane.xlu0 %2879
        %v2881 = vsel %vm2319, %v2695, 0.0
        %2882 = vadd.xlane.f32.xlu0 %v2881
        %v2883 = vpop.xlane.xlu0 %2882
        %v2884 = vsel %vm2319, %v2697, 0.0
        %2885 = vadd.xlane.f32.xlu0 %v2884
        %v2886 = vpop.xlane.xlu0 %2885
        %v2887 = vsel %vm2319, %v2699, 0.0
        %2888 = vadd.xlane.f32.xlu0 %v2887
        %v2889 = vpop.xlane.xlu0 %2888
        %v2890 = vsel %vm2319, %v2701, 0.0
        %2891 = vadd.xlane.f32.xlu0 %v2890
        %v2892 = vpop.xlane.xlu0 %2891
        %v2893 = vsel %vm2319, %v2703, 0.0
        %2894 = vadd.xlane.f32.xlu0 %v2893
        %v2895 = vpop.xlane.xlu0 %2894
        %v2896 = vsel %vm2319, %v2705, 0.0
        %2897 = vadd.xlane.f32.xlu0 %v2896
        %v2898 = vpop.xlane.xlu0 %2897
        %v2899 = vsel %vm2319, %v2707, 0.0
        %2900 = vadd.xlane.f32.xlu0 %v2899
        %v2901 = vpop.xlane.xlu0 %2900
        %v2902 = vsel %vm2319, %v2709, 0.0
        %2903 = vadd.xlane.f32.xlu0 %v2902
        %v2904 = vpop.xlane.xlu0 %2903
        %v2905 = vsel %vm2319, %v2711, 0.0
        %2906 = vadd.xlane.f32.xlu0 %v2905
        %v2907 = vpop.xlane.xlu0 %2906
        %v2908 = vsel %vm2319, %v2713, 0.0
        %2909 = vadd.xlane.f32.xlu0 %v2908
        %v2910 = vpop.xlane.xlu0 %2909
        %v2911 = vsel %vm2319, %v2715, 0.0
        %2912 = vadd.xlane.f32.xlu0 %v2911
        %v2913 = vpop.xlane.xlu0 %2912
        %v2914 = vsel %vm2319, %v2717, 0.0
        %2915 = vadd.xlane.f32.xlu0 %v2914
        %v2916 = vpop.xlane.xlu0 %2915
        %v2917 = vsel %vm2319, %v2719, 0.0
        %2918 = vadd.xlane.f32.xlu0 %v2917
        %v2919 = vpop.xlane.xlu0 %2918
        %v2920 = vsel %vm2319, %v2721, 0.0
        %2921 = vadd.xlane.f32.xlu0 %v2920
        %v2922 = vpop.xlane.xlu0 %2921
        %v2923 = vsel %vm2319, %v2723, 0.0
        %2924 = vadd.xlane.f32.xlu0 %v2923
        %v2925 = vpop.xlane.xlu0 %2924
        %v2926 = vsel %vm2319, %v2725, 0.0
        %2927 = vadd.xlane.f32.xlu0 %v2926
        %v2928 = vpop.xlane.xlu0 %2927
        %v2929 = vsel %vm2319, %v2727, 0.0
        %2930 = vadd.xlane.f32.xlu0 %v2929
        %v2931 = vpop.xlane.xlu0 %2930
        %v2932 = vsel %vm2319, %v2729, 0.0
        %2933 = vadd.xlane.f32.xlu0 %v2932
        %v2934 = vpop.xlane.xlu0 %2933
        %v2935 = vsel %vm2319, %v2731, 0.0
        %2936 = vadd.xlane.f32.xlu0 %v2935
        %v2937 = vpop.xlane.xlu0 %2936
        %v2938 = vsel %vm2319, %v2733, 0.0
        %2939 = vadd.xlane.f32.xlu0 %v2938
        %v2940 = vpop.xlane.xlu0 %2939
        %v2941 = vsel %vm2319, %v2735, 0.0
        %2942 = vadd.xlane.f32.xlu0 %v2941
        %v2943 = vpop.xlane.xlu0 %2942
        %v2944 = vsel %vm2319, %v2737, 0.0
        %2945 = vadd.xlane.f32.xlu0 %v2944
        %v2946 = vpop.xlane.xlu0 %2945
        %v2947 = vsel %vm2319, %v2739, 0.0
        %2948 = vadd.xlane.f32.xlu0 %v2947
        %v2949 = vpop.xlane.xlu0 %2948
        %v2950 = vsel %vm2319, %v2741, 0.0
        %2951 = vadd.xlane.f32.xlu0 %v2950
        %v2952 = vpop.xlane.xlu0 %2951
        %v2953 = vsel %vm2319, %v2743, 0.0
        %2954 = vadd.xlane.f32.xlu0 %v2953
        %v2955 = vpop.xlane.xlu0 %2954
        %v2956 = vsel %vm2319, %v2745, 0.0
        %2957 = vadd.xlane.f32.xlu0 %v2956
        %v2958 = vpop.xlane.xlu0 %2957
        %v2959 = vsel %vm2319, %v2747, 0.0
        %2960 = vadd.xlane.f32.xlu0 %v2959
        %v2961 = vpop.xlane.xlu0 %2960
        %v2962 = vsel %vm2319, %v2749, 0.0
        %2963 = vadd.xlane.f32.xlu0 %v2962
        %v2964 = vpop.xlane.xlu0 %2963
        %v2965 = vsel %vm2319, %v2751, 0.0
        %2966 = vadd.xlane.f32.xlu0 %v2965
        %v2967 = vpop.xlane.xlu0 %2966
        %v2968 = vrcp.pop %v2754
        %v2969 = vrcp.pop %v2757
        %v2970 = vrcp.pop %v2760
        %v2971 = vrcp.pop %v2763
        %v2972 = vrcp.pop %v2766
        %v2973 = vrcp.pop %v2769
        %v2974 = vrcp.pop %v2772
        %v2975 = vrcp.pop %v2775
        %v2976 = vrcp.pop %v2778
        %v2977 = vrcp.pop %v2781
        %v2978 = vrcp.pop %v2784
        %v2979 = vrcp.pop %v2787
        %v2980 = vrcp.pop %v2790
        %v2981 = vrcp.pop %v2793
        %v2982 = vrcp.pop %v2796
        %v2983 = vrcp.pop %v2799
        %v2984 = vrcp.pop %v2802
        %v2985 = vrcp.pop %v2805
        %v2986 = vrcp.pop %v2808
        %v2987 = vrcp.pop %v2811
        %v2988 = vrcp.pop %v2814
        %v2989 = vrcp.pop %v2817
        %v2990 = vrcp.pop %v2820
        %v2991 = vrcp.pop %v2823
        %v2992 = vrcp.pop %v2826
        %v2993 = vrcp.pop %v2829
        %v2994 = vrcp.pop %v2832
        %v2995 = vrcp.pop %v2835
        %v2996 = vrcp.pop %v2838
        %v2997 = vrcp.pop %v2841
        %v2998 = vrcp.pop %v2844
        %v2999 = vrcp.pop %v2847
        %v3000 = vrcp.pop %v2850
        %v3001 = vrcp.pop %v2853
        %v3002 = vrcp.pop %v2856
        %v3003 = vrcp.pop %v2859
        %v3004 = vrcp.pop %v2862
        %v3005 = vrcp.pop %v2865
        %v3006 = vrcp.pop %v2868
        %v3007 = vrcp.pop %v2871
        %v3008 = vrcp.pop %v2874
        %v3009 = vrcp.pop %v2877
        %v3010 = vrcp.pop %v2880
        %v3011 = vrcp.pop %v2883
        %v3012 = vrcp.pop %v2886
        %v3013 = vrcp.pop %v2889
        %v3014 = vrcp.pop %v2892
        %v3015 = vrcp.pop %v2895
        %v3016 = vrcp.pop %v2898
        %v3017 = vrcp.pop %v2901
        %v3018 = vrcp.pop %v2904
        %v3019 = vrcp.pop %v2907
        %v3020 = vrcp.pop %v2910
        %v3021 = vrcp.pop %v2913
        %v3022 = vrcp.pop %v2916
        %v3023 = vrcp.pop %v2919
        %v3024 = vrcp.pop %v2922
        %v3025 = vrcp.pop %v2925
        %v3026 = vrcp.pop %v2928
        %v3027 = vrcp.pop %v2931
        %v3028 = vrcp.pop %v2934
        %v3029 = vrcp.pop %v2937
        %v3030 = vrcp.pop %v2940
        %v3031 = vrcp.pop %v2943
        %v3032 = vrcp.pop %v2946
        %v3033 = vrcp.pop %v2949
        %v3034 = vrcp.pop %v2952
        %v3035 = vrcp.pop %v2955
        %v3036 = vrcp.pop %v2958
        %v3037 = vrcp.pop %v2961
        %v3038 = vrcp.pop %v2964
        %v3039 = vrcp.pop %v2967
        %v3040 = vmul.f32 %v2609, %v2968
        %v3041 = vmul.f32 %v2611, %v2969
        %v3042 = vmul.f32 %v2613, %v2970
        %v3043 = vmul.f32 %v2615, %v2971
        %v3044 = vmul.f32 %v2617, %v2972
        %v3045 = vmul.f32 %v2619, %v2973
        %v3046 = vmul.f32 %v2621, %v2974
        %v3047 = vmul.f32 %v2623, %v2975
        %v3048 = vmul.f32 %v2625, %v2976
        %v3049 = vmul.f32 %v2627, %v2977
        %v3050 = vmul.f32 %v2629, %v2978
        %v3051 = vmul.f32 %v2631, %v2979
        %v3052 = vmul.f32 %v2633, %v2980
        %v3053 = vmul.f32 %v2635, %v2981
        %v3054 = vmul.f32 %v2637, %v2982
        %v3055 = vmul.f32 %v2639, %v2983
        %v3056 = vmul.f32 %v2641, %v2984
        %v3057 = vmul.f32 %v2643, %v2985
        %v3058 = vmul.f32 %v2645, %v2986
        %v3059 = vmul.f32 %v2647, %v2987
        %v3060 = vmul.f32 %v2649, %v2988
        %v3061 = vmul.f32 %v2651, %v2989
        %v3062 = vmul.f32 %v2653, %v2990
        %v3063 = vmul.f32 %v2655, %v2991
        %v3064 = vmul.f32 %v2657, %v2992
        %v3065 = vmul.f32 %v2659, %v2993
        %v3066 = vmul.f32 %v2661, %v2994
        %v3067 = vmul.f32 %v2663, %v2995
        %v3068 = vmul.f32 %v2665, %v2996
        %v3069 = vmul.f32 %v2667, %v2997
        %v3070 = vmul.f32 %v2669, %v2998
        %v3071 = vmul.f32 %v2671, %v2999
        %v3072 = vmul.f32 %v2673, %v3000
        %v3073 = vmul.f32 %v2675, %v3001
        %v3074 = vmul.f32 %v2677, %v3002
        %v3075 = vmul.f32 %v2679, %v3003
        %v3076 = vmul.f32 %v2681, %v3004
        %v3077 = vmul.f32 %v2683, %v3005
        %v3078 = vmul.f32 %v2685, %v3006
        %v3079 = vmul.f32 %v2687, %v3007
        %v3080 = vmul.f32 %v2689, %v3008
        %v3081 = vmul.f32 %v2691, %v3009
        %v3082 = vmul.f32 %v2693, %v3010
        %v3083 = vmul.f32 %v2695, %v3011
        %v3084 = vmul.f32 %v2697, %v3012
        %v3085 = vmul.f32 %v2699, %v3013
        %v3086 = vmul.f32 %v2701, %v3014
        %v3087 = vmul.f32 %v2703, %v3015
        %v3088 = vmul.f32 %v2705, %v3016
        %v3089 = vmul.f32 %v2707, %v3017
        %v3090 = vmul.f32 %v2709, %v3018
        %v3091 = vmul.f32 %v2711, %v3019
        %v3092 = vmul.f32 %v2713, %v3020
        %v3093 = vmul.f32 %v2715, %v3021
        %v3094 = vmul.f32 %v2717, %v3022
        %v3095 = vmul.f32 %v2719, %v3023
        %v3096 = vmul.f32 %v2721, %v3024
        %v3097 = vmul.f32 %v2723, %v3025
        %v3098 = vmul.f32 %v2725, %v3026
        %v3099 = vmul.f32 %v2727, %v3027
        %v3100 = vmul.f32 %v2729, %v3028
        %v3101 = vmul.f32 %v2731, %v3029
        %v3102 = vmul.f32 %v2733, %v3030
        %v3103 = vmul.f32 %v2735, %v3031
        %v3104 = vmul.f32 %v2737, %v3032
        %v3105 = vmul.f32 %v2739, %v3033
        %v3106 = vmul.f32 %v2741, %v3034
        %v3107 = vmul.f32 %v2743, %v3035
        %v3108 = vmul.f32 %v2745, %v3036
        %v3109 = vmul.f32 %v2747, %v3037
        %v3110 = vmul.f32 %v2749, %v3038
        %v3111 = vmul.f32 %v2751, %v3039
        %v3113 = vsel %vm2319, %v3040, 0
        %v3116 = vsel %vm2319, %v3041, 0
        %3118 = vmatpush.msra.mxu0 0.0
        %3119 = vmatpush.msra.mxu0 0.0
        %3120 = vmatpush.msra.mxu0 0.0
        %3121 = vmatpush.msra.mxu0 0.0
        %3122 = vmatpush.msra.mxu0 0.0
        %3123 = vmatpush.msra.mxu0 0.0
        %3124 = vmatpush.msra.mxu0 0.0
        %3125 = vmatpush.msra.mxu0 0.0
        %3126 = vmatpush.msra.mxu0 0.0
        %3127 = vmatpush.msra.mxu0 0.0
        %3128 = vmatpush.msra.mxu0 0.0
        %3129 = vmatpush.msra.mxu0 0.0
        %3130 = vmatpush.msra.mxu0 0.0
        %3131 = vmatpush.msra.mxu0 0.0
        %3132 = vmatpush.msra.mxu0 %v576
        %3133 = vmatpush.msra.mxu0 %v573
        %3134 = vmatmul.f32.gmra.mxu0 %v3113
        %v3135 = vpop.f32.mrf.mxu0
        %v3136 = vadd.f32 0.0, %v3135
        %3137 = vmatmul.f32.gmra.mxu0 %v3116
        %v3138 = vpop.f32.mrf.mxu0
        %v3139 = vadd.f32 0.0, %v3138
        %3140 = vdwg.mxu0
        %v3142 = vsel %vm2319, %v3042, 0
        %v3145 = vsel %vm2319, %v3043, 0
        %3147 = vmatpush.msra.mxu0 0.0
        %3148 = vmatpush.msra.mxu0 0.0
        %3149 = vmatpush.msra.mxu0 0.0
        %3150 = vmatpush.msra.mxu0 0.0
        %3151 = vmatpush.msra.mxu0 0.0
        %3152 = vmatpush.msra.mxu0 0.0
        %3153 = vmatpush.msra.mxu0 0.0
        %3154 = vmatpush.msra.mxu0 0.0
        %3155 = vmatpush.msra.mxu0 0.0
        %3156 = vmatpush.msra.mxu0 0.0
        %3157 = vmatpush.msra.mxu0 0.0
        %3158 = vmatpush.msra.mxu0 0.0
        %3159 = vmatpush.msra.mxu0 0.0
        %3160 = vmatpush.msra.mxu0 0.0
        %3161 = vmatpush.msra.mxu0 %v582
        %3162 = vmatpush.msra.mxu0 %v579
        %3163 = vmatmul.f32.gmra.mxu0 %v3142
        %v3164 = vpop.f32.mrf.mxu0
        %v3165 = vadd.f32 0.0, %v3164
        %3166 = vmatmul.f32.gmra.mxu0 %v3145
        %v3167 = vpop.f32.mrf.mxu0
        %v3168 = vadd.f32 0.0, %v3167
        %3169 = vdwg.mxu0
        %v3171 = vsel %vm2319, %v3044, 0
        %v3174 = vsel %vm2319, %v3045, 0
        %3176 = vmatpush.msra.mxu0 0.0
        %3177 = vmatpush.msra.mxu0 0.0
        %3178 = vmatpush.msra.mxu0 0.0
        %3179 = vmatpush.msra.mxu0 0.0
        %3180 = vmatpush.msra.mxu0 0.0
        %3181 = vmatpush.msra.mxu0 0.0
        %3182 = vmatpush.msra.mxu0 0.0
        %3183 = vmatpush.msra.mxu0 0.0
        %3184 = vmatpush.msra.mxu0 0.0
        %3185 = vmatpush.msra.mxu0 0.0
        %3186 = vmatpush.msra.mxu0 0.0
        %3187 = vmatpush.msra.mxu0 0.0
        %3188 = vmatpush.msra.mxu0 0.0
        %3189 = vmatpush.msra.mxu0 0.0
        %3190 = vmatpush.msra.mxu0 %v588
        %3191 = vmatpush.msra.mxu0 %v585
        %3192 = vmatmul.f32.gmra.mxu0 %v3171
        %v3193 = vpop.f32.mrf.mxu0
        %v3194 = vadd.f32 0.0, %v3193
        %3195 = vmatmul.f32.gmra.mxu0 %v3174
        %v3196 = vpop.f32.mrf.mxu0
        %v3197 = vadd.f32 0.0, %v3196
        %3198 = vdwg.mxu0
        %v3200 = vsel %vm2319, %v3046, 0
        %v3203 = vsel %vm2319, %v3047, 0
        %3205 = vmatpush.msra.mxu0 0.0
        %3206 = vmatpush.msra.mxu0 0.0
        %3207 = vmatpush.msra.mxu0 0.0
        %3208 = vmatpush.msra.mxu0 0.0
        %3209 = vmatpush.msra.mxu0 0.0
        %3210 = vmatpush.msra.mxu0 0.0
        %3211 = vmatpush.msra.mxu0 0.0
        %3212 = vmatpush.msra.mxu0 0.0
        %3213 = vmatpush.msra.mxu0 0.0
        %3214 = vmatpush.msra.mxu0 0.0
        %3215 = vmatpush.msra.mxu0 0.0
        %3216 = vmatpush.msra.mxu0 0.0
        %3217 = vmatpush.msra.mxu0 0.0
        %3218 = vmatpush.msra.mxu0 0.0
        %3219 = vmatpush.msra.mxu0 %v594
        %3220 = vmatpush.msra.mxu0 %v591
        %3221 = vmatmul.f32.gmra.mxu0 %v3200
        %v3222 = vpop.f32.mrf.mxu0
        %v3223 = vadd.f32 0.0, %v3222
        %3224 = vmatmul.f32.gmra.mxu0 %v3203
        %v3225 = vpop.f32.mrf.mxu0
        %v3226 = vadd.f32 0.0, %v3225
        %3227 = vdwg.mxu0
        %v3229 = vsel %vm2319, %v3048, 0
        %v3232 = vsel %vm2319, %v3049, 0
        %3234 = vmatpush.msra.mxu0 0.0
        %3235 = vmatpush.msra.mxu0 0.0
        %3236 = vmatpush.msra.mxu0 0.0
        %3237 = vmatpush.msra.mxu0 0.0
        %3238 = vmatpush.msra.mxu0 0.0
        %3239 = vmatpush.msra.mxu0 0.0
        %3240 = vmatpush.msra.mxu0 0.0
        %3241 = vmatpush.msra.mxu0 0.0
        %3242 = vmatpush.msra.mxu0 0.0
        %3243 = vmatpush.msra.mxu0 0.0
        %3244 = vmatpush.msra.mxu0 0.0
        %3245 = vmatpush.msra.mxu0 0.0
        %3246 = vmatpush.msra.mxu0 0.0
        %3247 = vmatpush.msra.mxu0 0.0
        %3248 = vmatpush.msra.mxu0 %v600
        %3249 = vmatpush.msra.mxu0 %v597
        %3250 = vmatmul.f32.gmra.mxu0 %v3229
        %v3251 = vpop.f32.mrf.mxu0
        %v3252 = vadd.f32 0.0, %v3251
        %3253 = vmatmul.f32.gmra.mxu0 %v3232
        %v3254 = vpop.f32.mrf.mxu0
        %v3255 = vadd.f32 0.0, %v3254
        %3256 = vdwg.mxu0
        %v3258 = vsel %vm2319, %v3050, 0
        %v3261 = vsel %vm2319, %v3051, 0
        %3263 = vmatpush.msra.mxu0 0.0
        %3264 = vmatpush.msra.mxu0 0.0
        %3265 = vmatpush.msra.mxu0 0.0
        %3266 = vmatpush.msra.mxu0 0.0
        %3267 = vmatpush.msra.mxu0 0.0
        %3268 = vmatpush.msra.mxu0 0.0
        %3269 = vmatpush.msra.mxu0 0.0
        %3270 = vmatpush.msra.mxu0 0.0
        %3271 = vmatpush.msra.mxu0 0.0
        %3272 = vmatpush.msra.mxu0 0.0
        %3273 = vmatpush.msra.mxu0 0.0
        %3274 = vmatpush.msra.mxu0 0.0
        %3275 = vmatpush.msra.mxu0 0.0
        %3276 = vmatpush.msra.mxu0 0.0
        %3277 = vmatpush.msra.mxu0 %v606
        %3278 = vmatpush.msra.mxu0 %v603
        %3279 = vmatmul.f32.gmra.mxu0 %v3258
        %v3280 = vpop.f32.mrf.mxu0
        %v3281 = vadd.f32 0.0, %v3280
        %3282 = vmatmul.f32.gmra.mxu0 %v3261
        %v3283 = vpop.f32.mrf.mxu0
        %v3284 = vadd.f32 0.0, %v3283
        %3285 = vdwg.mxu0
        %v3287 = vsel %vm2319, %v3052, 0
        %v3290 = vsel %vm2319, %v3053, 0
        %3292 = vmatpush.msra.mxu0 0.0
        %3293 = vmatpush.msra.mxu0 0.0
        %3294 = vmatpush.msra.mxu0 0.0
        %3295 = vmatpush.msra.mxu0 0.0
        %3296 = vmatpush.msra.mxu0 0.0
        %3297 = vmatpush.msra.mxu0 0.0
        %3298 = vmatpush.msra.mxu0 0.0
        %3299 = vmatpush.msra.mxu0 0.0
        %3300 = vmatpush.msra.mxu0 0.0
        %3301 = vmatpush.msra.mxu0 0.0
        %3302 = vmatpush.msra.mxu0 0.0
        %3303 = vmatpush.msra.mxu0 0.0
        %3304 = vmatpush.msra.mxu0 0.0
        %3305 = vmatpush.msra.mxu0 0.0
        %3306 = vmatpush.msra.mxu0 %v612
        %3307 = vmatpush.msra.mxu0 %v609
        %3308 = vmatmul.f32.gmra.mxu0 %v3287
        %v3309 = vpop.f32.mrf.mxu0
        %v3310 = vadd.f32 0.0, %v3309
        %3311 = vmatmul.f32.gmra.mxu0 %v3290
        %v3312 = vpop.f32.mrf.mxu0
        %v3313 = vadd.f32 0.0, %v3312
        %3314 = vdwg.mxu0
        %v3316 = vsel %vm2319, %v3054, 0
        %v3319 = vsel %vm2319, %v3055, 0
        %3321 = vmatpush.msra.mxu0 0.0
        %3322 = vmatpush.msra.mxu0 0.0
        %3323 = vmatpush.msra.mxu0 0.0
        %3324 = vmatpush.msra.mxu0 0.0
        %3325 = vmatpush.msra.mxu0 0.0
        %3326 = vmatpush.msra.mxu0 0.0
        %3327 = vmatpush.msra.mxu0 0.0
        %3328 = vmatpush.msra.mxu0 0.0
        %3329 = vmatpush.msra.mxu0 0.0
        %3330 = vmatpush.msra.mxu0 0.0
        %3331 = vmatpush.msra.mxu0 0.0
        %3332 = vmatpush.msra.mxu0 0.0
        %3333 = vmatpush.msra.mxu0 0.0
        %3334 = vmatpush.msra.mxu0 0.0
        %3335 = vmatpush.msra.mxu0 %v618
        %3336 = vmatpush.msra.mxu0 %v615
        %3337 = vmatmul.f32.gmra.mxu0 %v3316
        %v3338 = vpop.f32.mrf.mxu0
        %v3339 = vadd.f32 0.0, %v3338
        %3340 = vmatmul.f32.gmra.mxu0 %v3319
        %v3341 = vpop.f32.mrf.mxu0
        %v3342 = vadd.f32 0.0, %v3341
        %3343 = vdwg.mxu0
        %v3345 = vsel %vm2319, %v3056, 0
        %v3348 = vsel %vm2319, %v3057, 0
        %3350 = vmatpush.msra.mxu0 0.0
        %3351 = vmatpush.msra.mxu0 0.0
        %3352 = vmatpush.msra.mxu0 0.0
        %3353 = vmatpush.msra.mxu0 0.0
        %3354 = vmatpush.msra.mxu0 0.0
        %3355 = vmatpush.msra.mxu0 0.0
        %3356 = vmatpush.msra.mxu0 0.0
        %3357 = vmatpush.msra.mxu0 0.0
        %3358 = vmatpush.msra.mxu0 0.0
        %3359 = vmatpush.msra.mxu0 0.0
        %3360 = vmatpush.msra.mxu0 0.0
        %3361 = vmatpush.msra.mxu0 0.0
        %3362 = vmatpush.msra.mxu0 0.0
        %3363 = vmatpush.msra.mxu0 0.0
        %3364 = vmatpush.msra.mxu0 %v624
        %3365 = vmatpush.msra.mxu0 %v621
        %3366 = vmatmul.f32.gmra.mxu0 %v3345
        %v3367 = vpop.f32.mrf.mxu0
        %v3368 = vadd.f32 0.0, %v3367
        %3369 = vmatmul.f32.gmra.mxu0 %v3348
        %v3370 = vpop.f32.mrf.mxu0
        %v3371 = vadd.f32 0.0, %v3370
        %3372 = vdwg.mxu0
        %v3374 = vsel %vm2319, %v3058, 0
        %v3377 = vsel %vm2319, %v3059, 0
        %3379 = vmatpush.msra.mxu0 0.0
        %3380 = vmatpush.msra.mxu0 0.0
        %3381 = vmatpush.msra.mxu0 0.0
        %3382 = vmatpush.msra.mxu0 0.0
        %3383 = vmatpush.msra.mxu0 0.0
        %3384 = vmatpush.msra.mxu0 0.0
        %3385 = vmatpush.msra.mxu0 0.0
        %3386 = vmatpush.msra.mxu0 0.0
        %3387 = vmatpush.msra.mxu0 0.0
        %3388 = vmatpush.msra.mxu0 0.0
        %3389 = vmatpush.msra.mxu0 0.0
        %3390 = vmatpush.msra.mxu0 0.0
        %3391 = vmatpush.msra.mxu0 0.0
        %3392 = vmatpush.msra.mxu0 0.0
        %3393 = vmatpush.msra.mxu0 %v899
        %3394 = vmatpush.msra.mxu0 %v897
        %3395 = vmatmul.f32.gmra.mxu0 %v3374
        %v3396 = vpop.f32.mrf.mxu0
        %v3397 = vadd.f32 0.0, %v3396
        %3398 = vmatmul.f32.gmra.mxu0 %v3377
        %v3399 = vpop.f32.mrf.mxu0
        %v3400 = vadd.f32 0.0, %v3399
        %3401 = vdwg.mxu0
        %v3403 = vsel %vm2319, %v3060, 0
        %v3406 = vsel %vm2319, %v3061, 0
        %3408 = vmatpush.msra.mxu0 0.0
        %3409 = vmatpush.msra.mxu0 0.0
        %3410 = vmatpush.msra.mxu0 0.0
        %3411 = vmatpush.msra.mxu0 0.0
        %3412 = vmatpush.msra.mxu0 0.0
        %3413 = vmatpush.msra.mxu0 0.0
        %3414 = vmatpush.msra.mxu0 0.0
        %3415 = vmatpush.msra.mxu0 0.0
        %3416 = vmatpush.msra.mxu0 0.0
        %3417 = vmatpush.msra.mxu0 0.0
        %3418 = vmatpush.msra.mxu0 0.0
        %3419 = vmatpush.msra.mxu0 0.0
        %3420 = vmatpush.msra.mxu0 0.0
        %3421 = vmatpush.msra.mxu0 0.0
        %3422 = vmatpush.msra.mxu0 %v903
        %3423 = vmatpush.msra.mxu0 %v901
        %3424 = vmatmul.f32.gmra.mxu0 %v3403
        %v3425 = vpop.f32.mrf.mxu0
        %v3426 = vadd.f32 0.0, %v3425
        %3427 = vmatmul.f32.gmra.mxu0 %v3406
        %v3428 = vpop.f32.mrf.mxu0
        %v3429 = vadd.f32 0.0, %v3428
        %3430 = vdwg.mxu0
        %v3432 = vsel %vm2319, %v3062, 0
        %v3435 = vsel %vm2319, %v3063, 0
        %3437 = vmatpush.msra.mxu0 0.0
        %3438 = vmatpush.msra.mxu0 0.0
        %3439 = vmatpush.msra.mxu0 0.0
        %3440 = vmatpush.msra.mxu0 0.0
        %3441 = vmatpush.msra.mxu0 0.0
        %3442 = vmatpush.msra.mxu0 0.0
        %3443 = vmatpush.msra.mxu0 0.0
        %3444 = vmatpush.msra.mxu0 0.0
        %3445 = vmatpush.msra.mxu0 0.0
        %3446 = vmatpush.msra.mxu0 0.0
        %3447 = vmatpush.msra.mxu0 0.0
        %3448 = vmatpush.msra.mxu0 0.0
        %3449 = vmatpush.msra.mxu0 0.0
        %3450 = vmatpush.msra.mxu0 0.0
        %3451 = vmatpush.msra.mxu0 %v907
        %3452 = vmatpush.msra.mxu0 %v905
        %3453 = vmatmul.f32.gmra.mxu0 %v3432
        %v3454 = vpop.f32.mrf.mxu0
        %v3455 = vadd.f32 0.0, %v3454
        %3456 = vmatmul.f32.gmra.mxu0 %v3435
        %v3457 = vpop.f32.mrf.mxu0
        %v3458 = vadd.f32 0.0, %v3457
        %3459 = vdwg.mxu0
        %v3461 = vsel %vm2319, %v3064, 0
        %v3464 = vsel %vm2319, %v3065, 0
        %3466 = vmatpush.msra.mxu0 0.0
        %3467 = vmatpush.msra.mxu0 0.0
        %3468 = vmatpush.msra.mxu0 0.0
        %3469 = vmatpush.msra.mxu0 0.0
        %3470 = vmatpush.msra.mxu0 0.0
        %3471 = vmatpush.msra.mxu0 0.0
        %3472 = vmatpush.msra.mxu0 0.0
        %3473 = vmatpush.msra.mxu0 0.0
        %3474 = vmatpush.msra.mxu0 0.0
        %3475 = vmatpush.msra.mxu0 0.0
        %3476 = vmatpush.msra.mxu0 0.0
        %3477 = vmatpush.msra.mxu0 0.0
        %3478 = vmatpush.msra.mxu0 0.0
        %3479 = vmatpush.msra.mxu0 0.0
        %3480 = vmatpush.msra.mxu0 %v911
        %3481 = vmatpush.msra.mxu0 %v909
        %3482 = vmatmul.f32.gmra.mxu0 %v3461
        %v3483 = vpop.f32.mrf.mxu0
        %v3484 = vadd.f32 0.0, %v3483
        %3485 = vmatmul.f32.gmra.mxu0 %v3464
        %v3486 = vpop.f32.mrf.mxu0
        %v3487 = vadd.f32 0.0, %v3486
        %3488 = vdwg.mxu0
        %v3490 = vsel %vm2319, %v3066, 0
        %v3493 = vsel %vm2319, %v3067, 0
        %3495 = vmatpush.msra.mxu0 0.0
        %3496 = vmatpush.msra.mxu0 0.0
        %3497 = vmatpush.msra.mxu0 0.0
        %3498 = vmatpush.msra.mxu0 0.0
        %3499 = vmatpush.msra.mxu0 0.0
        %3500 = vmatpush.msra.mxu0 0.0
        %3501 = vmatpush.msra.mxu0 0.0
        %3502 = vmatpush.msra.mxu0 0.0
        %3503 = vmatpush.msra.mxu0 0.0
        %3504 = vmatpush.msra.mxu0 0.0
        %3505 = vmatpush.msra.mxu0 0.0
        %3506 = vmatpush.msra.mxu0 0.0
        %3507 = vmatpush.msra.mxu0 0.0
        %3508 = vmatpush.msra.mxu0 0.0
        %3509 = vmatpush.msra.mxu0 %v915
        %3510 = vmatpush.msra.mxu0 %v913
        %3511 = vmatmul.f32.gmra.mxu0 %v3490
        %v3512 = vpop.f32.mrf.mxu0
        %v3513 = vadd.f32 0.0, %v3512
        %3514 = vmatmul.f32.gmra.mxu0 %v3493
        %v3515 = vpop.f32.mrf.mxu0
        %v3516 = vadd.f32 0.0, %v3515
        %3517 = vdwg.mxu0
        %v3519 = vsel %vm2319, %v3068, 0
        %v3522 = vsel %vm2319, %v3069, 0
        %3524 = vmatpush.msra.mxu0 0.0
        %3525 = vmatpush.msra.mxu0 0.0
        %3526 = vmatpush.msra.mxu0 0.0
        %3527 = vmatpush.msra.mxu0 0.0
        %3528 = vmatpush.msra.mxu0 0.0
        %3529 = vmatpush.msra.mxu0 0.0
        %3530 = vmatpush.msra.mxu0 0.0
        %3531 = vmatpush.msra.mxu0 0.0
        %3532 = vmatpush.msra.mxu0 0.0
        %3533 = vmatpush.msra.mxu0 0.0
        %3534 = vmatpush.msra.mxu0 0.0
        %3535 = vmatpush.msra.mxu0 0.0
        %3536 = vmatpush.msra.mxu0 0.0
        %3537 = vmatpush.msra.mxu0 0.0
        %3538 = vmatpush.msra.mxu0 %v919
        %3539 = vmatpush.msra.mxu0 %v917
        %3540 = vmatmul.f32.gmra.mxu0 %v3519
        %v3541 = vpop.f32.mrf.mxu0
        %v3542 = vadd.f32 0.0, %v3541
        %3543 = vmatmul.f32.gmra.mxu0 %v3522
        %v3544 = vpop.f32.mrf.mxu0
        %v3545 = vadd.f32 0.0, %v3544
        %3546 = vdwg.mxu0
        %v3548 = vsel %vm2319, %v3070, 0
        %v3551 = vsel %vm2319, %v3071, 0
        %3553 = vmatpush.msra.mxu0 0.0
        %3554 = vmatpush.msra.mxu0 0.0
        %3555 = vmatpush.msra.mxu0 0.0
        %3556 = vmatpush.msra.mxu0 0.0
        %3557 = vmatpush.msra.mxu0 0.0
        %3558 = vmatpush.msra.mxu0 0.0
        %3559 = vmatpush.msra.mxu0 0.0
        %3560 = vmatpush.msra.mxu0 0.0
        %3561 = vmatpush.msra.mxu0 0.0
        %3562 = vmatpush.msra.mxu0 0.0
        %3563 = vmatpush.msra.mxu0 0.0
        %3564 = vmatpush.msra.mxu0 0.0
        %3565 = vmatpush.msra.mxu0 0.0
        %3566 = vmatpush.msra.mxu0 0.0
        %3567 = vmatpush.msra.mxu0 %v923
        %3568 = vmatpush.msra.mxu0 %v921
        %3569 = vmatmul.f32.gmra.mxu0 %v3548
        %v3570 = vpop.f32.mrf.mxu0
        %v3571 = vadd.f32 0.0, %v3570
        %3572 = vmatmul.f32.gmra.mxu0 %v3551
        %v3573 = vpop.f32.mrf.mxu0
        %v3574 = vadd.f32 0.0, %v3573
        %3575 = vdwg.mxu0
        %v3577 = vsel %vm2319, %v3072, 0
        %v3580 = vsel %vm2319, %v3073, 0
        %3582 = vmatpush.msra.mxu0 0.0
        %3583 = vmatpush.msra.mxu0 0.0
        %3584 = vmatpush.msra.mxu0 0.0
        %3585 = vmatpush.msra.mxu0 0.0
        %3586 = vmatpush.msra.mxu0 0.0
        %3587 = vmatpush.msra.mxu0 0.0
        %3588 = vmatpush.msra.mxu0 0.0
        %3589 = vmatpush.msra.mxu0 0.0
        %3590 = vmatpush.msra.mxu0 0.0
        %3591 = vmatpush.msra.mxu0 0.0
        %3592 = vmatpush.msra.mxu0 0.0
        %3593 = vmatpush.msra.mxu0 0.0
        %3594 = vmatpush.msra.mxu0 0.0
        %3595 = vmatpush.msra.mxu0 0.0
        %3596 = vmatpush.msra.mxu0 %v927
        %3597 = vmatpush.msra.mxu0 %v925
        %3598 = vmatmul.f32.gmra.mxu0 %v3577
        %v3599 = vpop.f32.mrf.mxu0
        %v3600 = vadd.f32 0.0, %v3599
        %3601 = vmatmul.f32.gmra.mxu0 %v3580
        %v3602 = vpop.f32.mrf.mxu0
        %v3603 = vadd.f32 0.0, %v3602
        %3604 = vdwg.mxu0
        %v3606 = vsel %vm2319, %v3074, 0
        %v3609 = vsel %vm2319, %v3075, 0
        %3611 = vmatpush.msra.mxu0 0.0
        %3612 = vmatpush.msra.mxu0 0.0
        %3613 = vmatpush.msra.mxu0 0.0
        %3614 = vmatpush.msra.mxu0 0.0
        %3615 = vmatpush.msra.mxu0 0.0
        %3616 = vmatpush.msra.mxu0 0.0
        %3617 = vmatpush.msra.mxu0 0.0
        %3618 = vmatpush.msra.mxu0 0.0
        %3619 = vmatpush.msra.mxu0 0.0
        %3620 = vmatpush.msra.mxu0 0.0
        %3621 = vmatpush.msra.mxu0 0.0
        %3622 = vmatpush.msra.mxu0 0.0
        %3623 = vmatpush.msra.mxu0 0.0
        %3624 = vmatpush.msra.mxu0 0.0
        %3625 = vmatpush.msra.mxu0 %v931
        %3626 = vmatpush.msra.mxu0 %v929
        %3627 = vmatmul.f32.gmra.mxu0 %v3606
        %v3628 = vpop.f32.mrf.mxu0
        %v3629 = vadd.f32 0.0, %v3628
        %3630 = vmatmul.f32.gmra.mxu0 %v3609
        %v3631 = vpop.f32.mrf.mxu0
        %v3632 = vadd.f32 0.0, %v3631
        %3633 = vdwg.mxu0
        %v3635 = vsel %vm2319, %v3076, 0
        %v3638 = vsel %vm2319, %v3077, 0
        %3640 = vmatpush.msra.mxu0 0.0
        %3641 = vmatpush.msra.mxu0 0.0
        %3642 = vmatpush.msra.mxu0 0.0
        %3643 = vmatpush.msra.mxu0 0.0
        %3644 = vmatpush.msra.mxu0 0.0
        %3645 = vmatpush.msra.mxu0 0.0
        %3646 = vmatpush.msra.mxu0 0.0
        %3647 = vmatpush.msra.mxu0 0.0
        %3648 = vmatpush.msra.mxu0 0.0
        %3649 = vmatpush.msra.mxu0 0.0
        %3650 = vmatpush.msra.mxu0 0.0
        %3651 = vmatpush.msra.mxu0 0.0
        %3652 = vmatpush.msra.mxu0 0.0
        %3653 = vmatpush.msra.mxu0 0.0
        %3654 = vmatpush.msra.mxu0 %v953
        %3655 = vmatpush.msra.mxu0 %v951
        %3656 = vmatmul.f32.gmra.mxu0 %v3635
        %v3657 = vpop.f32.mrf.mxu0
        %v3658 = vadd.f32 0.0, %v3657
        %3659 = vmatmul.f32.gmra.mxu0 %v3638
        %v3660 = vpop.f32.mrf.mxu0
        %v3661 = vadd.f32 0.0, %v3660
        %3662 = vdwg.mxu0
        %v3664 = vsel %vm2319, %v3078, 0
        %v3667 = vsel %vm2319, %v3079, 0
        %3669 = vmatpush.msra.mxu0 0.0
        %3670 = vmatpush.msra.mxu0 0.0
        %3671 = vmatpush.msra.mxu0 0.0
        %3672 = vmatpush.msra.mxu0 0.0
        %3673 = vmatpush.msra.mxu0 0.0
        %3674 = vmatpush.msra.mxu0 0.0
        %3675 = vmatpush.msra.mxu0 0.0
        %3676 = vmatpush.msra.mxu0 0.0
        %3677 = vmatpush.msra.mxu0 0.0
        %3678 = vmatpush.msra.mxu0 0.0
        %3679 = vmatpush.msra.mxu0 0.0
        %3680 = vmatpush.msra.mxu0 0.0
        %3681 = vmatpush.msra.mxu0 0.0
        %3682 = vmatpush.msra.mxu0 0.0
        %3683 = vmatpush.msra.mxu0 %v957
        %3684 = vmatpush.msra.mxu0 %v955
        %3685 = vmatmul.f32.gmra.mxu0 %v3664
        %v3686 = vpop.f32.mrf.mxu0
        %v3687 = vadd.f32 0.0, %v3686
        %3688 = vmatmul.f32.gmra.mxu0 %v3667
        %v3689 = vpop.f32.mrf.mxu0
        %v3690 = vadd.f32 0.0, %v3689
        %3691 = vdwg.mxu0
        %v3693 = vsel %vm2319, %v3080, 0
        %v3696 = vsel %vm2319, %v3081, 0
        %3698 = vmatpush.msra.mxu0 0.0
        %3699 = vmatpush.msra.mxu0 0.0
        %3700 = vmatpush.msra.mxu0 0.0
        %3701 = vmatpush.msra.mxu0 0.0
        %3702 = vmatpush.msra.mxu0 0.0
        %3703 = vmatpush.msra.mxu0 0.0
        %3704 = vmatpush.msra.mxu0 0.0
        %3705 = vmatpush.msra.mxu0 0.0
        %3706 = vmatpush.msra.mxu0 0.0
        %3707 = vmatpush.msra.mxu0 0.0
        %3708 = vmatpush.msra.mxu0 0.0
        %3709 = vmatpush.msra.mxu0 0.0
        %3710 = vmatpush.msra.mxu0 0.0
        %3711 = vmatpush.msra.mxu0 0.0
        %3712 = vmatpush.msra.mxu0 %v961
        %3713 = vmatpush.msra.mxu0 %v959
        %3714 = vmatmul.f32.gmra.mxu0 %v3693
        %v3715 = vpop.f32.mrf.mxu0
        %v3716 = vadd.f32 0.0, %v3715
        %3717 = vmatmul.f32.gmra.mxu0 %v3696
        %v3718 = vpop.f32.mrf.mxu0
        %v3719 = vadd.f32 0.0, %v3718
        %3720 = vdwg.mxu0
        %v3722 = vsel %vm2319, %v3082, 0
        %v3725 = vsel %vm2319, %v3083, 0
        %3727 = vmatpush.msra.mxu0 0.0
        %3728 = vmatpush.msra.mxu0 0.0
        %3729 = vmatpush.msra.mxu0 0.0
        %3730 = vmatpush.msra.mxu0 0.0
        %3731 = vmatpush.msra.mxu0 0.0
        %3732 = vmatpush.msra.mxu0 0.0
        %3733 = vmatpush.msra.mxu0 0.0
        %3734 = vmatpush.msra.mxu0 0.0
        %3735 = vmatpush.msra.mxu0 0.0
        %3736 = vmatpush.msra.mxu0 0.0
        %3737 = vmatpush.msra.mxu0 0.0
        %3738 = vmatpush.msra.mxu0 0.0
        %3739 = vmatpush.msra.mxu0 0.0
        %3740 = vmatpush.msra.mxu0 0.0
        %3741 = vmatpush.msra.mxu0 %v965
        %3742 = vmatpush.msra.mxu0 %v963
        %3743 = vmatmul.f32.gmra.mxu0 %v3722
        %v3744 = vpop.f32.mrf.mxu0
        %v3745 = vadd.f32 0.0, %v3744
        %3746 = vmatmul.f32.gmra.mxu0 %v3725
        %v3747 = vpop.f32.mrf.mxu0
        %v3748 = vadd.f32 0.0, %v3747
        %3749 = vdwg.mxu0
        %v3751 = vsel %vm2319, %v3084, 0
        %v3754 = vsel %vm2319, %v3085, 0
        %3756 = vmatpush.msra.mxu0 0.0
        %3757 = vmatpush.msra.mxu0 0.0
        %3758 = vmatpush.msra.mxu0 0.0
        %3759 = vmatpush.msra.mxu0 0.0
        %3760 = vmatpush.msra.mxu0 0.0
        %3761 = vmatpush.msra.mxu0 0.0
        %3762 = vmatpush.msra.mxu0 0.0
        %3763 = vmatpush.msra.mxu0 0.0
        %3764 = vmatpush.msra.mxu0 0.0
        %3765 = vmatpush.msra.mxu0 0.0
        %3766 = vmatpush.msra.mxu0 0.0
        %3767 = vmatpush.msra.mxu0 0.0
        %3768 = vmatpush.msra.mxu0 0.0
        %3769 = vmatpush.msra.mxu0 0.0
        %3770 = vmatpush.msra.mxu0 %v969
        %3771 = vmatpush.msra.mxu0 %v967
        %3772 = vmatmul.f32.gmra.mxu0 %v3751
        %v3773 = vpop.f32.mrf.mxu0
        %v3774 = vadd.f32 0.0, %v3773
        %3775 = vmatmul.f32.gmra.mxu0 %v3754
        %v3776 = vpop.f32.mrf.mxu0
        %v3777 = vadd.f32 0.0, %v3776
        %3778 = vdwg.mxu0
        %v3780 = vsel %vm2319, %v3086, 0
        %v3783 = vsel %vm2319, %v3087, 0
        %3785 = vmatpush.msra.mxu0 0.0
        %3786 = vmatpush.msra.mxu0 0.0
        %3787 = vmatpush.msra.mxu0 0.0
        %3788 = vmatpush.msra.mxu0 0.0
        %3789 = vmatpush.msra.mxu0 0.0
        %3790 = vmatpush.msra.mxu0 0.0
        %3791 = vmatpush.msra.mxu0 0.0
        %3792 = vmatpush.msra.mxu0 0.0
        %3793 = vmatpush.msra.mxu0 0.0
        %3794 = vmatpush.msra.mxu0 0.0
        %3795 = vmatpush.msra.mxu0 0.0
        %3796 = vmatpush.msra.mxu0 0.0
        %3797 = vmatpush.msra.mxu0 0.0
        %3798 = vmatpush.msra.mxu0 0.0
        %3799 = vmatpush.msra.mxu0 %v973
        %3800 = vmatpush.msra.mxu0 %v971
        %3801 = vmatmul.f32.gmra.mxu0 %v3780
        %v3802 = vpop.f32.mrf.mxu0
        %v3803 = vadd.f32 0.0, %v3802
        %3804 = vmatmul.f32.gmra.mxu0 %v3783
        %v3805 = vpop.f32.mrf.mxu0
        %v3806 = vadd.f32 0.0, %v3805
        %3807 = vdwg.mxu0
        %v3809 = vsel %vm2319, %v3088, 0
        %v3812 = vsel %vm2319, %v3089, 0
        %3814 = vmatpush.msra.mxu0 0.0
        %3815 = vmatpush.msra.mxu0 0.0
        %3816 = vmatpush.msra.mxu0 0.0
        %3817 = vmatpush.msra.mxu0 0.0
        %3818 = vmatpush.msra.mxu0 0.0
        %3819 = vmatpush.msra.mxu0 0.0
        %3820 = vmatpush.msra.mxu0 0.0
        %3821 = vmatpush.msra.mxu0 0.0
        %3822 = vmatpush.msra.mxu0 0.0
        %3823 = vmatpush.msra.mxu0 0.0
        %3824 = vmatpush.msra.mxu0 0.0
        %3825 = vmatpush.msra.mxu0 0.0
        %3826 = vmatpush.msra.mxu0 0.0
        %3827 = vmatpush.msra.mxu0 0.0
        %3828 = vmatpush.msra.mxu0 %v977
        %3829 = vmatpush.msra.mxu0 %v975
        %3830 = vmatmul.f32.gmra.mxu0 %v3809
        %v3831 = vpop.f32.mrf.mxu0
        %v3832 = vadd.f32 0.0, %v3831
        %3833 = vmatmul.f32.gmra.mxu0 %v3812
        %v3834 = vpop.f32.mrf.mxu0
        %v3835 = vadd.f32 0.0, %v3834
        %3836 = vdwg.mxu0
        %v3838 = vsel %vm2319, %v3090, 0
        %v3841 = vsel %vm2319, %v3091, 0
        %3843 = vmatpush.msra.mxu0 0.0
        %3844 = vmatpush.msra.mxu0 0.0
        %3845 = vmatpush.msra.mxu0 0.0
        %3846 = vmatpush.msra.mxu0 0.0
        %3847 = vmatpush.msra.mxu0 0.0
        %3848 = vmatpush.msra.mxu0 0.0
        %3849 = vmatpush.msra.mxu0 0.0
        %3850 = vmatpush.msra.mxu0 0.0
        %3851 = vmatpush.msra.mxu0 0.0
        %3852 = vmatpush.msra.mxu0 0.0
        %3853 = vmatpush.msra.mxu0 0.0
        %3854 = vmatpush.msra.mxu0 0.0
        %3855 = vmatpush.msra.mxu0 0.0
        %3856 = vmatpush.msra.mxu0 0.0
        %3857 = vmatpush.msra.mxu0 %v981
        %3858 = vmatpush.msra.mxu0 %v979
        %3859 = vmatmul.f32.gmra.mxu0 %v3838
        %v3860 = vpop.f32.mrf.mxu0
        %v3861 = vadd.f32 0.0, %v3860
        %3862 = vmatmul.f32.gmra.mxu0 %v3841
        %v3863 = vpop.f32.mrf.mxu0
        %v3864 = vadd.f32 0.0, %v3863
        %3865 = vdwg.mxu0
        %v3867 = vsel %vm2319, %v3092, 0
        %v3870 = vsel %vm2319, %v3093, 0
        %3872 = vmatpush.msra.mxu0 0.0
        %3873 = vmatpush.msra.mxu0 0.0
        %3874 = vmatpush.msra.mxu0 0.0
        %3875 = vmatpush.msra.mxu0 0.0
        %3876 = vmatpush.msra.mxu0 0.0
        %3877 = vmatpush.msra.mxu0 0.0
        %3878 = vmatpush.msra.mxu0 0.0
        %3879 = vmatpush.msra.mxu0 0.0
        %3880 = vmatpush.msra.mxu0 0.0
        %3881 = vmatpush.msra.mxu0 0.0
        %3882 = vmatpush.msra.mxu0 0.0
        %3883 = vmatpush.msra.mxu0 0.0
        %3884 = vmatpush.msra.mxu0 0.0
        %3885 = vmatpush.msra.mxu0 0.0
        %3886 = vmatpush.msra.mxu0 %v985
        %3887 = vmatpush.msra.mxu0 %v983
        %3888 = vmatmul.f32.gmra.mxu0 %v3867
        %v3889 = vpop.f32.mrf.mxu0
        %v3890 = vadd.f32 0.0, %v3889
        %3891 = vmatmul.f32.gmra.mxu0 %v3870
        %v3892 = vpop.f32.mrf.mxu0
        %v3893 = vadd.f32 0.0, %v3892
        %3894 = vdwg.mxu0
        %v3896 = vsel %vm2319, %v3094, 0
        %v3899 = vsel %vm2319, %v3095, 0
        %3901 = vmatpush.msra.mxu0 0.0
        %3902 = vmatpush.msra.mxu0 0.0
        %3903 = vmatpush.msra.mxu0 0.0
        %3904 = vmatpush.msra.mxu0 0.0
        %3905 = vmatpush.msra.mxu0 0.0
        %3906 = vmatpush.msra.mxu0 0.0
        %3907 = vmatpush.msra.mxu0 0.0
        %3908 = vmatpush.msra.mxu0 0.0
        %3909 = vmatpush.msra.mxu0 0.0
        %3910 = vmatpush.msra.mxu0 0.0
        %3911 = vmatpush.msra.mxu0 0.0
        %3912 = vmatpush.msra.mxu0 0.0
        %3913 = vmatpush.msra.mxu0 0.0
        %3914 = vmatpush.msra.mxu0 0.0
        %3915 = vmatpush.msra.mxu0 %v1007
        %3916 = vmatpush.msra.mxu0 %v1005
        %3917 = vmatmul.f32.gmra.mxu0 %v3896
        %v3918 = vpop.f32.mrf.mxu0
        %v3919 = vadd.f32 0.0, %v3918
        %3920 = vmatmul.f32.gmra.mxu0 %v3899
        %v3921 = vpop.f32.mrf.mxu0
        %v3922 = vadd.f32 0.0, %v3921
        %3923 = vdwg.mxu0
        %v3925 = vsel %vm2319, %v3096, 0
        %v3928 = vsel %vm2319, %v3097, 0
        %3930 = vmatpush.msra.mxu0 0.0
        %3931 = vmatpush.msra.mxu0 0.0
        %3932 = vmatpush.msra.mxu0 0.0
        %3933 = vmatpush.msra.mxu0 0.0
        %3934 = vmatpush.msra.mxu0 0.0
        %3935 = vmatpush.msra.mxu0 0.0
        %3936 = vmatpush.msra.mxu0 0.0
        %3937 = vmatpush.msra.mxu0 0.0
        %3938 = vmatpush.msra.mxu0 0.0
        %3939 = vmatpush.msra.mxu0 0.0
        %3940 = vmatpush.msra.mxu0 0.0
        %3941 = vmatpush.msra.mxu0 0.0
        %3942 = vmatpush.msra.mxu0 0.0
        %3943 = vmatpush.msra.mxu0 0.0
        %3944 = vmatpush.msra.mxu0 %v1011
        %3945 = vmatpush.msra.mxu0 %v1009
        %3946 = vmatmul.f32.gmra.mxu0 %v3925
        %v3947 = vpop.f32.mrf.mxu0
        %v3948 = vadd.f32 0.0, %v3947
        %3949 = vmatmul.f32.gmra.mxu0 %v3928
        %v3950 = vpop.f32.mrf.mxu0
        %v3951 = vadd.f32 0.0, %v3950
        %3952 = vdwg.mxu0
        %v3954 = vsel %vm2319, %v3098, 0
        %v3957 = vsel %vm2319, %v3099, 0
        %3959 = vmatpush.msra.mxu0 0.0
        %3960 = vmatpush.msra.mxu0 0.0
        %3961 = vmatpush.msra.mxu0 0.0
        %3962 = vmatpush.msra.mxu0 0.0
        %3963 = vmatpush.msra.mxu0 0.0
        %3964 = vmatpush.msra.mxu0 0.0
        %3965 = vmatpush.msra.mxu0 0.0
        %3966 = vmatpush.msra.mxu0 0.0
        %3967 = vmatpush.msra.mxu0 0.0
        %3968 = vmatpush.msra.mxu0 0.0
        %3969 = vmatpush.msra.mxu0 0.0
        %3970 = vmatpush.msra.mxu0 0.0
        %3971 = vmatpush.msra.mxu0 0.0
        %3972 = vmatpush.msra.mxu0 0.0
        %3973 = vmatpush.msra.mxu0 %v1015
        %3974 = vmatpush.msra.mxu0 %v1013
        %3975 = vmatmul.f32.gmra.mxu0 %v3954
        %v3976 = vpop.f32.mrf.mxu0
        %v3977 = vadd.f32 0.0, %v3976
        %3978 = vmatmul.f32.gmra.mxu0 %v3957
        %v3979 = vpop.f32.mrf.mxu0
        %v3980 = vadd.f32 0.0, %v3979
        %3981 = vdwg.mxu0
        %v3983 = vsel %vm2319, %v3100, 0
        %v3986 = vsel %vm2319, %v3101, 0
        %3988 = vmatpush.msra.mxu0 0.0
        %3989 = vmatpush.msra.mxu0 0.0
        %3990 = vmatpush.msra.mxu0 0.0
        %3991 = vmatpush.msra.mxu0 0.0
        %3992 = vmatpush.msra.mxu0 0.0
        %3993 = vmatpush.msra.mxu0 0.0
        %3994 = vmatpush.msra.mxu0 0.0
        %3995 = vmatpush.msra.mxu0 0.0
        %3996 = vmatpush.msra.mxu0 0.0
        %3997 = vmatpush.msra.mxu0 0.0
        %3998 = vmatpush.msra.mxu0 0.0
        %3999 = vmatpush.msra.mxu0 0.0
        %4000 = vmatpush.msra.mxu0 0.0
        %4001 = vmatpush.msra.mxu0 0.0
        %4002 = vmatpush.msra.mxu0 %v1019
        %4003 = vmatpush.msra.mxu0 %v1017
        %4004 = vmatmul.f32.gmra.mxu0 %v3983
        %v4005 = vpop.f32.mrf.mxu0
        %v4006 = vadd.f32 0.0, %v4005
        %4007 = vmatmul.f32.gmra.mxu0 %v3986
        %v4008 = vpop.f32.mrf.mxu0
        %v4009 = vadd.f32 0.0, %v4008
        %4010 = vdwg.mxu0
        %v4012 = vsel %vm2319, %v3102, 0
        %v4015 = vsel %vm2319, %v3103, 0
        %4017 = vmatpush.msra.mxu0 0.0
        %4018 = vmatpush.msra.mxu0 0.0
        %4019 = vmatpush.msra.mxu0 0.0
        %4020 = vmatpush.msra.mxu0 0.0
        %4021 = vmatpush.msra.mxu0 0.0
        %4022 = vmatpush.msra.mxu0 0.0
        %4023 = vmatpush.msra.mxu0 0.0
        %4024 = vmatpush.msra.mxu0 0.0
        %4025 = vmatpush.msra.mxu0 0.0
        %4026 = vmatpush.msra.mxu0 0.0
        %4027 = vmatpush.msra.mxu0 0.0
        %4028 = vmatpush.msra.mxu0 0.0
        %4029 = vmatpush.msra.mxu0 0.0
        %4030 = vmatpush.msra.mxu0 0.0
        %4031 = vmatpush.msra.mxu0 %v1023
        %4032 = vmatpush.msra.mxu0 %v1021
        %4033 = vmatmul.f32.gmra.mxu0 %v4012
        %v4034 = vpop.f32.mrf.mxu0
        %v4035 = vadd.f32 0.0, %v4034
        %4036 = vmatmul.f32.gmra.mxu0 %v4015
        %v4037 = vpop.f32.mrf.mxu0
        %v4038 = vadd.f32 0.0, %v4037
        %4039 = vdwg.mxu0
        %v4041 = vsel %vm2319, %v3104, 0
        %v4044 = vsel %vm2319, %v3105, 0
        %4046 = vmatpush.msra.mxu0 0.0
        %4047 = vmatpush.msra.mxu0 0.0
        %4048 = vmatpush.msra.mxu0 0.0
        %4049 = vmatpush.msra.mxu0 0.0
        %4050 = vmatpush.msra.mxu0 0.0
        %4051 = vmatpush.msra.mxu0 0.0
        %4052 = vmatpush.msra.mxu0 0.0
        %4053 = vmatpush.msra.mxu0 0.0
        %4054 = vmatpush.msra.mxu0 0.0
        %4055 = vmatpush.msra.mxu0 0.0
        %4056 = vmatpush.msra.mxu0 0.0
        %4057 = vmatpush.msra.mxu0 0.0
        %4058 = vmatpush.msra.mxu0 0.0
        %4059 = vmatpush.msra.mxu0 0.0
        %4060 = vmatpush.msra.mxu0 %v1027
        %4061 = vmatpush.msra.mxu0 %v1025
        %4062 = vmatmul.f32.gmra.mxu0 %v4041
        %v4063 = vpop.f32.mrf.mxu0
        %v4064 = vadd.f32 0.0, %v4063
        %4065 = vmatmul.f32.gmra.mxu0 %v4044
        %v4066 = vpop.f32.mrf.mxu0
        %v4067 = vadd.f32 0.0, %v4066
        %4068 = vdwg.mxu0
        %v4070 = vsel %vm2319, %v3106, 0
        %v4073 = vsel %vm2319, %v3107, 0
        %4075 = vmatpush.msra.mxu0 0.0
        %4076 = vmatpush.msra.mxu0 0.0
        %4077 = vmatpush.msra.mxu0 0.0
        %4078 = vmatpush.msra.mxu0 0.0
        %4079 = vmatpush.msra.mxu0 0.0
        %4080 = vmatpush.msra.mxu0 0.0
        %4081 = vmatpush.msra.mxu0 0.0
        %4082 = vmatpush.msra.mxu0 0.0
        %4083 = vmatpush.msra.mxu0 0.0
        %4084 = vmatpush.msra.mxu0 0.0
        %4085 = vmatpush.msra.mxu0 0.0
        %4086 = vmatpush.msra.mxu0 0.0
        %4087 = vmatpush.msra.mxu0 0.0
        %4088 = vmatpush.msra.mxu0 0.0
        %4089 = vmatpush.msra.mxu0 %v1031
        %4090 = vmatpush.msra.mxu0 %v1029
        %4091 = vmatmul.f32.gmra.mxu0 %v4070
        %v4092 = vpop.f32.mrf.mxu0
        %v4093 = vadd.f32 0.0, %v4092
        %4094 = vmatmul.f32.gmra.mxu0 %v4073
        %v4095 = vpop.f32.mrf.mxu0
        %v4096 = vadd.f32 0.0, %v4095
        %4097 = vdwg.mxu0
        %v4099 = vsel %vm2319, %v3108, 0
        %v4102 = vsel %vm2319, %v3109, 0
        %4104 = vmatpush.msra.mxu0 0.0
        %4105 = vmatpush.msra.mxu0 0.0
        %4106 = vmatpush.msra.mxu0 0.0
        %4107 = vmatpush.msra.mxu0 0.0
        %4108 = vmatpush.msra.mxu0 0.0
        %4109 = vmatpush.msra.mxu0 0.0
        %4110 = vmatpush.msra.mxu0 0.0
        %4111 = vmatpush.msra.mxu0 0.0
        %4112 = vmatpush.msra.mxu0 0.0
        %4113 = vmatpush.msra.mxu0 0.0
        %4114 = vmatpush.msra.mxu0 0.0
        %4115 = vmatpush.msra.mxu0 0.0
        %4116 = vmatpush.msra.mxu0 0.0
        %4117 = vmatpush.msra.mxu0 0.0
        %4118 = vmatpush.msra.mxu0 %v1035
        %4119 = vmatpush.msra.mxu0 %v1033
        %4120 = vmatmul.f32.gmra.mxu0 %v4099
        %v4121 = vpop.f32.mrf.mxu0
        %v4122 = vadd.f32 0.0, %v4121
        %4123 = vmatmul.f32.gmra.mxu0 %v4102
        %v4124 = vpop.f32.mrf.mxu0
        %v4125 = vadd.f32 0.0, %v4124
        %4126 = vdwg.mxu0
        %v4128 = vsel %vm2319, %v3110, 0
        %v4131 = vsel %vm2319, %v3111, 0
        %4133 = vmatpush.msra.mxu0 0.0
        %4134 = vmatpush.msra.mxu0 0.0
        %4135 = vmatpush.msra.mxu0 0.0
        %4136 = vmatpush.msra.mxu0 0.0
        %4137 = vmatpush.msra.mxu0 0.0
        %4138 = vmatpush.msra.mxu0 0.0
        %4139 = vmatpush.msra.mxu0 0.0
        %4140 = vmatpush.msra.mxu0 0.0
        %4141 = vmatpush.msra.mxu0 0.0
        %4142 = vmatpush.msra.mxu0 0.0
        %4143 = vmatpush.msra.mxu0 0.0
        %4144 = vmatpush.msra.mxu0 0.0
        %4145 = vmatpush.msra.mxu0 0.0
        %4146 = vmatpush.msra.mxu0 0.0
        %4147 = vmatpush.msra.mxu0 %v1039
        %4148 = vmatpush.msra.mxu0 %v1037
        %4149 = vmatmul.f32.gmra.mxu0 %v4128
        %v4150 = vpop.f32.mrf.mxu0
        %v4151 = vadd.f32 0.0, %v4150
        %4152 = vmatmul.f32.gmra.mxu0 %v4131
        %v4153 = vpop.f32.mrf.mxu0
        %v4154 = vadd.f32 0.0, %v4153
        %4155 = vdwg.mxu0
        %4156 = vst.msk [vmem:[#allocation2] sm:$0xff] %vm1058, %v3136
        %4157 = vst.msk [vmem:[#allocation2 + $0x8] sm:$0xff] %vm1058, %v3139
        %4158 = vst.msk [vmem:[#allocation2 + $0x10] sm:$0xff] %vm1058, %v3165
        %4159 = vst.msk [vmem:[#allocation2 + $0x18] sm:$0xff] %vm1058, %v3168
        %4160 = vst.msk [vmem:[#allocation2 + $0x20] sm:$0xff] %vm1058, %v3194
        %4161 = vst.msk [vmem:[#allocation2 + $0x28] sm:$0xff] %vm1058, %v3197
        %4162 = vst.msk [vmem:[#allocation2 + $0x30] sm:$0xff] %vm1058, %v3223
        %4163 = vst.msk [vmem:[#allocation2 + $0x38] sm:$0xff] %vm1058, %v3226
        %4164 = vst.msk [vmem:[#allocation2 + $0x40] sm:$0xff] %vm1058, %v3252
        %4165 = vst.msk [vmem:[#allocation2 + $0x48] sm:$0xff] %vm1058, %v3255
        %4166 = vst.msk [vmem:[#allocation2 + $0x50] sm:$0xff] %vm1058, %v3281
        %4167 = vst.msk [vmem:[#allocation2 + $0x58] sm:$0xff] %vm1058, %v3284
        %4168 = vst.msk [vmem:[#allocation2 + $0x60] sm:$0xff] %vm1058, %v3310
        %4169 = vst.msk [vmem:[#allocation2 + $0x68] sm:$0xff] %vm1058, %v3313
        %4170 = vst.msk [vmem:[#allocation2 + $0x70] sm:$0xff] %vm1058, %v3339
        %4171 = vst.msk [vmem:[#allocation2 + $0x78] sm:$0xff] %vm1058, %v3342
        %4172 = vst.msk [vmem:[#allocation2 + $0x80] sm:$0xff] %vm1058, %v3368
        %4173 = vst.msk [vmem:[#allocation2 + $0x88] sm:$0xff] %vm1058, %v3371
        %4192 = vrot.lane.b32.xlu0 %v3397, 32
        %v4193 = vpop.permute.xlu0 %4192
        %4194 = vrot.lane.b32.xlu0 %v3400, 32
        %v4195 = vpop.permute.xlu0 %4194
        %4196 = vrot.lane.b32.xlu0 %v3426, 32
        %v4197 = vpop.permute.xlu0 %4196
        %4198 = vrot.lane.b32.xlu0 %v3429, 32
        %v4199 = vpop.permute.xlu0 %4198
        %4200 = vrot.lane.b32.xlu0 %v3455, 32
        %v4201 = vpop.permute.xlu0 %4200
        %4202 = vrot.lane.b32.xlu0 %v3458, 32
        %v4203 = vpop.permute.xlu0 %4202
        %4204 = vrot.lane.b32.xlu0 %v3484, 32
        %v4205 = vpop.permute.xlu0 %4204
        %4206 = vrot.lane.b32.xlu0 %v3487, 32
        %v4207 = vpop.permute.xlu0 %4206
        %4208 = vrot.lane.b32.xlu0 %v3513, 32
        %v4209 = vpop.permute.xlu0 %4208
        %4210 = vrot.lane.b32.xlu0 %v3516, 32
        %v4211 = vpop.permute.xlu0 %4210
        %4212 = vrot.lane.b32.xlu0 %v3542, 32
        %v4213 = vpop.permute.xlu0 %4212
        %4214 = vrot.lane.b32.xlu0 %v3545, 32
        %v4215 = vpop.permute.xlu0 %4214
        %4216 = vrot.lane.b32.xlu0 %v3571, 32
        %v4217 = vpop.permute.xlu0 %4216
        %4218 = vrot.lane.b32.xlu0 %v3574, 32
        %v4219 = vpop.permute.xlu0 %4218
        %4220 = vrot.lane.b32.xlu0 %v3600, 32
        %v4221 = vpop.permute.xlu0 %4220
        %4222 = vrot.lane.b32.xlu0 %v3603, 32
        %v4223 = vpop.permute.xlu0 %4222
        %4224 = vrot.lane.b32.xlu0 %v3629, 32
        %v4225 = vpop.permute.xlu0 %4224
        %4226 = vrot.lane.b32.xlu0 %v3632, 32
        %v4227 = vpop.permute.xlu0 %4226
        %vm4246 = vcmask 523520
        %4247 = vst.msk [vmem:[#allocation2] sm:$0xff] %vm4246, %v4193
        %4248 = vst.msk [vmem:[#allocation2 + $0x8] sm:$0xff] %vm4246, %v4195
        %4249 = vst.msk [vmem:[#allocation2 + $0x10] sm:$0xff] %vm4246, %v4197
        %4250 = vst.msk [vmem:[#allocation2 + $0x18] sm:$0xff] %vm4246, %v4199
        %4251 = vst.msk [vmem:[#allocation2 + $0x20] sm:$0xff] %vm4246, %v4201
        %4252 = vst.msk [vmem:[#allocation2 + $0x28] sm:$0xff] %vm4246, %v4203
        %4253 = vst.msk [vmem:[#allocation2 + $0x30] sm:$0xff] %vm4246, %v4205
        %4254 = vst.msk [vmem:[#allocation2 + $0x38] sm:$0xff] %vm4246, %v4207
        %4255 = vst.msk [vmem:[#allocation2 + $0x40] sm:$0xff] %vm4246, %v4209
        %4256 = vst.msk [vmem:[#allocation2 + $0x48] sm:$0xff] %vm4246, %v4211
        %4257 = vst.msk [vmem:[#allocation2 + $0x50] sm:$0xff] %vm4246, %v4213
        %4258 = vst.msk [vmem:[#allocation2 + $0x58] sm:$0xff] %vm4246, %v4215
        %4259 = vst.msk [vmem:[#allocation2 + $0x60] sm:$0xff] %vm4246, %v4217
        %4260 = vst.msk [vmem:[#allocation2 + $0x68] sm:$0xff] %vm4246, %v4219
        %4261 = vst.msk [vmem:[#allocation2 + $0x70] sm:$0xff] %vm4246, %v4221
        %4262 = vst.msk [vmem:[#allocation2 + $0x78] sm:$0xff] %vm4246, %v4223
        %4263 = vst.msk [vmem:[#allocation2 + $0x80] sm:$0xff] %vm4246, %v4225
        %4264 = vst.msk [vmem:[#allocation2 + $0x88] sm:$0xff] %vm4246, %v4227
        %4283 = vrot.lane.b32.xlu0 %v3658, 64
        %v4284 = vpop.permute.xlu0 %4283
        %4285 = vrot.lane.b32.xlu0 %v3661, 64
        %v4286 = vpop.permute.xlu0 %4285
        %4287 = vrot.lane.b32.xlu0 %v3687, 64
        %v4288 = vpop.permute.xlu0 %4287
        %4289 = vrot.lane.b32.xlu0 %v3690, 64
        %v4290 = vpop.permute.xlu0 %4289
        %4291 = vrot.lane.b32.xlu0 %v3716, 64
        %v4292 = vpop.permute.xlu0 %4291
        %4293 = vrot.lane.b32.xlu0 %v3719, 64
        %v4294 = vpop.permute.xlu0 %4293
        %4295 = vrot.lane.b32.xlu0 %v3745, 64
        %v4296 = vpop.permute.xlu0 %4295
        %4297 = vrot.lane.b32.xlu0 %v3748, 64
        %v4298 = vpop.permute.xlu0 %4297
        %4299 = vrot.lane.b32.xlu0 %v3774, 64
        %v4300 = vpop.permute.xlu0 %4299
        %4301 = vrot.lane.b32.xlu0 %v3777, 64
        %v4302 = vpop.permute.xlu0 %4301
        %4303 = vrot.lane.b32.xlu0 %v3803, 64
        %v4304 = vpop.permute.xlu0 %4303
        %4305 = vrot.lane.b32.xlu0 %v3806, 64
        %v4306 = vpop.permute.xlu0 %4305
        %4307 = vrot.lane.b32.xlu0 %v3832, 64
        %v4308 = vpop.permute.xlu0 %4307
        %4309 = vrot.lane.b32.xlu0 %v3835, 64
        %v4310 = vpop.permute.xlu0 %4309
        %4311 = vrot.lane.b32.xlu0 %v3861, 64
        %v4312 = vpop.permute.xlu0 %4311
        %4313 = vrot.lane.b32.xlu0 %v3864, 64
        %v4314 = vpop.permute.xlu0 %4313
        %4315 = vrot.lane.b32.xlu0 %v3890, 64
        %v4316 = vpop.permute.xlu0 %4315
        %4317 = vrot.lane.b32.xlu0 %v3893, 64
        %v4318 = vpop.permute.xlu0 %4317
        %vm4337 = vcmask 785920
        %4338 = vst.msk [vmem:[#allocation2] sm:$0xff] %vm4337, %v4284
        %4339 = vst.msk [vmem:[#allocation2 + $0x8] sm:$0xff] %vm4337, %v4286
        %4340 = vst.msk [vmem:[#allocation2 + $0x10] sm:$0xff] %vm4337, %v4288
        %4341 = vst.msk [vmem:[#allocation2 + $0x18] sm:$0xff] %vm4337, %v4290
        %4342 = vst.msk [vmem:[#allocation2 + $0x20] sm:$0xff] %vm4337, %v4292
        %4343 = vst.msk [vmem:[#allocation2 + $0x28] sm:$0xff] %vm4337, %v4294
        %4344 = vst.msk [vmem:[#allocation2 + $0x30] sm:$0xff] %vm4337, %v4296
        %4345 = vst.msk [vmem:[#allocation2 + $0x38] sm:$0xff] %vm4337, %v4298
        %4346 = vst.msk [vmem:[#allocation2 + $0x40] sm:$0xff] %vm4337, %v4300
        %4347 = vst.msk [vmem:[#allocation2 + $0x48] sm:$0xff] %vm4337, %v4302
        %4348 = vst.msk [vmem:[#allocation2 + $0x50] sm:$0xff] %vm4337, %v4304
        %4349 = vst.msk [vmem:[#allocation2 + $0x58] sm:$0xff] %vm4337, %v4306
        %4350 = vst.msk [vmem:[#allocation2 + $0x60] sm:$0xff] %vm4337, %v4308
        %4351 = vst.msk [vmem:[#allocation2 + $0x68] sm:$0xff] %vm4337, %v4310
        %4352 = vst.msk [vmem:[#allocation2 + $0x70] sm:$0xff] %vm4337, %v4312
        %4353 = vst.msk [vmem:[#allocation2 + $0x78] sm:$0xff] %vm4337, %v4314
        %4354 = vst.msk [vmem:[#allocation2 + $0x80] sm:$0xff] %vm4337, %v4316
        %4355 = vst.msk [vmem:[#allocation2 + $0x88] sm:$0xff] %vm4337, %v4318
        %4374 = vrot.lane.b32.xlu0 %v3919, 96
        %v4375 = vpop.permute.xlu0 %4374
        %4376 = vrot.lane.b32.xlu0 %v3922, 96
        %v4377 = vpop.permute.xlu0 %4376
        %4378 = vrot.lane.b32.xlu0 %v3948, 96
        %v4379 = vpop.permute.xlu0 %4378
        %4380 = vrot.lane.b32.xlu0 %v3951, 96
        %v4381 = vpop.permute.xlu0 %4380
        %4382 = vrot.lane.b32.xlu0 %v3977, 96
        %v4383 = vpop.permute.xlu0 %4382
        %4384 = vrot.lane.b32.xlu0 %v3980, 96
        %v4385 = vpop.permute.xlu0 %4384
        %4386 = vrot.lane.b32.xlu0 %v4006, 96
        %v4387 = vpop.permute.xlu0 %4386
        %4388 = vrot.lane.b32.xlu0 %v4009, 96
        %v4389 = vpop.permute.xlu0 %4388
        %4390 = vrot.lane.b32.xlu0 %v4035, 96
        %v4391 = vpop.permute.xlu0 %4390
        %4392 = vrot.lane.b32.xlu0 %v4038, 96
        %v4393 = vpop.permute.xlu0 %4392
        %4394 = vrot.lane.b32.xlu0 %v4064, 96
        %v4395 = vpop.permute.xlu0 %4394
        %4396 = vrot.lane.b32.xlu0 %v4067, 96
        %v4397 = vpop.permute.xlu0 %4396
        %4398 = vrot.lane.b32.xlu0 %v4093, 96
        %v4399 = vpop.permute.xlu0 %4398
        %4400 = vrot.lane.b32.xlu0 %v4096, 96
        %v4401 = vpop.permute.xlu0 %4400
        %4402 = vrot.lane.b32.xlu0 %v4122, 96
        %v4403 = vpop.permute.xlu0 %4402
        %4404 = vrot.lane.b32.xlu0 %v4125, 96
        %v4405 = vpop.permute.xlu0 %4404
        %4406 = vrot.lane.b32.xlu0 %v4151, 96
        %v4407 = vpop.permute.xlu0 %4406
        %4408 = vrot.lane.b32.xlu0 %v4154, 96
        %v4409 = vpop.permute.xlu0 %4408
        %vm4428 = vcmask 1048320
        %4429 = vst.msk [vmem:[#allocation2] sm:$0xff] %vm4428, %v4375
        %4430 = vst.msk [vmem:[#allocation2 + $0x8] sm:$0xff] %vm4428, %v4377
        %4431 = vst.msk [vmem:[#allocation2 + $0x10] sm:$0xff] %vm4428, %v4379
        %4432 = vst.msk [vmem:[#allocation2 + $0x18] sm:$0xff] %vm4428, %v4381
        %4433 = vst.msk [vmem:[#allocation2 + $0x20] sm:$0xff] %vm4428, %v4383
        %4434 = vst.msk [vmem:[#allocation2 + $0x28] sm:$0xff] %vm4428, %v4385
        %4435 = vst.msk [vmem:[#allocation2 + $0x30] sm:$0xff] %vm4428, %v4387
        %4436 = vst.msk [vmem:[#allocation2 + $0x38] sm:$0xff] %vm4428, %v4389
        %4437 = vst.msk [vmem:[#allocation2 + $0x40] sm:$0xff] %vm4428, %v4391
        %4438 = vst.msk [vmem:[#allocation2 + $0x48] sm:$0xff] %vm4428, %v4393
        %4439 = vst.msk [vmem:[#allocation2 + $0x50] sm:$0xff] %vm4428, %v4395
        %4440 = vst.msk [vmem:[#allocation2 + $0x58] sm:$0xff] %vm4428, %v4397
        %4441 = vst.msk [vmem:[#allocation2 + $0x60] sm:$0xff] %vm4428, %v4399
        %4442 = vst.msk [vmem:[#allocation2 + $0x68] sm:$0xff] %vm4428, %v4401
        %4443 = vst.msk [vmem:[#allocation2 + $0x70] sm:$0xff] %vm4428, %v4403
        %4444 = vst.msk [vmem:[#allocation2 + $0x78] sm:$0xff] %vm4428, %v4405
        %4445 = vst.msk [vmem:[#allocation2 + $0x80] sm:$0xff] %vm4428, %v4407
        %4446 = vst.msk [vmem:[#allocation2 + $0x88] sm:$0xff] %vm4428, %v4409
        %v4447 = vld [vmem:[#allocation2] sm:$0xff]
        %v4448 = vld [vmem:[#allocation2 + $0x8] sm:$0xff]
        %v4449 = vld [vmem:[#allocation2 + $0x10] sm:$0xff]
        %v4450 = vld [vmem:[#allocation2 + $0x18] sm:$0xff]
        %v4451 = vld [vmem:[#allocation2 + $0x20] sm:$0xff]
        %v4452 = vld [vmem:[#allocation2 + $0x28] sm:$0xff]
        %v4453 = vld [vmem:[#allocation2 + $0x30] sm:$0xff]
        %v4454 = vld [vmem:[#allocation2 + $0x38] sm:$0xff]
        %v4455 = vld [vmem:[#allocation2 + $0x40] sm:$0xff]
        %v4456 = vld [vmem:[#allocation2 + $0x48] sm:$0xff]
        %v4457 = vld [vmem:[#allocation2 + $0x50] sm:$0xff]
        %v4458 = vld [vmem:[#allocation2 + $0x58] sm:$0xff]
        %v4459 = vld [vmem:[#allocation2 + $0x60] sm:$0xff]
        %v4460 = vld [vmem:[#allocation2 + $0x68] sm:$0xff]
        %v4461 = vld [vmem:[#allocation2 + $0x70] sm:$0xff]
        %v4462 = vld [vmem:[#allocation2 + $0x78] sm:$0xff]
        %v4463 = vld [vmem:[#allocation2 + $0x80] sm:$0xff]
        %v4464 = vld [vmem:[#allocation2 + $0x88] sm:$0xff]
        %v4465 = vld [vmem:[#allocation9] sm:$0xff]
        %v4466 = vld [vmem:[#allocation9 + $0x8] sm:$0xff]
        %v4467 = vld [vmem:[#allocation9 + $0x10] sm:$0xff]
        %v4468 = vld [vmem:[#allocation9 + $0x18] sm:$0xff]
        %v4469 = vld [vmem:[#allocation9 + $0x20] sm:$0xff]
        %v4470 = vld [vmem:[#allocation9 + $0x28] sm:$0xff]
        %v4471 = vld [vmem:[#allocation9 + $0x30] sm:$0xff]
        %v4472 = vld [vmem:[#allocation9 + $0x38] sm:$0xff]
        %v4473 = vld [vmem:[#allocation9 + $0x40] sm:$0xff]
        %v4474 = vld [vmem:[#allocation9 + $0x48] sm:$0xff]
        %v4475 = vld [vmem:[#allocation9 + $0x50] sm:$0xff]
        %v4476 = vld [vmem:[#allocation9 + $0x58] sm:$0xff]
        %v4477 = vld [vmem:[#allocation9 + $0x60] sm:$0xff]
        %v4478 = vld [vmem:[#allocation9 + $0x68] sm:$0xff]
        %v4479 = vld [vmem:[#allocation9 + $0x70] sm:$0xff]
        %v4480 = vld [vmem:[#allocation9 + $0x78] sm:$0xff]
        %v4481 = vld [vmem:[%s4] sm:$0x1]
        %v4483 = vperm.slane %v4481, 0
        %4485 = vmatpush.msra.mxu0 %v4480
        %4486 = vmatpush.msra.mxu0 %v4479
        %4487 = vmatpush.msra.mxu0 %v4478
        %4488 = vmatpush.msra.mxu0 %v4477
        %4489 = vmatpush.msra.mxu0 %v4476
        %4490 = vmatpush.msra.mxu0 %v4475
        %4491 = vmatpush.msra.mxu0 %v4474
        %4492 = vmatpush.msra.mxu0 %v4473
        %4493 = vmatpush.msra.mxu0 %v4472
        %4494 = vmatpush.msra.mxu0 %v4471
        %4495 = vmatpush.msra.mxu0 %v4470
        %4496 = vmatpush.msra.mxu0 %v4469
        %4497 = vmatpush.msra.mxu0 %v4468
        %4498 = vmatpush.msra.mxu0 %v4467
        %4499 = vmatpush.msra.mxu0 %v4466
        %4500 = vmatpush.msra.mxu0 %v4465
        %4501 = vmatmul.f32.gmra.mxu0 %v4447
        %v4502 = vpop.f32.mrf.mxu0
        %v4503 = vadd.f32 %v4483, %v4502
        %4504 = vmatmul.f32.gmra.mxu0 %v4448
        %v4505 = vpop.f32.mrf.mxu0
        %v4506 = vadd.f32 %v4483, %v4505
        %4507 = vmatmul.f32.gmra.mxu0 %v4449
        %v4508 = vpop.f32.mrf.mxu0
        %v4509 = vadd.f32 %v4483, %v4508
        %4510 = vmatmul.f32.gmra.mxu0 %v4450
        %v4511 = vpop.f32.mrf.mxu0
        %v4512 = vadd.f32 %v4483, %v4511
        %4513 = vmatmul.f32.gmra.mxu0 %v4451
        %v4514 = vpop.f32.mrf.mxu0
        %v4515 = vadd.f32 %v4483, %v4514
        %4516 = vmatmul.f32.gmra.mxu0 %v4452
        %v4517 = vpop.f32.mrf.mxu0
        %v4518 = vadd.f32 %v4483, %v4517
        %4519 = vmatmul.f32.gmra.mxu0 %v4453
        %v4520 = vpop.f32.mrf.mxu0
        %v4521 = vadd.f32 %v4483, %v4520
        %4522 = vmatmul.f32.gmra.mxu0 %v4454
        %v4523 = vpop.f32.mrf.mxu0
        %v4524 = vadd.f32 %v4483, %v4523
        %4525 = vmatmul.f32.gmra.mxu0 %v4455
        %v4526 = vpop.f32.mrf.mxu0
        %v4527 = vadd.f32 %v4483, %v4526
        %4528 = vmatmul.f32.gmra.mxu0 %v4456
        %v4529 = vpop.f32.mrf.mxu0
        %v4530 = vadd.f32 %v4483, %v4529
        %4531 = vmatmul.f32.gmra.mxu0 %v4457
        %v4532 = vpop.f32.mrf.mxu0
        %v4533 = vadd.f32 %v4483, %v4532
        %4534 = vmatmul.f32.gmra.mxu0 %v4458
        %v4535 = vpop.f32.mrf.mxu0
        %v4536 = vadd.f32 %v4483, %v4535
        %4537 = vmatmul.f32.gmra.mxu0 %v4459
        %v4538 = vpop.f32.mrf.mxu0
        %v4539 = vadd.f32 %v4483, %v4538
        %4540 = vmatmul.f32.gmra.mxu0 %v4460
        %v4541 = vpop.f32.mrf.mxu0
        %v4542 = vadd.f32 %v4483, %v4541
        %4543 = vmatmul.f32.gmra.mxu0 %v4461
        %v4544 = vpop.f32.mrf.mxu0
        %v4545 = vadd.f32 %v4483, %v4544
        %4546 = vmatmul.f32.gmra.mxu0 %v4462
        %v4547 = vpop.f32.mrf.mxu0
        %v4548 = vadd.f32 %v4483, %v4547
        %4549 = vmatmul.f32.gmra.mxu0 %v4463
        %v4550 = vpop.f32.mrf.mxu0
        %v4551 = vadd.f32 %v4483, %v4550
        %4552 = vmatmul.f32.gmra.mxu0 %v4464
        %v4553 = vpop.f32.mrf.mxu0
        %v4554 = vadd.f32 %v4483, %v4553
        %4555 = vdwg.mxu0
        %4556 = vst [vmem:[%s336] sm:$0xff] %v4503
        %4557 = vst [vmem:[%s336 + $0x8] sm:$0xff] %v4506
        %4558 = vst [vmem:[%s336 + $0x10] sm:$0xff] %v4509
        %4559 = vst [vmem:[%s336 + $0x18] sm:$0xff] %v4512
        %4560 = vst [vmem:[%s336 + $0x20] sm:$0xff] %v4515
        %4561 = vst [vmem:[%s336 + $0x28] sm:$0xff] %v4518
        %4562 = vst [vmem:[%s336 + $0x30] sm:$0xff] %v4521
        %4563 = vst [vmem:[%s336 + $0x38] sm:$0xff] %v4524
        %4564 = vst [vmem:[%s336 + $0x40] sm:$0xff] %v4527
        %4565 = vst [vmem:[%s336 + $0x48] sm:$0xff] %v4530
        %4566 = vst [vmem:[%s336 + $0x50] sm:$0xff] %v4533
        %4567 = vst [vmem:[%s336 + $0x58] sm:$0xff] %v4536
        %4568 = vst [vmem:[%s336 + $0x60] sm:$0xff] %v4539
        %4569 = vst [vmem:[%s336 + $0x68] sm:$0xff] %v4542
        %4570 = vst [vmem:[%s336 + $0x70] sm:$0xff] %v4545
        %4571 = vst [vmem:[%s336 + $0x78] sm:$0xff] %v4548
        %4572 = vst [vmem:[%s336 + $0x80] sm:$0xff] %v4551
        %4573 = vst [vmem:[%s336 + $0x88] sm:$0xff] %v4554
        %s4574 = sand.u32 %s164, 1
        %s4575 = scalar_lea.sflag [#allocation5], %s4574
        %s4576 = sand.u32 %s164, 1
        %s4577 = smul.addr %s4576, 144
        %s4578 = scalar_lea.vmem [#allocation12], %s4577
        // Predicated region
        $region65: #{tpu_custom_call.1} parent=43 // pred_check
          %p4579 = pneg %p174
        $region66: #{tpu_custom_call.1} parent=43 // pred_check_branch
          %4581 = sbr.rel (%p4579) target = $region68
        $region67: #{tpu_custom_call.1} parent=43 // pred_region
          %s4582 = smul.u32 9, %s25
          %4584 = vsyncadd %s4575, 0
          %s4585 = smul.addr %s4582, 2
          %s4586 = smul.addr %s4585, 8
          %s4587 = scalar_lea.hbm %s6, %s4586
          %s4588 = sshll.u32 %s4578, 4
          %s4589 = int_to_ptr.vmem [resolvable:$true] %s4588
          %s4590 = sshll.u32 %s4587, 4
          %s4591 = int_to_ptr.hbm [resolvable:$true] %s4590
          %4596 = dma.vmem_to_hbm [thread:$0]  %s4589, 2304, %s4591, %s4575, 128, 128, 8
        $region68: #{tpu_custom_call.1} parent=43 // pred_fallthru
          _
      $region44: #{tpu_custom_call.1} parent=5 // pred_fallthru
        _
      %p4597 = scmp.le.s32.totalorder 2, %s20
      // Predicated region
      $region69: #{tpu_custom_call.1} parent=5 // pred_check
        %p4598 = pneg %p4597
      $region70: #{tpu_custom_call.1} parent=5 // pred_check_branch
        %4600 = sbr.rel (%p4598) target = $region72
      $region71: #{tpu_custom_call.1} parent=5 // pred_region
        %s4601 = ssub.s32 %s20, 2
        // Predicated region
        $region73: #{tpu_custom_call.1} parent=71 // pred_check
          %p4602 = pneg %p180
        $region74: #{tpu_custom_call.1} parent=71 // pred_check_branch
          %4604 = sbr.rel (%p4602) target = $region76
        $region75: #{tpu_custom_call.1} parent=71 // pred_region
          %s4605 = sand.u32 %s165, 1
          %s4606 = scalar_lea.sflag [#allocation5], %s4605
          %s4607 = sand.u32 %s165, 1
          %s4608 = smul.addr %s4607, 144
          %s4609 = scalar_lea.vmem [#allocation12], %s4608
          %4611 = dma.done %s4606, 2304
        $region76: #{tpu_custom_call.1} parent=71 // pred_fallthru
          _
      $region72: #{tpu_custom_call.1} parent=5 // pred_fallthru
        _
    $region6: #{tpu_custom_call.1} parent=1 // loop_footer
      %s24 = sadd.s32 1, %s20
    $region7: #{tpu_custom_call.1} parent=1 // loop_footer_branch
      %19 = sbr.rel target = $region3
    $region8: #{tpu_custom_call.1} parent=1 // loop_exit
      _
    %4612 = vsyncpa [#allocation4], 1
    %s4613 = scalar_lea.sflag [#allocation4], 1
    %4614 = vsyncpa %s4613, 1
    %4615 = vsyncpa [#allocation7], 1
    %4616 = vsyncpa [#allocation10], 1
    %4617 = vsyncpa [#allocation5], 1
    %s4618 = scalar_lea.sflag [#allocation5], 1
    %4619 = vsyncpa %s4618, 1

</llo_original>
